<compile_context>
chip_gen: v5e
topology: v5e:2x2
jax: 0.10.0
libtpu: 0.0.40
codegen_flags: <defaults>
</compile_context>

<pallas_src>
import jax
import jax.numpy as jnp
from jax.experimental import pallas as pl
from jax.experimental.pallas import tpu as pltpu

KSIZE = 7
PAD = KSIZE // 2


def _pick_tiles(B, C, HW, itemsize, target_bytes=4 * 1024 * 1024):
    """Pick (Bt, Ct) so the per-step x block stays ~<= target_bytes."""
    def fits(bt, ct):
        return bt * ct * HW * itemsize <= target_bytes

    if fits(1, C):
        ct = C
    else:
        ct = None
        # A channel tile smaller than C is the second-minor block dim, so it
        # must be a multiple of 8.
        for d in range(C, 0, -1):
            if C % d == 0 and d % 8 == 0 and fits(1, d):
                ct = d
                break
        if ct is None:
            ct = C  # no clean divisor; fall back to full C
    bt = 1
    for d in range(B, 0, -1):
        if B % d == 0 and fits(d, ct):
            bt = d
            break
    return bt, ct


def spatial_attention(x, weight, bias):
    """x: (B, C, H, W).  weight: (1, 2, 7, 7).  bias: (1,).  Returns (B, 1, H, W)."""
    B, C, H, W = x.shape
    HW = H * W
    Hp, Wp = H + 2 * PAD, W + 2 * PAD
    Bt, Ct = _pick_tiles(B, C, HW, x.dtype.itemsize)
    inv_c = 1.0 / C

    # Glue: flatten conv params; free contiguous reshape of x to (B, C, H*W).
    w_flat = weight.reshape(-1).astype(jnp.float32)   # (2*7*7,) = (98,)
    b_vec = bias.astype(jnp.float32)                  # (1,)
    x_flat = x.reshape(B, C, HW)

    def kernel(w_ref, b_ref, x_ref, o_ref, sum_ref, max_ref, pad_ref):
        c_idx = pl.program_id(1)

        @pl.when(c_idx == 0)
        def _init():
            sum_ref[...] = jnp.zeros_like(sum_ref)
            max_ref[...] = jnp.full_like(max_ref, -jnp.inf)

        # Channel reduction, lane-dense over the flattened spatial axis.
        # TODO(synk): for bf16 inputs keep the running max in bf16 and only
        # upcast the running sum to f32 to cut VPU cast work.
        xb = x_ref[...].astype(jnp.float32)                    # (Bt, Ct, HW)
        sum_ref[...] = sum_ref[...] + jnp.sum(xb, axis=1)
        max_ref[...] = jnp.maximum(max_ref[...], jnp.max(xb, axis=1))

        @pl.when(c_idx == pl.num_programs(1) - 1)
        def _finalize():
            avg_flat = sum_ref[...] * inv_c                    # (Bt, HW)
            max_flat = max_ref[...]                            # (Bt, HW)

            # Zero-padded (Hp, Wp) copies of the two pooled maps (VMEM scratch).
            pad_ref[...] = jnp.zeros_like(pad_ref)
            for i in range(H):
                row = slice(i * W, (i + 1) * W)
                pad_ref[0, :, PAD + i, PAD:PAD + W] = avg_flat[:, row]
                pad_ref[1, :, PAD + i, PAD:PAD + W] = max_flat[:, row]

            # 7x7 conv as shifted adds on the VPU; lane (kw) shifts hoisted so
            # only 2*7 = 14 lane slices are needed, inner taps are sublane-only.
            acc = jnp.full((Bt, H, W), b_ref[0], dtype=jnp.float32)
            for f_idx in range(2):
                fmap = pad_ref[f_idx]                          # (Bt, Hp, Wp)
                for kw in range(KSIZE):
                    col = fmap[:, :, kw:kw + W]                # (Bt, Hp, W)
                    for kh in range(KSIZE):
                        wv = w_ref[f_idx * KSIZE * KSIZE + kh * KSIZE + kw]
                        acc = acc + wv * col[:, kh:kh + H, :]

            sig = jax.nn.sigmoid(acc)                          # (Bt, H, W)
            # Row-wise stores into the lane-dense (Bt, 1, HW) output block; the
            # HBM writeback DMA of the block is a single lane-dense slab.
            for i in range(H):
                o_ref[:, 0, i * W:(i + 1) * W] = sig[:, i, :].astype(o_ref.dtype)

    out = pl.pallas_call(
        kernel,
        out_shape=jax.ShapeDtypeStruct((B, 1, HW), x.dtype),
        grid_spec=pltpu.PrefetchScalarGridSpec(
            num_scalar_prefetch=0,
            grid=(B // Bt, C // Ct),
            in_specs=[
                pl.BlockSpec(memory_space=pltpu.MemorySpace.SMEM),   # weights (98,)
                pl.BlockSpec(memory_space=pltpu.MemorySpace.SMEM),   # bias (1,)
                pl.BlockSpec((Bt, Ct, HW), lambda b, c: (b, c, 0)),  # x (unpadded)
            ],
            out_specs=pl.BlockSpec((Bt, 1, HW), lambda b, c: (b, 0, 0)),
            scratch_shapes=[
                pltpu.VMEM((Bt, HW), jnp.float32),          # running channel sum
                pltpu.VMEM((Bt, HW), jnp.float32),          # running channel max
                pltpu.VMEM((2, Bt, Hp, Wp), jnp.float32),   # zero-padded pooled maps
            ],
        ),
        compiler_params=pltpu.CompilerParams(
            dimension_semantics=("parallel", "arbitrary")),
    )(w_flat, b_vec, x_flat)
    return out.reshape(B, 1, H, W)


def spatial_attention_ref(x, weight, bias):
    """Pure-JAX reference (mirrors the PyTorch module)."""
    avg = jnp.mean(x, axis=1, keepdims=True)
    mx = jnp.max(x, axis=1, keepdims=True)
    feats = jnp.concatenate([avg, mx], axis=1)        # (B, 2, H, W)
    y = jax.lax.conv_general_dilated(
        feats, weight,
        window_strides=(1, 1),
        padding=((PAD, PAD), (PAD, PAD)),
        dimension_numbers=("NCHW", "OIHW", "NCHW"),
    ) + bias.reshape(1, 1, 1, 1)
    return jax.nn.sigmoid(y)


if __name__ == "__main__":
    key = jax.random.PRNGKey(0)
    kx, kw, kb = jax.random.split(key, 3)

    B, C, H, W = 2, 4, 16, 16
    x = jax.random.normal(kx, (B, C, H, W), dtype=jnp.float32)

    # Deterministic "conv" parameters (shapes from nn.Conv2d(2, 1, 7, padding=3)).
    fan_in = 2 * KSIZE * KSIZE
    weight = jax.random.normal(kw, (1, 2, KSIZE, KSIZE), dtype=jnp.float32) / jnp.sqrt(fan_in)
    bias = jax.random.normal(kb, (1,), dtype=jnp.float32) * 0.1

    out = spatial_attention(x, weight, bias)
    out = jax.block_until_ready(out)

    ref = spatial_attention_ref(x, weight, bias)
    assert out.shape == (B, 1, H, W), out.shape
    assert jnp.allclose(out, ref, rtol=1e-4, atol=1e-5), \
        f"max abs err = {jnp.max(jnp.abs(out - ref))}"

    print("KERNEL_OK")
</pallas_src>

<mosaic_0001>
module attributes {stable_mosaic.version = 11 : i64} {
  func.func @kernel(%arg0: i32, %arg1: i32, %arg2: memref<98xf32, #tpu.memory_space<smem>>, %arg3: memref<1xf32, #tpu.memory_space<smem>>, %arg4: memref<2x4x256xf32, #tpu.memory_space<vmem>>, %arg5: memref<2x1x256xf32, #tpu.memory_space<vmem>>, %arg6: memref<2x256xf32, #tpu.memory_space<vmem>>, %arg7: memref<2x256xf32, #tpu.memory_space<vmem>>, %arg8: memref<2x2x22x22xf32, #tpu.memory_space<vmem>>) attributes {dimension_semantics = [#tpu.dimension_semantics<parallel>, #tpu.dimension_semantics<arbitrary>], iteration_bounds = array<i64: 1, 1>, scalar_prefetch = 0 : i64, scratch_operands = 3 : i64, tpu.core_type = #tpu.core_type<tc>, window_params = [{transform_indices = @transform_0, window_bounds = array<i64: 98>}, {transform_indices = @transform_1, window_bounds = array<i64: 1>}, {transform_indices = @transform_2, window_bounds = array<i64: 2, 4, 256>}, {transform_indices = @transform_3, window_bounds = array<i64: 2, 1, 256>}]} {
    %c0_i32 = arith.constant 0 : i32
    %0 = arith.cmpi eq, %arg1, %c0_i32 : i32
    %1 = arith.extui %0 : i1 to i32
    %c0_i32_0 = arith.constant 0 : i32
    %2 = arith.cmpi ne, %1, %c0_i32_0 : i32
    scf.if %2 {
      %cst_14 = arith.constant 0.000000e+00 : f32
      %15 = vector.broadcast %cst_14 : f32 to vector<2x256xf32>
      %c0_15 = arith.constant 0 : index
      %c0_16 = arith.constant 0 : index
      %16 = vector.load %arg6[%c0_15, %c0_16] : memref<2x256xf32, #tpu.memory_space<vmem>>, vector<2x256xf32>
      tpu.vector_store %arg6[%c0_15, %c0_16], %15 {strides = array<i32>} : memref<2x256xf32, #tpu.memory_space<vmem>>, vector<2x256xf32>,
      %cst_17 = arith.constant 0xFF800000 : f32
      %17 = vector.broadcast %cst_17 : f32 to vector<2x256xf32>
      %c0_18 = arith.constant 0 : index
      %c0_19 = arith.constant 0 : index
      %18 = vector.load %arg7[%c0_18, %c0_19] : memref<2x256xf32, #tpu.memory_space<vmem>>, vector<2x256xf32>
      tpu.vector_store %arg7[%c0_18, %c0_19], %17 {strides = array<i32>} : memref<2x256xf32, #tpu.memory_space<vmem>>, vector<2x256xf32>,
    } else {
    }
    %c0 = arith.constant 0 : index
    %c0_1 = arith.constant 0 : index
    %c0_2 = arith.constant 0 : index
    %3 = vector.load %arg4[%c0, %c0_1, %c0_2] : memref<2x4x256xf32, #tpu.memory_space<vmem>>, vector<2x4x256xf32>
    %c0_3 = arith.constant 0 : index
    %c0_4 = arith.constant 0 : index
    %4 = vector.load %arg6[%c0_3, %c0_4] : memref<2x256xf32, #tpu.memory_space<vmem>>, vector<2x256xf32>
    %cst = arith.constant dense<0.000000e+00> : vector<2x256xf32>
    %5 = vector.multi_reduction <add>, %3, %cst [1] : vector<2x4x256xf32> to vector<2x256xf32>
    %6 = arith.addf %4, %5 : vector<2x256xf32>
    %c0_5 = arith.constant 0 : index
    %c0_6 = arith.constant 0 : index
    %7 = vector.load %arg6[%c0_5, %c0_6] : memref<2x256xf32, #tpu.memory_space<vmem>>, vector<2x256xf32>
    tpu.vector_store %arg6[%c0_5, %c0_6], %6 {strides = array<i32>} : memref<2x256xf32, #tpu.memory_space<vmem>>, vector<2x256xf32>,
    %c0_7 = arith.constant 0 : index
    %c0_8 = arith.constant 0 : index
    %8 = vector.load %arg7[%c0_7, %c0_8] : memref<2x256xf32, #tpu.memory_space<vmem>>, vector<2x256xf32>
    %cst_9 = arith.constant dense<0xFF800000> : vector<2x256xf32>
    %9 = vector.multi_reduction <maximumf>, %3, %cst_9 [1] : vector<2x4x256xf32> to vector<2x256xf32>
    %10 = arith.maximumf %8, %9 : vector<2x256xf32>
    %c0_10 = arith.constant 0 : index
    %c0_11 = arith.constant 0 : index
    %11 = vector.load %arg7[%c0_10, %c0_11] : memref<2x256xf32, #tpu.memory_space<vmem>>, vector<2x256xf32>
    tpu.vector_store %arg7[%c0_10, %c0_11], %10 {strides = array<i32>} : memref<2x256xf32, #tpu.memory_space<vmem>>, vector<2x256xf32>,
    %c0_i32_12 = arith.constant 0 : i32
    %12 = arith.cmpi eq, %arg1, %c0_i32_12 : i32
    %13 = arith.extui %12 : i1 to i32
    %c0_i32_13 = arith.constant 0 : i32
    %14 = arith.cmpi ne, %13, %c0_i32_13 : i32
    scf.if %14 {
      %c0_14 = arith.constant 0 : index
      %c0_15 = arith.constant 0 : index
      %15 = vector.load %arg6[%c0_14, %c0_15] : memref<2x256xf32, #tpu.memory_space<vmem>>, vector<2x256xf32>
      %cst_16 = arith.constant 2.500000e-01 : f32
      %16 = vector.broadcast %cst_16 : f32 to vector<2x256xf32>
      %17 = arith.mulf %15, %16 : vector<2x256xf32>
      %c0_17 = arith.constant 0 : index
      %c0_18 = arith.constant 0 : index
      %18 = vector.load %arg7[%c0_17, %c0_18] : memref<2x256xf32, #tpu.memory_space<vmem>>, vector<2x256xf32>
      %cst_19 = arith.constant 0.000000e+00 : f32
      %19 = vector.broadcast %cst_19 : f32 to vector<2x2x22x22xf32>
      %c0_20 = arith.constant 0 : index
      %c0_21 = arith.constant 0 : index
      %c0_22 = arith.constant 0 : index
      %c0_23 = arith.constant 0 : index
      %20 = vector.load %arg8[%c0_20, %c0_21, %c0_22, %c0_23] : memref<2x2x22x22xf32, #tpu.memory_space<vmem>>, vector<2x2x22x22xf32>
      tpu.vector_store %arg8[%c0_20, %c0_21, %c0_22, %c0_23], %19 {strides = array<i32>} : memref<2x2x22x22xf32, #tpu.memory_space<vmem>>, vector<2x2x22x22xf32>,
      %21 = vector.extract_strided_slice %17 {offsets = [0, 0], sizes = [2, 16], strides = [1, 1]} : vector<2x256xf32> to vector<2x16xf32>
      %c0_24 = arith.constant 0 : index
      %c0_25 = arith.constant 0 : index
      %c3 = arith.constant 3 : index
      %c3_26 = arith.constant 3 : index
      %22 = vector.load %arg8[%c0_24, %c0_25, %c3, %c3_26] : memref<2x2x22x22xf32, #tpu.memory_space<vmem>>, vector<1x2x1x16xf32>
      %23 = vector.shape_cast %22 : vector<1x2x1x16xf32> to vector<2x16xf32>
      %24 = vector.shape_cast %21 : vector<2x16xf32> to vector<1x2x1x16xf32>
      tpu.vector_store %arg8[%c0_24, %c0_25, %c3, %c3_26], %24 {strides = array<i32>} : memref<2x2x22x22xf32, #tpu.memory_space<vmem>>, vector<1x2x1x16xf32>,
      %25 = vector.extract_strided_slice %18 {offsets = [0, 0], sizes = [2, 16], strides = [1, 1]} : vector<2x256xf32> to vector<2x16xf32>
      %c1 = arith.constant 1 : index
      %c0_27 = arith.constant 0 : index
      %c3_28 = arith.constant 3 : index
      %c3_29 = arith.constant 3 : index
      %26 = vector.load %arg8[%c1, %c0_27, %c3_28, %c3_29] : memref<2x2x22x22xf32, #tpu.memory_space<vmem>>, vector<1x2x1x16xf32>
      %27 = vector.shape_cast %26 : vector<1x2x1x16xf32> to vector<2x16xf32>
      %28 = vector.shape_cast %25 : vector<2x16xf32> to vector<1x2x1x16xf32>
      tpu.vector_store %arg8[%c1, %c0_27, %c3_28, %c3_29], %28 {strides = array<i32>} : memref<2x2x22x22xf32, #tpu.memory_space<vmem>>, vector<1x2x1x16xf32>,
      %29 = vector.extract_strided_slice %17 {offsets = [0, 16], sizes = [2, 16], strides = [1, 1]} : vector<2x256xf32> to vector<2x16xf32>
      %c0_30 = arith.constant 0 : index
      %c0_31 = arith.constant 0 : index
      %c4 = arith.constant 4 : index
      %c3_32 = arith.constant 3 : index
      %30 = vector.load %arg8[%c0_30, %c0_31, %c4, %c3_32] : memref<2x2x22x22xf32, #tpu.memory_space<vmem>>, vector<1x2x1x16xf32>
      %31 = vector.shape_cast %30 : vector<1x2x1x16xf32> to vector<2x16xf32>
      %32 = vector.shape_cast %29 : vector<2x16xf32> to vector<1x2x1x16xf32>
      tpu.vector_store %arg8[%c0_30, %c0_31, %c4, %c3_32], %32 {strides = array<i32>} : memref<2x2x22x22xf32, #tpu.memory_space<vmem>>, vector<1x2x1x16xf32>,
      %33 = vector.extract_strided_slice %18 {offsets = [0, 16], sizes = [2, 16], strides = [1, 1]} : vector<2x256xf32> to vector<2x16xf32>
      %c1_33 = arith.constant 1 : index
      %c0_34 = arith.constant 0 : index
      %c4_35 = arith.constant 4 : index
      %c3_36 = arith.constant 3 : index
      %34 = vector.load %arg8[%c1_33, %c0_34, %c4_35, %c3_36] : memref<2x2x22x22xf32, #tpu.memory_space<vmem>>, vector<1x2x1x16xf32>
      %35 = vector.shape_cast %34 : vector<1x2x1x16xf32> to vector<2x16xf32>
      %36 = vector.shape_cast %33 : vector<2x16xf32> to vector<1x2x1x16xf32>
      tpu.vector_store %arg8[%c1_33, %c0_34, %c4_35, %c3_36], %36 {strides = array<i32>} : memref<2x2x22x22xf32, #tpu.memory_space<vmem>>, vector<1x2x1x16xf32>,
      %37 = vector.extract_strided_slice %17 {offsets = [0, 32], sizes = [2, 16], strides = [1, 1]} : vector<2x256xf32> to vector<2x16xf32>
      %c0_37 = arith.constant 0 : index
      %c0_38 = arith.constant 0 : index
      %c5 = arith.constant 5 : index
      %c3_39 = arith.constant 3 : index
      %38 = vector.load %arg8[%c0_37, %c0_38, %c5, %c3_39] : memref<2x2x22x22xf32, #tpu.memory_space<vmem>>, vector<1x2x1x16xf32>
      %39 = vector.shape_cast %38 : vector<1x2x1x16xf32> to vector<2x16xf32>
      %40 = vector.shape_cast %37 : vector<2x16xf32> to vector<1x2x1x16xf32>
      tpu.vector_store %arg8[%c0_37, %c0_38, %c5, %c3_39], %40 {strides = array<i32>} : memref<2x2x22x22xf32, #tpu.memory_space<vmem>>, vector<1x2x1x16xf32>,
      %41 = vector.extract_strided_slice %18 {offsets = [0, 32], sizes = [2, 16], strides = [1, 1]} : vector<2x256xf32> to vector<2x16xf32>
      %c1_40 = arith.constant 1 : index
      %c0_41 = arith.constant 0 : index
      %c5_42 = arith.constant 5 : index
      %c3_43 = arith.constant 3 : index
      %42 = vector.load %arg8[%c1_40, %c0_41, %c5_42, %c3_43] : memref<2x2x22x22xf32, #tpu.memory_space<vmem>>, vector<1x2x1x16xf32>
      %43 = vector.shape_cast %42 : vector<1x2x1x16xf32> to vector<2x16xf32>
      %44 = vector.shape_cast %41 : vector<2x16xf32> to vector<1x2x1x16xf32>
      tpu.vector_store %arg8[%c1_40, %c0_41, %c5_42, %c3_43], %44 {strides = array<i32>} : memref<2x2x22x22xf32, #tpu.memory_space<vmem>>, vector<1x2x1x16xf32>,
      %45 = vector.extract_strided_slice %17 {offsets = [0, 48], sizes = [2, 16], strides = [1, 1]} : vector<2x256xf32> to vector<2x16xf32>
      %c0_44 = arith.constant 0 : index
      %c0_45 = arith.constant 0 : index
      %c6 = arith.constant 6 : index
      %c3_46 = arith.constant 3 : index
      %46 = vector.load %arg8[%c0_44, %c0_45, %c6, %c3_46] : memref<2x2x22x22xf32, #tpu.memory_space<vmem>>, vector<1x2x1x16xf32>
      %47 = vector.shape_cast %46 : vector<1x2x1x16xf32> to vector<2x16xf32>
      %48 = vector.shape_cast %45 : vector<2x16xf32> to vector<1x2x1x16xf32>
      tpu.vector_store %arg8[%c0_44, %c0_45, %c6, %c3_46], %48 {strides = array<i32>} : memref<2x2x22x22xf32, #tpu.memory_space<vmem>>, vector<1x2x1x16xf32>,
      %49 = vector.extract_strided_slice %18 {offsets = [0, 48], sizes = [2, 16], strides = [1, 1]} : vector<2x256xf32> to vector<2x16xf32>
      %c1_47 = arith.constant 1 : index
      %c0_48 = arith.constant 0 : index
      %c6_49 = arith.constant 6 : index
      %c3_50 = arith.constant 3 : index
      %50 = vector.load %arg8[%c1_47, %c0_48, %c6_49, %c3_50] : memref<2x2x22x22xf32, #tpu.memory_space<vmem>>, vector<1x2x1x16xf32>
      %51 = vector.shape_cast %50 : vector<1x2x1x16xf32> to vector<2x16xf32>
      %52 = vector.shape_cast %49 : vector<2x16xf32> to vector<1x2x1x16xf32>
      tpu.vector_store %arg8[%c1_47, %c0_48, %c6_49, %c3_50], %52 {strides = array<i32>} : memref<2x2x22x22xf32, #tpu.memory_space<vmem>>, vector<1x2x1x16xf32>,
      %53 = vector.extract_strided_slice %17 {offsets = [0, 64], sizes = [2, 16], strides = [1, 1]} : vector<2x256xf32> to vector<2x16xf32>
      %c0_51 = arith.constant 0 : index
      %c0_52 = arith.constant 0 : index
      %c7 = arith.constant 7 : index
      %c3_53 = arith.constant 3 : index
      %54 = vector.load %arg8[%c0_51, %c0_52, %c7, %c3_53] : memref<2x2x22x22xf32, #tpu.memory_space<vmem>>, vector<1x2x1x16xf32>
      %55 = vector.shape_cast %54 : vector<1x2x1x16xf32> to vector<2x16xf32>
      %56 = vector.shape_cast %53 : vector<2x16xf32> to vector<1x2x1x16xf32>
      tpu.vector_store %arg8[%c0_51, %c0_52, %c7, %c3_53], %56 {strides = array<i32>} : memref<2x2x22x22xf32, #tpu.memory_space<vmem>>, vector<1x2x1x16xf32>,
      %57 = vector.extract_strided_slice %18 {offsets = [0, 64], sizes = [2, 16], strides = [1, 1]} : vector<2x256xf32> to vector<2x16xf32>
      %c1_54 = arith.constant 1 : index
      %c0_55 = arith.constant 0 : index
      %c7_56 = arith.constant 7 : index
      %c3_57 = arith.constant 3 : index
      %58 = vector.load %arg8[%c1_54, %c0_55, %c7_56, %c3_57] : memref<2x2x22x22xf32, #tpu.memory_space<vmem>>, vector<1x2x1x16xf32>
      %59 = vector.shape_cast %58 : vector<1x2x1x16xf32> to vector<2x16xf32>
      %60 = vector.shape_cast %57 : vector<2x16xf32> to vector<1x2x1x16xf32>
      tpu.vector_store %arg8[%c1_54, %c0_55, %c7_56, %c3_57], %60 {strides = array<i32>} : memref<2x2x22x22xf32, #tpu.memory_space<vmem>>, vector<1x2x1x16xf32>,
      %61 = vector.extract_strided_slice %17 {offsets = [0, 80], sizes = [2, 16], strides = [1, 1]} : vector<2x256xf32> to vector<2x16xf32>
      %c0_58 = arith.constant 0 : index
      %c0_59 = arith.constant 0 : index
      %c8 = arith.constant 8 : index
      %c3_60 = arith.constant 3 : index
      %62 = vector.load %arg8[%c0_58, %c0_59, %c8, %c3_60] : memref<2x2x22x22xf32, #tpu.memory_space<vmem>>, vector<1x2x1x16xf32>
      %63 = vector.shape_cast %62 : vector<1x2x1x16xf32> to vector<2x16xf32>
      %64 = vector.shape_cast %61 : vector<2x16xf32> to vector<1x2x1x16xf32>
      tpu.vector_store %arg8[%c0_58, %c0_59, %c8, %c3_60], %64 {strides = array<i32>} : memref<2x2x22x22xf32, #tpu.memory_space<vmem>>, vector<1x2x1x16xf32>,
      %65 = vector.extract_strided_slice %18 {offsets = [0, 80], sizes = [2, 16], strides = [1, 1]} : vector<2x256xf32> to vector<2x16xf32>
      %c1_61 = arith.constant 1 : index
      %c0_62 = arith.constant 0 : index
      %c8_63 = arith.constant 8 : index
      %c3_64 = arith.constant 3 : index
      %66 = vector.load %arg8[%c1_61, %c0_62, %c8_63, %c3_64] : memref<2x2x22x22xf32, #tpu.memory_space<vmem>>, vector<1x2x1x16xf32>
      %67 = vector.shape_cast %66 : vector<1x2x1x16xf32> to vector<2x16xf32>
      %68 = vector.shape_cast %65 : vector<2x16xf32> to vector<1x2x1x16xf32>
      tpu.vector_store %arg8[%c1_61, %c0_62, %c8_63, %c3_64], %68 {strides = array<i32>} : memref<2x2x22x22xf32, #tpu.memory_space<vmem>>, vector<1x2x1x16xf32>,
      %69 = vector.extract_strided_slice %17 {offsets = [0, 96], sizes = [2, 16], strides = [1, 1]} : vector<2x256xf32> to vector<2x16xf32>
      %c0_65 = arith.constant 0 : index
      %c0_66 = arith.constant 0 : index
      %c9 = arith.constant 9 : index
      %c3_67 = arith.constant 3 : index
      %70 = vector.load %arg8[%c0_65, %c0_66, %c9, %c3_67] : memref<2x2x22x22xf32, #tpu.memory_space<vmem>>, vector<1x2x1x16xf32>
      %71 = vector.shape_cast %70 : vector<1x2x1x16xf32> to vector<2x16xf32>
      %72 = vector.shape_cast %69 : vector<2x16xf32> to vector<1x2x1x16xf32>
      tpu.vector_store %arg8[%c0_65, %c0_66, %c9, %c3_67], %72 {strides = array<i32>} : memref<2x2x22x22xf32, #tpu.memory_space<vmem>>, vector<1x2x1x16xf32>,
      %73 = vector.extract_strided_slice %18 {offsets = [0, 96], sizes = [2, 16], strides = [1, 1]} : vector<2x256xf32> to vector<2x16xf32>
      %c1_68 = arith.constant 1 : index
      %c0_69 = arith.constant 0 : index
      %c9_70 = arith.constant 9 : index
      %c3_71 = arith.constant 3 : index
      %74 = vector.load %arg8[%c1_68, %c0_69, %c9_70, %c3_71] : memref<2x2x22x22xf32, #tpu.memory_space<vmem>>, vector<1x2x1x16xf32>
      %75 = vector.shape_cast %74 : vector<1x2x1x16xf32> to vector<2x16xf32>
      %76 = vector.shape_cast %73 : vector<2x16xf32> to vector<1x2x1x16xf32>
      tpu.vector_store %arg8[%c1_68, %c0_69, %c9_70, %c3_71], %76 {strides = array<i32>} : memref<2x2x22x22xf32, #tpu.memory_space<vmem>>, vector<1x2x1x16xf32>,
      %77 = vector.extract_strided_slice %17 {offsets = [0, 112], sizes = [2, 16], strides = [1, 1]} : vector<2x256xf32> to vector<2x16xf32>
      %c0_72 = arith.constant 0 : index
      %c0_73 = arith.constant 0 : index
      %c10 = arith.constant 10 : index
      %c3_74 = arith.constant 3 : index
      %78 = vector.load %arg8[%c0_72, %c0_73, %c10, %c3_74] : memref<2x2x22x22xf32, #tpu.memory_space<vmem>>, vector<1x2x1x16xf32>
      %79 = vector.shape_cast %78 : vector<1x2x1x16xf32> to vector<2x16xf32>
      %80 = vector.shape_cast %77 : vector<2x16xf32> to vector<1x2x1x16xf32>
      tpu.vector_store %arg8[%c0_72, %c0_73, %c10, %c3_74], %80 {strides = array<i32>} : memref<2x2x22x22xf32, #tpu.memory_space<vmem>>, vector<1x2x1x16xf32>,
      %81 = vector.extract_strided_slice %18 {offsets = [0, 112], sizes = [2, 16], strides = [1, 1]} : vector<2x256xf32> to vector<2x16xf32>
      %c1_75 = arith.constant 1 : index
      %c0_76 = arith.constant 0 : index
      %c10_77 = arith.constant 10 : index
      %c3_78 = arith.constant 3 : index
      %82 = vector.load %arg8[%c1_75, %c0_76, %c10_77, %c3_78] : memref<2x2x22x22xf32, #tpu.memory_space<vmem>>, vector<1x2x1x16xf32>
      %83 = vector.shape_cast %82 : vector<1x2x1x16xf32> to vector<2x16xf32>
      %84 = vector.shape_cast %81 : vector<2x16xf32> to vector<1x2x1x16xf32>
      tpu.vector_store %arg8[%c1_75, %c0_76, %c10_77, %c3_78], %84 {strides = array<i32>} : memref<2x2x22x22xf32, #tpu.memory_space<vmem>>, vector<1x2x1x16xf32>,
      %85 = vector.extract_strided_slice %17 {offsets = [0, 128], sizes = [2, 16], strides = [1, 1]} : vector<2x256xf32> to vector<2x16xf32>
      %c0_79 = arith.constant 0 : index
      %c0_80 = arith.constant 0 : index
      %c11 = arith.constant 11 : index
      %c3_81 = arith.constant 3 : index
      %86 = vector.load %arg8[%c0_79, %c0_80, %c11, %c3_81] : memref<2x2x22x22xf32, #tpu.memory_space<vmem>>, vector<1x2x1x16xf32>
      %87 = vector.shape_cast %86 : vector<1x2x1x16xf32> to vector<2x16xf32>
      %88 = vector.shape_cast %85 : vector<2x16xf32> to vector<1x2x1x16xf32>
      tpu.vector_store %arg8[%c0_79, %c0_80, %c11, %c3_81], %88 {strides = array<i32>} : memref<2x2x22x22xf32, #tpu.memory_space<vmem>>, vector<1x2x1x16xf32>,
      %89 = vector.extract_strided_slice %18 {offsets = [0, 128], sizes = [2, 16], strides = [1, 1]} : vector<2x256xf32> to vector<2x16xf32>
      %c1_82 = arith.constant 1 : index
      %c0_83 = arith.constant 0 : index
      %c11_84 = arith.constant 11 : index
      %c3_85 = arith.constant 3 : index
      %90 = vector.load %arg8[%c1_82, %c0_83, %c11_84, %c3_85] : memref<2x2x22x22xf32, #tpu.memory_space<vmem>>, vector<1x2x1x16xf32>
      %91 = vector.shape_cast %90 : vector<1x2x1x16xf32> to vector<2x16xf32>
      %92 = vector.shape_cast %89 : vector<2x16xf32> to vector<1x2x1x16xf32>
      tpu.vector_store %arg8[%c1_82, %c0_83, %c11_84, %c3_85], %92 {strides = array<i32>} : memref<2x2x22x22xf32, #tpu.memory_space<vmem>>, vector<1x2x1x16xf32>,
      %93 = vector.extract_strided_slice %17 {offsets = [0, 144], sizes = [2, 16], strides = [1, 1]} : vector<2x256xf32> to vector<2x16xf32>
      %c0_86 = arith.constant 0 : index
      %c0_87 = arith.constant 0 : index
      %c12 = arith.constant 12 : index
      %c3_88 = arith.constant 3 : index
      %94 = vector.load %arg8[%c0_86, %c0_87, %c12, %c3_88] : memref<2x2x22x22xf32, #tpu.memory_space<vmem>>, vector<1x2x1x16xf32>
      %95 = vector.shape_cast %94 : vector<1x2x1x16xf32> to vector<2x16xf32>
      %96 = vector.shape_cast %93 : vector<2x16xf32> to vector<1x2x1x16xf32>
      tpu.vector_store %arg8[%c0_86, %c0_87, %c12, %c3_88], %96 {strides = array<i32>} : memref<2x2x22x22xf32, #tpu.memory_space<vmem>>, vector<1x2x1x16xf32>,
      %97 = vector.extract_strided_slice %18 {offsets = [0, 144], sizes = [2, 16], strides = [1, 1]} : vector<2x256xf32> to vector<2x16xf32>
      %c1_89 = arith.constant 1 : index
      %c0_90 = arith.constant 0 : index
      %c12_91 = arith.constant 12 : index
      %c3_92 = arith.constant 3 : index
      %98 = vector.load %arg8[%c1_89, %c0_90, %c12_91, %c3_92] : memref<2x2x22x22xf32, #tpu.memory_space<vmem>>, vector<1x2x1x16xf32>
      %99 = vector.shape_cast %98 : vector<1x2x1x16xf32> to vector<2x16xf32>
      %100 = vector.shape_cast %97 : vector<2x16xf32> to vector<1x2x1x16xf32>
      tpu.vector_store %arg8[%c1_89, %c0_90, %c12_91, %c3_92], %100 {strides = array<i32>} : memref<2x2x22x22xf32, #tpu.memory_space<vmem>>, vector<1x2x1x16xf32>,
      %101 = vector.extract_strided_slice %17 {offsets = [0, 160], sizes = [2, 16], strides = [1, 1]} : vector<2x256xf32> to vector<2x16xf32>
      %c0_93 = arith.constant 0 : index
      %c0_94 = arith.constant 0 : index
      %c13 = arith.constant 13 : index
      %c3_95 = arith.constant 3 : index
      %102 = vector.load %arg8[%c0_93, %c0_94, %c13, %c3_95] : memref<2x2x22x22xf32, #tpu.memory_space<vmem>>, vector<1x2x1x16xf32>
      %103 = vector.shape_cast %102 : vector<1x2x1x16xf32> to vector<2x16xf32>
      %104 = vector.shape_cast %101 : vector<2x16xf32> to vector<1x2x1x16xf32>
      tpu.vector_store %arg8[%c0_93, %c0_94, %c13, %c3_95], %104 {strides = array<i32>} : memref<2x2x22x22xf32, #tpu.memory_space<vmem>>, vector<1x2x1x16xf32>,
      %105 = vector.extract_strided_slice %18 {offsets = [0, 160], sizes = [2, 16], strides = [1, 1]} : vector<2x256xf32> to vector<2x16xf32>
      %c1_96 = arith.constant 1 : index
      %c0_97 = arith.constant 0 : index
      %c13_98 = arith.constant 13 : index
      %c3_99 = arith.constant 3 : index
      %106 = vector.load %arg8[%c1_96, %c0_97, %c13_98, %c3_99] : memref<2x2x22x22xf32, #tpu.memory_space<vmem>>, vector<1x2x1x16xf32>
      %107 = vector.shape_cast %106 : vector<1x2x1x16xf32> to vector<2x16xf32>
      %108 = vector.shape_cast %105 : vector<2x16xf32> to vector<1x2x1x16xf32>
      tpu.vector_store %arg8[%c1_96, %c0_97, %c13_98, %c3_99], %108 {strides = array<i32>} : memref<2x2x22x22xf32, #tpu.memory_space<vmem>>, vector<1x2x1x16xf32>,
      %109 = vector.extract_strided_slice %17 {offsets = [0, 176], sizes = [2, 16], strides = [1, 1]} : vector<2x256xf32> to vector<2x16xf32>
      %c0_100 = arith.constant 0 : index
      %c0_101 = arith.constant 0 : index
      %c14 = arith.constant 14 : index
      %c3_102 = arith.constant 3 : index
      %110 = vector.load %arg8[%c0_100, %c0_101, %c14, %c3_102] : memref<2x2x22x22xf32, #tpu.memory_space<vmem>>, vector<1x2x1x16xf32>
      %111 = vector.shape_cast %110 : vector<1x2x1x16xf32> to vector<2x16xf32>
      %112 = vector.shape_cast %109 : vector<2x16xf32> to vector<1x2x1x16xf32>
      tpu.vector_store %arg8[%c0_100, %c0_101, %c14, %c3_102], %112 {strides = array<i32>} : memref<2x2x22x22xf32, #tpu.memory_space<vmem>>, vector<1x2x1x16xf32>,
      %113 = vector.extract_strided_slice %18 {offsets = [0, 176], sizes = [2, 16], strides = [1, 1]} : vector<2x256xf32> to vector<2x16xf32>
      %c1_103 = arith.constant 1 : index
      %c0_104 = arith.constant 0 : index
      %c14_105 = arith.constant 14 : index
      %c3_106 = arith.constant 3 : index
      %114 = vector.load %arg8[%c1_103, %c0_104, %c14_105, %c3_106] : memref<2x2x22x22xf32, #tpu.memory_space<vmem>>, vector<1x2x1x16xf32>
      %115 = vector.shape_cast %114 : vector<1x2x1x16xf32> to vector<2x16xf32>
      %116 = vector.shape_cast %113 : vector<2x16xf32> to vector<1x2x1x16xf32>
      tpu.vector_store %arg8[%c1_103, %c0_104, %c14_105, %c3_106], %116 {strides = array<i32>} : memref<2x2x22x22xf32, #tpu.memory_space<vmem>>, vector<1x2x1x16xf32>,
      %117 = vector.extract_strided_slice %17 {offsets = [0, 192], sizes = [2, 16], strides = [1, 1]} : vector<2x256xf32> to vector<2x16xf32>
      %c0_107 = arith.constant 0 : index
      %c0_108 = arith.constant 0 : index
      %c15 = arith.constant 15 : index
      %c3_109 = arith.constant 3 : index
      %118 = vector.load %arg8[%c0_107, %c0_108, %c15, %c3_109] : memref<2x2x22x22xf32, #tpu.memory_space<vmem>>, vector<1x2x1x16xf32>
      %119 = vector.shape_cast %118 : vector<1x2x1x16xf32> to vector<2x16xf32>
      %120 = vector.shape_cast %117 : vector<2x16xf32> to vector<1x2x1x16xf32>
      tpu.vector_store %arg8[%c0_107, %c0_108, %c15, %c3_109], %120 {strides = array<i32>} : memref<2x2x22x22xf32, #tpu.memory_space<vmem>>, vector<1x2x1x16xf32>,
      %121 = vector.extract_strided_slice %18 {offsets = [0, 192], sizes = [2, 16], strides = [1, 1]} : vector<2x256xf32> to vector<2x16xf32>
      %c1_110 = arith.constant 1 : index
      %c0_111 = arith.constant 0 : index
      %c15_112 = arith.constant 15 : index
      %c3_113 = arith.constant 3 : index
      %122 = vector.load %arg8[%c1_110, %c0_111, %c15_112, %c3_113] : memref<2x2x22x22xf32, #tpu.memory_space<vmem>>, vector<1x2x1x16xf32>
      %123 = vector.shape_cast %122 : vector<1x2x1x16xf32> to vector<2x16xf32>
      %124 = vector.shape_cast %121 : vector<2x16xf32> to vector<1x2x1x16xf32>
      tpu.vector_store %arg8[%c1_110, %c0_111, %c15_112, %c3_113], %124 {strides = array<i32>} : memref<2x2x22x22xf32, #tpu.memory_space<vmem>>, vector<1x2x1x16xf32>,
      %125 = vector.extract_strided_slice %17 {offsets = [0, 208], sizes = [2, 16], strides = [1, 1]} : vector<2x256xf32> to vector<2x16xf32>
      %c0_114 = arith.constant 0 : index
      %c0_115 = arith.constant 0 : index
      %c16 = arith.constant 16 : index
      %c3_116 = arith.constant 3 : index
      %126 = vector.load %arg8[%c0_114, %c0_115, %c16, %c3_116] : memref<2x2x22x22xf32, #tpu.memory_space<vmem>>, vector<1x2x1x16xf32>
      %127 = vector.shape_cast %126 : vector<1x2x1x16xf32> to vector<2x16xf32>
      %128 = vector.shape_cast %125 : vector<2x16xf32> to vector<1x2x1x16xf32>
      tpu.vector_store %arg8[%c0_114, %c0_115, %c16, %c3_116], %128 {strides = array<i32>} : memref<2x2x22x22xf32, #tpu.memory_space<vmem>>, vector<1x2x1x16xf32>,
      %129 = vector.extract_strided_slice %18 {offsets = [0, 208], sizes = [2, 16], strides = [1, 1]} : vector<2x256xf32> to vector<2x16xf32>
      %c1_117 = arith.constant 1 : index
      %c0_118 = arith.constant 0 : index
      %c16_119 = arith.constant 16 : index
      %c3_120 = arith.constant 3 : index
      %130 = vector.load %arg8[%c1_117, %c0_118, %c16_119, %c3_120] : memref<2x2x22x22xf32, #tpu.memory_space<vmem>>, vector<1x2x1x16xf32>
      %131 = vector.shape_cast %130 : vector<1x2x1x16xf32> to vector<2x16xf32>
      %132 = vector.shape_cast %129 : vector<2x16xf32> to vector<1x2x1x16xf32>
      tpu.vector_store %arg8[%c1_117, %c0_118, %c16_119, %c3_120], %132 {strides = array<i32>} : memref<2x2x22x22xf32, #tpu.memory_space<vmem>>, vector<1x2x1x16xf32>,
      %133 = vector.extract_strided_slice %17 {offsets = [0, 224], sizes = [2, 16], strides = [1, 1]} : vector<2x256xf32> to vector<2x16xf32>
      %c0_121 = arith.constant 0 : index
      %c0_122 = arith.constant 0 : index
      %c17 = arith.constant 17 : index
      %c3_123 = arith.constant 3 : index
      %134 = vector.load %arg8[%c0_121, %c0_122, %c17, %c3_123] : memref<2x2x22x22xf32, #tpu.memory_space<vmem>>, vector<1x2x1x16xf32>
      %135 = vector.shape_cast %134 : vector<1x2x1x16xf32> to vector<2x16xf32>
      %136 = vector.shape_cast %133 : vector<2x16xf32> to vector<1x2x1x16xf32>
      tpu.vector_store %arg8[%c0_121, %c0_122, %c17, %c3_123], %136 {strides = array<i32>} : memref<2x2x22x22xf32, #tpu.memory_space<vmem>>, vector<1x2x1x16xf32>,
      %137 = vector.extract_strided_slice %18 {offsets = [0, 224], sizes = [2, 16], strides = [1, 1]} : vector<2x256xf32> to vector<2x16xf32>
      %c1_124 = arith.constant 1 : index
      %c0_125 = arith.constant 0 : index
      %c17_126 = arith.constant 17 : index
      %c3_127 = arith.constant 3 : index
      %138 = vector.load %arg8[%c1_124, %c0_125, %c17_126, %c3_127] : memref<2x2x22x22xf32, #tpu.memory_space<vmem>>, vector<1x2x1x16xf32>
      %139 = vector.shape_cast %138 : vector<1x2x1x16xf32> to vector<2x16xf32>
      %140 = vector.shape_cast %137 : vector<2x16xf32> to vector<1x2x1x16xf32>
      tpu.vector_store %arg8[%c1_124, %c0_125, %c17_126, %c3_127], %140 {strides = array<i32>} : memref<2x2x22x22xf32, #tpu.memory_space<vmem>>, vector<1x2x1x16xf32>,
      %141 = vector.extract_strided_slice %17 {offsets = [0, 240], sizes = [2, 16], strides = [1, 1]} : vector<2x256xf32> to vector<2x16xf32>
      %c0_128 = arith.constant 0 : index
      %c0_129 = arith.constant 0 : index
      %c18 = arith.constant 18 : index
      %c3_130 = arith.constant 3 : index
      %142 = vector.load %arg8[%c0_128, %c0_129, %c18, %c3_130] : memref<2x2x22x22xf32, #tpu.memory_space<vmem>>, vector<1x2x1x16xf32>
      %143 = vector.shape_cast %142 : vector<1x2x1x16xf32> to vector<2x16xf32>
      %144 = vector.shape_cast %141 : vector<2x16xf32> to vector<1x2x1x16xf32>
      tpu.vector_store %arg8[%c0_128, %c0_129, %c18, %c3_130], %144 {strides = array<i32>} : memref<2x2x22x22xf32, #tpu.memory_space<vmem>>, vector<1x2x1x16xf32>,
      %145 = vector.extract_strided_slice %18 {offsets = [0, 240], sizes = [2, 16], strides = [1, 1]} : vector<2x256xf32> to vector<2x16xf32>
      %c1_131 = arith.constant 1 : index
      %c0_132 = arith.constant 0 : index
      %c18_133 = arith.constant 18 : index
      %c3_134 = arith.constant 3 : index
      %146 = vector.load %arg8[%c1_131, %c0_132, %c18_133, %c3_134] : memref<2x2x22x22xf32, #tpu.memory_space<vmem>>, vector<1x2x1x16xf32>
      %147 = vector.shape_cast %146 : vector<1x2x1x16xf32> to vector<2x16xf32>
      %148 = vector.shape_cast %145 : vector<2x16xf32> to vector<1x2x1x16xf32>
      tpu.vector_store %arg8[%c1_131, %c0_132, %c18_133, %c3_134], %148 {strides = array<i32>} : memref<2x2x22x22xf32, #tpu.memory_space<vmem>>, vector<1x2x1x16xf32>,
      %c0_135 = arith.constant 0 : index
      %149 = memref.load %arg3[%c0_135] : memref<1xf32, #tpu.memory_space<smem>>
      %150 = vector.broadcast %149 : f32 to vector<2x16x16xf32>
      %c0_136 = arith.constant 0 : index
      %c0_137 = arith.constant 0 : index
      %c0_138 = arith.constant 0 : index
      %c0_139 = arith.constant 0 : index
      %151 = vector.load %arg8[%c0_136, %c0_137, %c0_138, %c0_139] : memref<2x2x22x22xf32, #tpu.memory_space<vmem>>, vector<1x2x22x22xf32>
      %152 = vector.shape_cast %151 : vector<1x2x22x22xf32> to vector<2x22x22xf32>
      %153 = vector.extract_strided_slice %152 {offsets = [0, 0, 0], sizes = [2, 22, 16], strides = [1, 1, 1]} : vector<2x22x22xf32> to vector<2x22x16xf32>
      %c0_140 = arith.constant 0 : index
      %154 = memref.load %arg2[%c0_140] : memref<98xf32, #tpu.memory_space<smem>>
      %155 = vector.extract_strided_slice %153 {offsets = [0, 0, 0], sizes = [2, 16, 16], strides = [1, 1, 1]} : vector<2x22x16xf32> to vector<2x16x16xf32>
      %156 = vector.broadcast %154 : f32 to vector<2x16x16xf32>
      %157 = arith.mulf %156, %155 : vector<2x16x16xf32>
      %158 = arith.addf %150, %157 : vector<2x16x16xf32>
      %c7_141 = arith.constant 7 : index
      %159 = memref.load %arg2[%c7_141] : memref<98xf32, #tpu.memory_space<smem>>
      %160 = vector.extract_strided_slice %153 {offsets = [0, 1, 0], sizes = [2, 16, 16], strides = [1, 1, 1]} : vector<2x22x16xf32> to vector<2x16x16xf32>
      %161 = vector.broadcast %159 : f32 to vector<2x16x16xf32>
      %162 = arith.mulf %161, %160 : vector<2x16x16xf32>
      %163 = arith.addf %158, %162 : vector<2x16x16xf32>
      %c14_142 = arith.constant 14 : index
      %164 = memref.load %arg2[%c14_142] : memref<98xf32, #tpu.memory_space<smem>>
      %165 = vector.extract_strided_slice %153 {offsets = [0, 2, 0], sizes = [2, 16, 16], strides = [1, 1, 1]} : vector<2x22x16xf32> to vector<2x16x16xf32>
      %166 = vector.broadcast %164 : f32 to vector<2x16x16xf32>
      %167 = arith.mulf %166, %165 : vector<2x16x16xf32>
      %168 = arith.addf %163, %167 : vector<2x16x16xf32>
      %c21 = arith.constant 21 : index
      %169 = memref.load %arg2[%c21] : memref<98xf32, #tpu.memory_space<smem>>
      %170 = vector.extract_strided_slice %153 {offsets = [0, 3, 0], sizes = [2, 16, 16], strides = [1, 1, 1]} : vector<2x22x16xf32> to vector<2x16x16xf32>
      %171 = vector.broadcast %169 : f32 to vector<2x16x16xf32>
      %172 = arith.mulf %171, %170 : vector<2x16x16xf32>
      %173 = arith.addf %168, %172 : vector<2x16x16xf32>
      %c28 = arith.constant 28 : index
      %174 = memref.load %arg2[%c28] : memref<98xf32, #tpu.memory_space<smem>>
      %175 = vector.extract_strided_slice %153 {offsets = [0, 4, 0], sizes = [2, 16, 16], strides = [1, 1, 1]} : vector<2x22x16xf32> to vector<2x16x16xf32>
      %176 = vector.broadcast %174 : f32 to vector<2x16x16xf32>
      %177 = arith.mulf %176, %175 : vector<2x16x16xf32>
      %178 = arith.addf %173, %177 : vector<2x16x16xf32>
      %c35 = arith.constant 35 : index
      %179 = memref.load %arg2[%c35] : memref<98xf32, #tpu.memory_space<smem>>
      %180 = vector.extract_strided_slice %153 {offsets = [0, 5, 0], sizes = [2, 16, 16], strides = [1, 1, 1]} : vector<2x22x16xf32> to vector<2x16x16xf32>
      %181 = vector.broadcast %179 : f32 to vector<2x16x16xf32>
      %182 = arith.mulf %181, %180 : vector<2x16x16xf32>
      %183 = arith.addf %178, %182 : vector<2x16x16xf32>
      %c42 = arith.constant 42 : index
      %184 = memref.load %arg2[%c42] : memref<98xf32, #tpu.memory_space<smem>>
      %185 = vector.extract_strided_slice %153 {offsets = [0, 6, 0], sizes = [2, 16, 16], strides = [1, 1, 1]} : vector<2x22x16xf32> to vector<2x16x16xf32>
      %186 = vector.broadcast %184 : f32 to vector<2x16x16xf32>
      %187 = arith.mulf %186, %185 : vector<2x16x16xf32>
      %188 = arith.addf %183, %187 : vector<2x16x16xf32>
      %189 = vector.extract_strided_slice %152 {offsets = [0, 0, 1], sizes = [2, 22, 16], strides = [1, 1, 1]} : vector<2x22x22xf32> to vector<2x22x16xf32>
      %c1_143 = arith.constant 1 : index
      %190 = memref.load %arg2[%c1_143] : memref<98xf32, #tpu.memory_space<smem>>
      %191 = vector.extract_strided_slice %189 {offsets = [0, 0, 0], sizes = [2, 16, 16], strides = [1, 1, 1]} : vector<2x22x16xf32> to vector<2x16x16xf32>
      %192 = vector.broadcast %190 : f32 to vector<2x16x16xf32>
      %193 = arith.mulf %192, %191 : vector<2x16x16xf32>
      %194 = arith.addf %188, %193 : vector<2x16x16xf32>
      %c8_144 = arith.constant 8 : index
      %195 = memref.load %arg2[%c8_144] : memref<98xf32, #tpu.memory_space<smem>>
      %196 = vector.extract_strided_slice %189 {offsets = [0, 1, 0], sizes = [2, 16, 16], strides = [1, 1, 1]} : vector<2x22x16xf32> to vector<2x16x16xf32>
      %197 = vector.broadcast %195 : f32 to vector<2x16x16xf32>
      %198 = arith.mulf %197, %196 : vector<2x16x16xf32>
      %199 = arith.addf %194, %198 : vector<2x16x16xf32>
      %c15_145 = arith.constant 15 : index
      %200 = memref.load %arg2[%c15_145] : memref<98xf32, #tpu.memory_space<smem>>
      %201 = vector.extract_strided_slice %189 {offsets = [0, 2, 0], sizes = [2, 16, 16], strides = [1, 1, 1]} : vector<2x22x16xf32> to vector<2x16x16xf32>
      %202 = vector.broadcast %200 : f32 to vector<2x16x16xf32>
      %203 = arith.mulf %202, %201 : vector<2x16x16xf32>
      %204 = arith.addf %199, %203 : vector<2x16x16xf32>
      %c22 = arith.constant 22 : index
      %205 = memref.load %arg2[%c22] : memref<98xf32, #tpu.memory_space<smem>>
      %206 = vector.extract_strided_slice %189 {offsets = [0, 3, 0], sizes = [2, 16, 16], strides = [1, 1, 1]} : vector<2x22x16xf32> to vector<2x16x16xf32>
      %207 = vector.broadcast %205 : f32 to vector<2x16x16xf32>
      %208 = arith.mulf %207, %206 : vector<2x16x16xf32>
      %209 = arith.addf %204, %208 : vector<2x16x16xf32>
      %c29 = arith.constant 29 : index
      %210 = memref.load %arg2[%c29] : memref<98xf32, #tpu.memory_space<smem>>
      %211 = vector.extract_strided_slice %189 {offsets = [0, 4, 0], sizes = [2, 16, 16], strides = [1, 1, 1]} : vector<2x22x16xf32> to vector<2x16x16xf32>
      %212 = vector.broadcast %210 : f32 to vector<2x16x16xf32>
      %213 = arith.mulf %212, %211 : vector<2x16x16xf32>
      %214 = arith.addf %209, %213 : vector<2x16x16xf32>
      %c36 = arith.constant 36 : index
      %215 = memref.load %arg2[%c36] : memref<98xf32, #tpu.memory_space<smem>>
      %216 = vector.extract_strided_slice %189 {offsets = [0, 5, 0], sizes = [2, 16, 16], strides = [1, 1, 1]} : vector<2x22x16xf32> to vector<2x16x16xf32>
      %217 = vector.broadcast %215 : f32 to vector<2x16x16xf32>
      %218 = arith.mulf %217, %216 : vector<2x16x16xf32>
      %219 = arith.addf %214, %218 : vector<2x16x16xf32>
      %c43 = arith.constant 43 : index
      %220 = memref.load %arg2[%c43] : memref<98xf32, #tpu.memory_space<smem>>
      %221 = vector.extract_strided_slice %189 {offsets = [0, 6, 0], sizes = [2, 16, 16], strides = [1, 1, 1]} : vector<2x22x16xf32> to vector<2x16x16xf32>
      %222 = vector.broadcast %220 : f32 to vector<2x16x16xf32>
      %223 = arith.mulf %222, %221 : vector<2x16x16xf32>
      %224 = arith.addf %219, %223 : vector<2x16x16xf32>
      %225 = vector.extract_strided_slice %152 {offsets = [0, 0, 2], sizes = [2, 22, 16], strides = [1, 1, 1]} : vector<2x22x22xf32> to vector<2x22x16xf32>
      %c2 = arith.constant 2 : index
      %226 = memref.load %arg2[%c2] : memref<98xf32, #tpu.memory_space<smem>>
      %227 = vector.extract_strided_slice %225 {offsets = [0, 0, 0], sizes = [2, 16, 16], strides = [1, 1, 1]} : vector<2x22x16xf32> to vector<2x16x16xf32>
      %228 = vector.broadcast %226 : f32 to vector<2x16x16xf32>
      %229 = arith.mulf %228, %227 : vector<2x16x16xf32>
      %230 = arith.addf %224, %229 : vector<2x16x16xf32>
      %c9_146 = arith.constant 9 : index
      %231 = memref.load %arg2[%c9_146] : memref<98xf32, #tpu.memory_space<smem>>
      %232 = vector.extract_strided_slice %225 {offsets = [0, 1, 0], sizes = [2, 16, 16], strides = [1, 1, 1]} : vector<2x22x16xf32> to vector<2x16x16xf32>
      %233 = vector.broadcast %231 : f32 to vector<2x16x16xf32>
      %234 = arith.mulf %233, %232 : vector<2x16x16xf32>
      %235 = arith.addf %230, %234 : vector<2x16x16xf32>
      %c16_147 = arith.constant 16 : index
      %236 = memref.load %arg2[%c16_147] : memref<98xf32, #tpu.memory_space<smem>>
      %237 = vector.extract_strided_slice %225 {offsets = [0, 2, 0], sizes = [2, 16, 16], strides = [1, 1, 1]} : vector<2x22x16xf32> to vector<2x16x16xf32>
      %238 = vector.broadcast %236 : f32 to vector<2x16x16xf32>
      %239 = arith.mulf %238, %237 : vector<2x16x16xf32>
      %240 = arith.addf %235, %239 : vector<2x16x16xf32>
      %c23 = arith.constant 23 : index
      %241 = memref.load %arg2[%c23] : memref<98xf32, #tpu.memory_space<smem>>
      %242 = vector.extract_strided_slice %225 {offsets = [0, 3, 0], sizes = [2, 16, 16], strides = [1, 1, 1]} : vector<2x22x16xf32> to vector<2x16x16xf32>
      %243 = vector.broadcast %241 : f32 to vector<2x16x16xf32>
      %244 = arith.mulf %243, %242 : vector<2x16x16xf32>
      %245 = arith.addf %240, %244 : vector<2x16x16xf32>
      %c30 = arith.constant 30 : index
      %246 = memref.load %arg2[%c30] : memref<98xf32, #tpu.memory_space<smem>>
      %247 = vector.extract_strided_slice %225 {offsets = [0, 4, 0], sizes = [2, 16, 16], strides = [1, 1, 1]} : vector<2x22x16xf32> to vector<2x16x16xf32>
      %248 = vector.broadcast %246 : f32 to vector<2x16x16xf32>
      %249 = arith.mulf %248, %247 : vector<2x16x16xf32>
      %250 = arith.addf %245, %249 : vector<2x16x16xf32>
      %c37 = arith.constant 37 : index
      %251 = memref.load %arg2[%c37] : memref<98xf32, #tpu.memory_space<smem>>
      %252 = vector.extract_strided_slice %225 {offsets = [0, 5, 0], sizes = [2, 16, 16], strides = [1, 1, 1]} : vector<2x22x16xf32> to vector<2x16x16xf32>
      %253 = vector.broadcast %251 : f32 to vector<2x16x16xf32>
      %254 = arith.mulf %253, %252 : vector<2x16x16xf32>
      %255 = arith.addf %250, %254 : vector<2x16x16xf32>
      %c44 = arith.constant 44 : index
      %256 = memref.load %arg2[%c44] : memref<98xf32, #tpu.memory_space<smem>>
      %257 = vector.extract_strided_slice %225 {offsets = [0, 6, 0], sizes = [2, 16, 16], strides = [1, 1, 1]} : vector<2x22x16xf32> to vector<2x16x16xf32>
      %258 = vector.broadcast %256 : f32 to vector<2x16x16xf32>
      %259 = arith.mulf %258, %257 : vector<2x16x16xf32>
      %260 = arith.addf %255, %259 : vector<2x16x16xf32>
      %261 = vector.extract_strided_slice %152 {offsets = [0, 0, 3], sizes = [2, 22, 16], strides = [1, 1, 1]} : vector<2x22x22xf32> to vector<2x22x16xf32>
      %c3_148 = arith.constant 3 : index
      %262 = memref.load %arg2[%c3_148] : memref<98xf32, #tpu.memory_space<smem>>
      %263 = vector.extract_strided_slice %261 {offsets = [0, 0, 0], sizes = [2, 16, 16], strides = [1, 1, 1]} : vector<2x22x16xf32> to vector<2x16x16xf32>
      %264 = vector.broadcast %262 : f32 to vector<2x16x16xf32>
      %265 = arith.mulf %264, %263 : vector<2x16x16xf32>
      %266 = arith.addf %260, %265 : vector<2x16x16xf32>
      %c10_149 = arith.constant 10 : index
      %267 = memref.load %arg2[%c10_149] : memref<98xf32, #tpu.memory_space<smem>>
      %268 = vector.extract_strided_slice %261 {offsets = [0, 1, 0], sizes = [2, 16, 16], strides = [1, 1, 1]} : vector<2x22x16xf32> to vector<2x16x16xf32>
      %269 = vector.broadcast %267 : f32 to vector<2x16x16xf32>
      %270 = arith.mulf %269, %268 : vector<2x16x16xf32>
      %271 = arith.addf %266, %270 : vector<2x16x16xf32>
      %c17_150 = arith.constant 17 : index
      %272 = memref.load %arg2[%c17_150] : memref<98xf32, #tpu.memory_space<smem>>
      %273 = vector.extract_strided_slice %261 {offsets = [0, 2, 0], sizes = [2, 16, 16], strides = [1, 1, 1]} : vector<2x22x16xf32> to vector<2x16x16xf32>
      %274 = vector.broadcast %272 : f32 to vector<2x16x16xf32>
      %275 = arith.mulf %274, %273 : vector<2x16x16xf32>
      %276 = arith.addf %271, %275 : vector<2x16x16xf32>
      %c24 = arith.constant 24 : index
      %277 = memref.load %arg2[%c24] : memref<98xf32, #tpu.memory_space<smem>>
      %278 = vector.extract_strided_slice %261 {offsets = [0, 3, 0], sizes = [2, 16, 16], strides = [1, 1, 1]} : vector<2x22x16xf32> to vector<2x16x16xf32>
      %279 = vector.broadcast %277 : f32 to vector<2x16x16xf32>
      %280 = arith.mulf %279, %278 : vector<2x16x16xf32>
      %281 = arith.addf %276, %280 : vector<2x16x16xf32>
      %c31 = arith.constant 31 : index
      %282 = memref.load %arg2[%c31] : memref<98xf32, #tpu.memory_space<smem>>
      %283 = vector.extract_strided_slice %261 {offsets = [0, 4, 0], sizes = [2, 16, 16], strides = [1, 1, 1]} : vector<2x22x16xf32> to vector<2x16x16xf32>
      %284 = vector.broadcast %282 : f32 to vector<2x16x16xf32>
      %285 = arith.mulf %284, %283 : vector<2x16x16xf32>
      %286 = arith.addf %281, %285 : vector<2x16x16xf32>
      %c38 = arith.constant 38 : index
      %287 = memref.load %arg2[%c38] : memref<98xf32, #tpu.memory_space<smem>>
      %288 = vector.extract_strided_slice %261 {offsets = [0, 5, 0], sizes = [2, 16, 16], strides = [1, 1, 1]} : vector<2x22x16xf32> to vector<2x16x16xf32>
      %289 = vector.broadcast %287 : f32 to vector<2x16x16xf32>
      %290 = arith.mulf %289, %288 : vector<2x16x16xf32>
      %291 = arith.addf %286, %290 : vector<2x16x16xf32>
      %c45 = arith.constant 45 : index
      %292 = memref.load %arg2[%c45] : memref<98xf32, #tpu.memory_space<smem>>
      %293 = vector.extract_strided_slice %261 {offsets = [0, 6, 0], sizes = [2, 16, 16], strides = [1, 1, 1]} : vector<2x22x16xf32> to vector<2x16x16xf32>
      %294 = vector.broadcast %292 : f32 to vector<2x16x16xf32>
      %295 = arith.mulf %294, %293 : vector<2x16x16xf32>
      %296 = arith.addf %291, %295 : vector<2x16x16xf32>
      %297 = vector.extract_strided_slice %152 {offsets = [0, 0, 4], sizes = [2, 22, 16], strides = [1, 1, 1]} : vector<2x22x22xf32> to vector<2x22x16xf32>
      %c4_151 = arith.constant 4 : index
      %298 = memref.load %arg2[%c4_151] : memref<98xf32, #tpu.memory_space<smem>>
      %299 = vector.extract_strided_slice %297 {offsets = [0, 0, 0], sizes = [2, 16, 16], strides = [1, 1, 1]} : vector<2x22x16xf32> to vector<2x16x16xf32>
      %300 = vector.broadcast %298 : f32 to vector<2x16x16xf32>
      %301 = arith.mulf %300, %299 : vector<2x16x16xf32>
      %302 = arith.addf %296, %301 : vector<2x16x16xf32>
      %c11_152 = arith.constant 11 : index
      %303 = memref.load %arg2[%c11_152] : memref<98xf32, #tpu.memory_space<smem>>
      %304 = vector.extract_strided_slice %297 {offsets = [0, 1, 0], sizes = [2, 16, 16], strides = [1, 1, 1]} : vector<2x22x16xf32> to vector<2x16x16xf32>
      %305 = vector.broadcast %303 : f32 to vector<2x16x16xf32>
      %306 = arith.mulf %305, %304 : vector<2x16x16xf32>
      %307 = arith.addf %302, %306 : vector<2x16x16xf32>
      %c18_153 = arith.constant 18 : index
      %308 = memref.load %arg2[%c18_153] : memref<98xf32, #tpu.memory_space<smem>>
      %309 = vector.extract_strided_slice %297 {offsets = [0, 2, 0], sizes = [2, 16, 16], strides = [1, 1, 1]} : vector<2x22x16xf32> to vector<2x16x16xf32>
      %310 = vector.broadcast %308 : f32 to vector<2x16x16xf32>
      %311 = arith.mulf %310, %309 : vector<2x16x16xf32>
      %312 = arith.addf %307, %311 : vector<2x16x16xf32>
      %c25 = arith.constant 25 : index
      %313 = memref.load %arg2[%c25] : memref<98xf32, #tpu.memory_space<smem>>
      %314 = vector.extract_strided_slice %297 {offsets = [0, 3, 0], sizes = [2, 16, 16], strides = [1, 1, 1]} : vector<2x22x16xf32> to vector<2x16x16xf32>
      %315 = vector.broadcast %313 : f32 to vector<2x16x16xf32>
      %316 = arith.mulf %315, %314 : vector<2x16x16xf32>
      %317 = arith.addf %312, %316 : vector<2x16x16xf32>
      %c32 = arith.constant 32 : index
      %318 = memref.load %arg2[%c32] : memref<98xf32, #tpu.memory_space<smem>>
      %319 = vector.extract_strided_slice %297 {offsets = [0, 4, 0], sizes = [2, 16, 16], strides = [1, 1, 1]} : vector<2x22x16xf32> to vector<2x16x16xf32>
      %320 = vector.broadcast %318 : f32 to vector<2x16x16xf32>
      %321 = arith.mulf %320, %319 : vector<2x16x16xf32>
      %322 = arith.addf %317, %321 : vector<2x16x16xf32>
      %c39 = arith.constant 39 : index
      %323 = memref.load %arg2[%c39] : memref<98xf32, #tpu.memory_space<smem>>
      %324 = vector.extract_strided_slice %297 {offsets = [0, 5, 0], sizes = [2, 16, 16], strides = [1, 1, 1]} : vector<2x22x16xf32> to vector<2x16x16xf32>
      %325 = vector.broadcast %323 : f32 to vector<2x16x16xf32>
      %326 = arith.mulf %325, %324 : vector<2x16x16xf32>
      %327 = arith.addf %322, %326 : vector<2x16x16xf32>
      %c46 = arith.constant 46 : index
      %328 = memref.load %arg2[%c46] : memref<98xf32, #tpu.memory_space<smem>>
      %329 = vector.extract_strided_slice %297 {offsets = [0, 6, 0], sizes = [2, 16, 16], strides = [1, 1, 1]} : vector<2x22x16xf32> to vector<2x16x16xf32>
      %330 = vector.broadcast %328 : f32 to vector<2x16x16xf32>
      %331 = arith.mulf %330, %329 : vector<2x16x16xf32>
      %332 = arith.addf %327, %331 : vector<2x16x16xf32>
      %333 = vector.extract_strided_slice %152 {offsets = [0, 0, 5], sizes = [2, 22, 16], strides = [1, 1, 1]} : vector<2x22x22xf32> to vector<2x22x16xf32>
      %c5_154 = arith.constant 5 : index
      %334 = memref.load %arg2[%c5_154] : memref<98xf32, #tpu.memory_space<smem>>
      %335 = vector.extract_strided_slice %333 {offsets = [0, 0, 0], sizes = [2, 16, 16], strides = [1, 1, 1]} : vector<2x22x16xf32> to vector<2x16x16xf32>
      %336 = vector.broadcast %334 : f32 to vector<2x16x16xf32>
      %337 = arith.mulf %336, %335 : vector<2x16x16xf32>
      %338 = arith.addf %332, %337 : vector<2x16x16xf32>
      %c12_155 = arith.constant 12 : index
      %339 = memref.load %arg2[%c12_155] : memref<98xf32, #tpu.memory_space<smem>>
      %340 = vector.extract_strided_slice %333 {offsets = [0, 1, 0], sizes = [2, 16, 16], strides = [1, 1, 1]} : vector<2x22x16xf32> to vector<2x16x16xf32>
      %341 = vector.broadcast %339 : f32 to vector<2x16x16xf32>
      %342 = arith.mulf %341, %340 : vector<2x16x16xf32>
      %343 = arith.addf %338, %342 : vector<2x16x16xf32>
      %c19 = arith.constant 19 : index
      %344 = memref.load %arg2[%c19] : memref<98xf32, #tpu.memory_space<smem>>
      %345 = vector.extract_strided_slice %333 {offsets = [0, 2, 0], sizes = [2, 16, 16], strides = [1, 1, 1]} : vector<2x22x16xf32> to vector<2x16x16xf32>
      %346 = vector.broadcast %344 : f32 to vector<2x16x16xf32>
      %347 = arith.mulf %346, %345 : vector<2x16x16xf32>
      %348 = arith.addf %343, %347 : vector<2x16x16xf32>
      %c26 = arith.constant 26 : index
      %349 = memref.load %arg2[%c26] : memref<98xf32, #tpu.memory_space<smem>>
      %350 = vector.extract_strided_slice %333 {offsets = [0, 3, 0], sizes = [2, 16, 16], strides = [1, 1, 1]} : vector<2x22x16xf32> to vector<2x16x16xf32>
      %351 = vector.broadcast %349 : f32 to vector<2x16x16xf32>
      %352 = arith.mulf %351, %350 : vector<2x16x16xf32>
      %353 = arith.addf %348, %352 : vector<2x16x16xf32>
      %c33 = arith.constant 33 : index
      %354 = memref.load %arg2[%c33] : memref<98xf32, #tpu.memory_space<smem>>
      %355 = vector.extract_strided_slice %333 {offsets = [0, 4, 0], sizes = [2, 16, 16], strides = [1, 1, 1]} : vector<2x22x16xf32> to vector<2x16x16xf32>
      %356 = vector.broadcast %354 : f32 to vector<2x16x16xf32>
      %357 = arith.mulf %356, %355 : vector<2x16x16xf32>
      %358 = arith.addf %353, %357 : vector<2x16x16xf32>
      %c40 = arith.constant 40 : index
      %359 = memref.load %arg2[%c40] : memref<98xf32, #tpu.memory_space<smem>>
      %360 = vector.extract_strided_slice %333 {offsets = [0, 5, 0], sizes = [2, 16, 16], strides = [1, 1, 1]} : vector<2x22x16xf32> to vector<2x16x16xf32>
      %361 = vector.broadcast %359 : f32 to vector<2x16x16xf32>
      %362 = arith.mulf %361, %360 : vector<2x16x16xf32>
      %363 = arith.addf %358, %362 : vector<2x16x16xf32>
      %c47 = arith.constant 47 : index
      %364 = memref.load %arg2[%c47] : memref<98xf32, #tpu.memory_space<smem>>
      %365 = vector.extract_strided_slice %333 {offsets = [0, 6, 0], sizes = [2, 16, 16], strides = [1, 1, 1]} : vector<2x22x16xf32> to vector<2x16x16xf32>
      %366 = vector.broadcast %364 : f32 to vector<2x16x16xf32>
      %367 = arith.mulf %366, %365 : vector<2x16x16xf32>
      %368 = arith.addf %363, %367 : vector<2x16x16xf32>
      %369 = vector.extract_strided_slice %152 {offsets = [0, 0, 6], sizes = [2, 22, 16], strides = [1, 1, 1]} : vector<2x22x22xf32> to vector<2x22x16xf32>
      %c6_156 = arith.constant 6 : index
      %370 = memref.load %arg2[%c6_156] : memref<98xf32, #tpu.memory_space<smem>>
      %371 = vector.extract_strided_slice %369 {offsets = [0, 0, 0], sizes = [2, 16, 16], strides = [1, 1, 1]} : vector<2x22x16xf32> to vector<2x16x16xf32>
      %372 = vector.broadcast %370 : f32 to vector<2x16x16xf32>
      %373 = arith.mulf %372, %371 : vector<2x16x16xf32>
      %374 = arith.addf %368, %373 : vector<2x16x16xf32>
      %c13_157 = arith.constant 13 : index
      %375 = memref.load %arg2[%c13_157] : memref<98xf32, #tpu.memory_space<smem>>
      %376 = vector.extract_strided_slice %369 {offsets = [0, 1, 0], sizes = [2, 16, 16], strides = [1, 1, 1]} : vector<2x22x16xf32> to vector<2x16x16xf32>
      %377 = vector.broadcast %375 : f32 to vector<2x16x16xf32>
      %378 = arith.mulf %377, %376 : vector<2x16x16xf32>
      %379 = arith.addf %374, %378 : vector<2x16x16xf32>
      %c20 = arith.constant 20 : index
      %380 = memref.load %arg2[%c20] : memref<98xf32, #tpu.memory_space<smem>>
      %381 = vector.extract_strided_slice %369 {offsets = [0, 2, 0], sizes = [2, 16, 16], strides = [1, 1, 1]} : vector<2x22x16xf32> to vector<2x16x16xf32>
      %382 = vector.broadcast %380 : f32 to vector<2x16x16xf32>
      %383 = arith.mulf %382, %381 : vector<2x16x16xf32>
      %384 = arith.addf %379, %383 : vector<2x16x16xf32>
      %c27 = arith.constant 27 : index
      %385 = memref.load %arg2[%c27] : memref<98xf32, #tpu.memory_space<smem>>
      %386 = vector.extract_strided_slice %369 {offsets = [0, 3, 0], sizes = [2, 16, 16], strides = [1, 1, 1]} : vector<2x22x16xf32> to vector<2x16x16xf32>
      %387 = vector.broadcast %385 : f32 to vector<2x16x16xf32>
      %388 = arith.mulf %387, %386 : vector<2x16x16xf32>
      %389 = arith.addf %384, %388 : vector<2x16x16xf32>
      %c34 = arith.constant 34 : index
      %390 = memref.load %arg2[%c34] : memref<98xf32, #tpu.memory_space<smem>>
      %391 = vector.extract_strided_slice %369 {offsets = [0, 4, 0], sizes = [2, 16, 16], strides = [1, 1, 1]} : vector<2x22x16xf32> to vector<2x16x16xf32>
      %392 = vector.broadcast %390 : f32 to vector<2x16x16xf32>
      %393 = arith.mulf %392, %391 : vector<2x16x16xf32>
      %394 = arith.addf %389, %393 : vector<2x16x16xf32>
      %c41 = arith.constant 41 : index
      %395 = memref.load %arg2[%c41] : memref<98xf32, #tpu.memory_space<smem>>
      %396 = vector.extract_strided_slice %369 {offsets = [0, 5, 0], sizes = [2, 16, 16], strides = [1, 1, 1]} : vector<2x22x16xf32> to vector<2x16x16xf32>
      %397 = vector.broadcast %395 : f32 to vector<2x16x16xf32>
      %398 = arith.mulf %397, %396 : vector<2x16x16xf32>
      %399 = arith.addf %394, %398 : vector<2x16x16xf32>
      %c48 = arith.constant 48 : index
      %400 = memref.load %arg2[%c48] : memref<98xf32, #tpu.memory_space<smem>>
      %401 = vector.extract_strided_slice %369 {offsets = [0, 6, 0], sizes = [2, 16, 16], strides = [1, 1, 1]} : vector<2x22x16xf32> to vector<2x16x16xf32>
      %402 = vector.broadcast %400 : f32 to vector<2x16x16xf32>
      %403 = arith.mulf %402, %401 : vector<2x16x16xf32>
      %404 = arith.addf %399, %403 : vector<2x16x16xf32>
      %c1_158 = arith.constant 1 : index
      %c0_159 = arith.constant 0 : index
      %c0_160 = arith.constant 0 : index
      %c0_161 = arith.constant 0 : index
      %405 = vector.load %arg8[%c1_158, %c0_159, %c0_160, %c0_161] : memref<2x2x22x22xf32, #tpu.memory_space<vmem>>, vector<1x2x22x22xf32>
      %406 = vector.shape_cast %405 : vector<1x2x22x22xf32> to vector<2x22x22xf32>
      %407 = vector.extract_strided_slice %406 {offsets = [0, 0, 0], sizes = [2, 22, 16], strides = [1, 1, 1]} : vector<2x22x22xf32> to vector<2x22x16xf32>
      %c49 = arith.constant 49 : index
      %408 = memref.load %arg2[%c49] : memref<98xf32, #tpu.memory_space<smem>>
      %409 = vector.extract_strided_slice %407 {offsets = [0, 0, 0], sizes = [2, 16, 16], strides = [1, 1, 1]} : vector<2x22x16xf32> to vector<2x16x16xf32>
      %410 = vector.broadcast %408 : f32 to vector<2x16x16xf32>
      %411 = arith.mulf %410, %409 : vector<2x16x16xf32>
      %412 = arith.addf %404, %411 : vector<2x16x16xf32>
      %c56 = arith.constant 56 : index
      %413 = memref.load %arg2[%c56] : memref<98xf32, #tpu.memory_space<smem>>
      %414 = vector.extract_strided_slice %407 {offsets = [0, 1, 0], sizes = [2, 16, 16], strides = [1, 1, 1]} : vector<2x22x16xf32> to vector<2x16x16xf32>
      %415 = vector.broadcast %413 : f32 to vector<2x16x16xf32>
      %416 = arith.mulf %415, %414 : vector<2x16x16xf32>
      %417 = arith.addf %412, %416 : vector<2x16x16xf32>
      %c63 = arith.constant 63 : index
      %418 = memref.load %arg2[%c63] : memref<98xf32, #tpu.memory_space<smem>>
      %419 = vector.extract_strided_slice %407 {offsets = [0, 2, 0], sizes = [2, 16, 16], strides = [1, 1, 1]} : vector<2x22x16xf32> to vector<2x16x16xf32>
      %420 = vector.broadcast %418 : f32 to vector<2x16x16xf32>
      %421 = arith.mulf %420, %419 : vector<2x16x16xf32>
      %422 = arith.addf %417, %421 : vector<2x16x16xf32>
      %c70 = arith.constant 70 : index
      %423 = memref.load %arg2[%c70] : memref<98xf32, #tpu.memory_space<smem>>
      %424 = vector.extract_strided_slice %407 {offsets = [0, 3, 0], sizes = [2, 16, 16], strides = [1, 1, 1]} : vector<2x22x16xf32> to vector<2x16x16xf32>
      %425 = vector.broadcast %423 : f32 to vector<2x16x16xf32>
      %426 = arith.mulf %425, %424 : vector<2x16x16xf32>
      %427 = arith.addf %422, %426 : vector<2x16x16xf32>
      %c77 = arith.constant 77 : index
      %428 = memref.load %arg2[%c77] : memref<98xf32, #tpu.memory_space<smem>>
      %429 = vector.extract_strided_slice %407 {offsets = [0, 4, 0], sizes = [2, 16, 16], strides = [1, 1, 1]} : vector<2x22x16xf32> to vector<2x16x16xf32>
      %430 = vector.broadcast %428 : f32 to vector<2x16x16xf32>
      %431 = arith.mulf %430, %429 : vector<2x16x16xf32>
      %432 = arith.addf %427, %431 : vector<2x16x16xf32>
      %c84 = arith.constant 84 : index
      %433 = memref.load %arg2[%c84] : memref<98xf32, #tpu.memory_space<smem>>
      %434 = vector.extract_strided_slice %407 {offsets = [0, 5, 0], sizes = [2, 16, 16], strides = [1, 1, 1]} : vector<2x22x16xf32> to vector<2x16x16xf32>
      %435 = vector.broadcast %433 : f32 to vector<2x16x16xf32>
      %436 = arith.mulf %435, %434 : vector<2x16x16xf32>
      %437 = arith.addf %432, %436 : vector<2x16x16xf32>
      %c91 = arith.constant 91 : index
      %438 = memref.load %arg2[%c91] : memref<98xf32, #tpu.memory_space<smem>>
      %439 = vector.extract_strided_slice %407 {offsets = [0, 6, 0], sizes = [2, 16, 16], strides = [1, 1, 1]} : vector<2x22x16xf32> to vector<2x16x16xf32>
      %440 = vector.broadcast %438 : f32 to vector<2x16x16xf32>
      %441 = arith.mulf %440, %439 : vector<2x16x16xf32>
      %442 = arith.addf %437, %441 : vector<2x16x16xf32>
      %443 = vector.extract_strided_slice %406 {offsets = [0, 0, 1], sizes = [2, 22, 16], strides = [1, 1, 1]} : vector<2x22x22xf32> to vector<2x22x16xf32>
      %c50 = arith.constant 50 : index
      %444 = memref.load %arg2[%c50] : memref<98xf32, #tpu.memory_space<smem>>
      %445 = vector.extract_strided_slice %443 {offsets = [0, 0, 0], sizes = [2, 16, 16], strides = [1, 1, 1]} : vector<2x22x16xf32> to vector<2x16x16xf32>
      %446 = vector.broadcast %444 : f32 to vector<2x16x16xf32>
      %447 = arith.mulf %446, %445 : vector<2x16x16xf32>
      %448 = arith.addf %442, %447 : vector<2x16x16xf32>
      %c57 = arith.constant 57 : index
      %449 = memref.load %arg2[%c57] : memref<98xf32, #tpu.memory_space<smem>>
      %450 = vector.extract_strided_slice %443 {offsets = [0, 1, 0], sizes = [2, 16, 16], strides = [1, 1, 1]} : vector<2x22x16xf32> to vector<2x16x16xf32>
      %451 = vector.broadcast %449 : f32 to vector<2x16x16xf32>
      %452 = arith.mulf %451, %450 : vector<2x16x16xf32>
      %453 = arith.addf %448, %452 : vector<2x16x16xf32>
      %c64 = arith.constant 64 : index
      %454 = memref.load %arg2[%c64] : memref<98xf32, #tpu.memory_space<smem>>
      %455 = vector.extract_strided_slice %443 {offsets = [0, 2, 0], sizes = [2, 16, 16], strides = [1, 1, 1]} : vector<2x22x16xf32> to vector<2x16x16xf32>
      %456 = vector.broadcast %454 : f32 to vector<2x16x16xf32>
      %457 = arith.mulf %456, %455 : vector<2x16x16xf32>
      %458 = arith.addf %453, %457 : vector<2x16x16xf32>
      %c71 = arith.constant 71 : index
      %459 = memref.load %arg2[%c71] : memref<98xf32, #tpu.memory_space<smem>>
      %460 = vector.extract_strided_slice %443 {offsets = [0, 3, 0], sizes = [2, 16, 16], strides = [1, 1, 1]} : vector<2x22x16xf32> to vector<2x16x16xf32>
      %461 = vector.broadcast %459 : f32 to vector<2x16x16xf32>
      %462 = arith.mulf %461, %460 : vector<2x16x16xf32>
      %463 = arith.addf %458, %462 : vector<2x16x16xf32>
      %c78 = arith.constant 78 : index
      %464 = memref.load %arg2[%c78] : memref<98xf32, #tpu.memory_space<smem>>
      %465 = vector.extract_strided_slice %443 {offsets = [0, 4, 0], sizes = [2, 16, 16], strides = [1, 1, 1]} : vector<2x22x16xf32> to vector<2x16x16xf32>
      %466 = vector.broadcast %464 : f32 to vector<2x16x16xf32>
      %467 = arith.mulf %466, %465 : vector<2x16x16xf32>
      %468 = arith.addf %463, %467 : vector<2x16x16xf32>
      %c85 = arith.constant 85 : index
      %469 = memref.load %arg2[%c85] : memref<98xf32, #tpu.memory_space<smem>>
      %470 = vector.extract_strided_slice %443 {offsets = [0, 5, 0], sizes = [2, 16, 16], strides = [1, 1, 1]} : vector<2x22x16xf32> to vector<2x16x16xf32>
      %471 = vector.broadcast %469 : f32 to vector<2x16x16xf32>
      %472 = arith.mulf %471, %470 : vector<2x16x16xf32>
      %473 = arith.addf %468, %472 : vector<2x16x16xf32>
      %c92 = arith.constant 92 : index
      %474 = memref.load %arg2[%c92] : memref<98xf32, #tpu.memory_space<smem>>
      %475 = vector.extract_strided_slice %443 {offsets = [0, 6, 0], sizes = [2, 16, 16], strides = [1, 1, 1]} : vector<2x22x16xf32> to vector<2x16x16xf32>
      %476 = vector.broadcast %474 : f32 to vector<2x16x16xf32>
      %477 = arith.mulf %476, %475 : vector<2x16x16xf32>
      %478 = arith.addf %473, %477 : vector<2x16x16xf32>
      %479 = vector.extract_strided_slice %406 {offsets = [0, 0, 2], sizes = [2, 22, 16], strides = [1, 1, 1]} : vector<2x22x22xf32> to vector<2x22x16xf32>
      %c51 = arith.constant 51 : index
      %480 = memref.load %arg2[%c51] : memref<98xf32, #tpu.memory_space<smem>>
      %481 = vector.extract_strided_slice %479 {offsets = [0, 0, 0], sizes = [2, 16, 16], strides = [1, 1, 1]} : vector<2x22x16xf32> to vector<2x16x16xf32>
      %482 = vector.broadcast %480 : f32 to vector<2x16x16xf32>
      %483 = arith.mulf %482, %481 : vector<2x16x16xf32>
      %484 = arith.addf %478, %483 : vector<2x16x16xf32>
      %c58 = arith.constant 58 : index
      %485 = memref.load %arg2[%c58] : memref<98xf32, #tpu.memory_space<smem>>
      %486 = vector.extract_strided_slice %479 {offsets = [0, 1, 0], sizes = [2, 16, 16], strides = [1, 1, 1]} : vector<2x22x16xf32> to vector<2x16x16xf32>
      %487 = vector.broadcast %485 : f32 to vector<2x16x16xf32>
      %488 = arith.mulf %487, %486 : vector<2x16x16xf32>
      %489 = arith.addf %484, %488 : vector<2x16x16xf32>
      %c65 = arith.constant 65 : index
      %490 = memref.load %arg2[%c65] : memref<98xf32, #tpu.memory_space<smem>>
      %491 = vector.extract_strided_slice %479 {offsets = [0, 2, 0], sizes = [2, 16, 16], strides = [1, 1, 1]} : vector<2x22x16xf32> to vector<2x16x16xf32>
      %492 = vector.broadcast %490 : f32 to vector<2x16x16xf32>
      %493 = arith.mulf %492, %491 : vector<2x16x16xf32>
      %494 = arith.addf %489, %493 : vector<2x16x16xf32>
      %c72 = arith.constant 72 : index
      %495 = memref.load %arg2[%c72] : memref<98xf32, #tpu.memory_space<smem>>
      %496 = vector.extract_strided_slice %479 {offsets = [0, 3, 0], sizes = [2, 16, 16], strides = [1, 1, 1]} : vector<2x22x16xf32> to vector<2x16x16xf32>
      %497 = vector.broadcast %495 : f32 to vector<2x16x16xf32>
      %498 = arith.mulf %497, %496 : vector<2x16x16xf32>
      %499 = arith.addf %494, %498 : vector<2x16x16xf32>
      %c79 = arith.constant 79 : index
      %500 = memref.load %arg2[%c79] : memref<98xf32, #tpu.memory_space<smem>>
      %501 = vector.extract_strided_slice %479 {offsets = [0, 4, 0], sizes = [2, 16, 16], strides = [1, 1, 1]} : vector<2x22x16xf32> to vector<2x16x16xf32>
      %502 = vector.broadcast %500 : f32 to vector<2x16x16xf32>
      %503 = arith.mulf %502, %501 : vector<2x16x16xf32>
      %504 = arith.addf %499, %503 : vector<2x16x16xf32>
      %c86 = arith.constant 86 : index
      %505 = memref.load %arg2[%c86] : memref<98xf32, #tpu.memory_space<smem>>
      %506 = vector.extract_strided_slice %479 {offsets = [0, 5, 0], sizes = [2, 16, 16], strides = [1, 1, 1]} : vector<2x22x16xf32> to vector<2x16x16xf32>
      %507 = vector.broadcast %505 : f32 to vector<2x16x16xf32>
      %508 = arith.mulf %507, %506 : vector<2x16x16xf32>
      %509 = arith.addf %504, %508 : vector<2x16x16xf32>
      %c93 = arith.constant 93 : index
      %510 = memref.load %arg2[%c93] : memref<98xf32, #tpu.memory_space<smem>>
      %511 = vector.extract_strided_slice %479 {offsets = [0, 6, 0], sizes = [2, 16, 16], strides = [1, 1, 1]} : vector<2x22x16xf32> to vector<2x16x16xf32>
      %512 = vector.broadcast %510 : f32 to vector<2x16x16xf32>
      %513 = arith.mulf %512, %511 : vector<2x16x16xf32>
      %514 = arith.addf %509, %513 : vector<2x16x16xf32>
      %515 = vector.extract_strided_slice %406 {offsets = [0, 0, 3], sizes = [2, 22, 16], strides = [1, 1, 1]} : vector<2x22x22xf32> to vector<2x22x16xf32>
      %c52 = arith.constant 52 : index
      %516 = memref.load %arg2[%c52] : memref<98xf32, #tpu.memory_space<smem>>
      %517 = vector.extract_strided_slice %515 {offsets = [0, 0, 0], sizes = [2, 16, 16], strides = [1, 1, 1]} : vector<2x22x16xf32> to vector<2x16x16xf32>
      %518 = vector.broadcast %516 : f32 to vector<2x16x16xf32>
      %519 = arith.mulf %518, %517 : vector<2x16x16xf32>
      %520 = arith.addf %514, %519 : vector<2x16x16xf32>
      %c59 = arith.constant 59 : index
      %521 = memref.load %arg2[%c59] : memref<98xf32, #tpu.memory_space<smem>>
      %522 = vector.extract_strided_slice %515 {offsets = [0, 1, 0], sizes = [2, 16, 16], strides = [1, 1, 1]} : vector<2x22x16xf32> to vector<2x16x16xf32>
      %523 = vector.broadcast %521 : f32 to vector<2x16x16xf32>
      %524 = arith.mulf %523, %522 : vector<2x16x16xf32>
      %525 = arith.addf %520, %524 : vector<2x16x16xf32>
      %c66 = arith.constant 66 : index
      %526 = memref.load %arg2[%c66] : memref<98xf32, #tpu.memory_space<smem>>
      %527 = vector.extract_strided_slice %515 {offsets = [0, 2, 0], sizes = [2, 16, 16], strides = [1, 1, 1]} : vector<2x22x16xf32> to vector<2x16x16xf32>
      %528 = vector.broadcast %526 : f32 to vector<2x16x16xf32>
      %529 = arith.mulf %528, %527 : vector<2x16x16xf32>
      %530 = arith.addf %525, %529 : vector<2x16x16xf32>
      %c73 = arith.constant 73 : index
      %531 = memref.load %arg2[%c73] : memref<98xf32, #tpu.memory_space<smem>>
      %532 = vector.extract_strided_slice %515 {offsets = [0, 3, 0], sizes = [2, 16, 16], strides = [1, 1, 1]} : vector<2x22x16xf32> to vector<2x16x16xf32>
      %533 = vector.broadcast %531 : f32 to vector<2x16x16xf32>
      %534 = arith.mulf %533, %532 : vector<2x16x16xf32>
      %535 = arith.addf %530, %534 : vector<2x16x16xf32>
      %c80 = arith.constant 80 : index
      %536 = memref.load %arg2[%c80] : memref<98xf32, #tpu.memory_space<smem>>
      %537 = vector.extract_strided_slice %515 {offsets = [0, 4, 0], sizes = [2, 16, 16], strides = [1, 1, 1]} : vector<2x22x16xf32> to vector<2x16x16xf32>
      %538 = vector.broadcast %536 : f32 to vector<2x16x16xf32>
      %539 = arith.mulf %538, %537 : vector<2x16x16xf32>
      %540 = arith.addf %535, %539 : vector<2x16x16xf32>
      %c87 = arith.constant 87 : index
      %541 = memref.load %arg2[%c87] : memref<98xf32, #tpu.memory_space<smem>>
      %542 = vector.extract_strided_slice %515 {offsets = [0, 5, 0], sizes = [2, 16, 16], strides = [1, 1, 1]} : vector<2x22x16xf32> to vector<2x16x16xf32>
      %543 = vector.broadcast %541 : f32 to vector<2x16x16xf32>
      %544 = arith.mulf %543, %542 : vector<2x16x16xf32>
      %545 = arith.addf %540, %544 : vector<2x16x16xf32>
      %c94 = arith.constant 94 : index
      %546 = memref.load %arg2[%c94] : memref<98xf32, #tpu.memory_space<smem>>
      %547 = vector.extract_strided_slice %515 {offsets = [0, 6, 0], sizes = [2, 16, 16], strides = [1, 1, 1]} : vector<2x22x16xf32> to vector<2x16x16xf32>
      %548 = vector.broadcast %546 : f32 to vector<2x16x16xf32>
      %549 = arith.mulf %548, %547 : vector<2x16x16xf32>
      %550 = arith.addf %545, %549 : vector<2x16x16xf32>
      %551 = vector.extract_strided_slice %406 {offsets = [0, 0, 4], sizes = [2, 22, 16], strides = [1, 1, 1]} : vector<2x22x22xf32> to vector<2x22x16xf32>
      %c53 = arith.constant 53 : index
      %552 = memref.load %arg2[%c53] : memref<98xf32, #tpu.memory_space<smem>>
      %553 = vector.extract_strided_slice %551 {offsets = [0, 0, 0], sizes = [2, 16, 16], strides = [1, 1, 1]} : vector<2x22x16xf32> to vector<2x16x16xf32>
      %554 = vector.broadcast %552 : f32 to vector<2x16x16xf32>
      %555 = arith.mulf %554, %553 : vector<2x16x16xf32>
      %556 = arith.addf %550, %555 : vector<2x16x16xf32>
      %c60 = arith.constant 60 : index
      %557 = memref.load %arg2[%c60] : memref<98xf32, #tpu.memory_space<smem>>
      %558 = vector.extract_strided_slice %551 {offsets = [0, 1, 0], sizes = [2, 16, 16], strides = [1, 1, 1]} : vector<2x22x16xf32> to vector<2x16x16xf32>
      %559 = vector.broadcast %557 : f32 to vector<2x16x16xf32>
      %560 = arith.mulf %559, %558 : vector<2x16x16xf32>
      %561 = arith.addf %556, %560 : vector<2x16x16xf32>
      %c67 = arith.constant 67 : index
      %562 = memref.load %arg2[%c67] : memref<98xf32, #tpu.memory_space<smem>>
      %563 = vector.extract_strided_slice %551 {offsets = [0, 2, 0], sizes = [2, 16, 16], strides = [1, 1, 1]} : vector<2x22x16xf32> to vector<2x16x16xf32>
      %564 = vector.broadcast %562 : f32 to vector<2x16x16xf32>
      %565 = arith.mulf %564, %563 : vector<2x16x16xf32>
      %566 = arith.addf %561, %565 : vector<2x16x16xf32>
      %c74 = arith.constant 74 : index
      %567 = memref.load %arg2[%c74] : memref<98xf32, #tpu.memory_space<smem>>
      %568 = vector.extract_strided_slice %551 {offsets = [0, 3, 0], sizes = [2, 16, 16], strides = [1, 1, 1]} : vector<2x22x16xf32> to vector<2x16x16xf32>
      %569 = vector.broadcast %567 : f32 to vector<2x16x16xf32>
      %570 = arith.mulf %569, %568 : vector<2x16x16xf32>
      %571 = arith.addf %566, %570 : vector<2x16x16xf32>
      %c81 = arith.constant 81 : index
      %572 = memref.load %arg2[%c81] : memref<98xf32, #tpu.memory_space<smem>>
      %573 = vector.extract_strided_slice %551 {offsets = [0, 4, 0], sizes = [2, 16, 16], strides = [1, 1, 1]} : vector<2x22x16xf32> to vector<2x16x16xf32>
      %574 = vector.broadcast %572 : f32 to vector<2x16x16xf32>
      %575 = arith.mulf %574, %573 : vector<2x16x16xf32>
      %576 = arith.addf %571, %575 : vector<2x16x16xf32>
      %c88 = arith.constant 88 : index
      %577 = memref.load %arg2[%c88] : memref<98xf32, #tpu.memory_space<smem>>
      %578 = vector.extract_strided_slice %551 {offsets = [0, 5, 0], sizes = [2, 16, 16], strides = [1, 1, 1]} : vector<2x22x16xf32> to vector<2x16x16xf32>
      %579 = vector.broadcast %577 : f32 to vector<2x16x16xf32>
      %580 = arith.mulf %579, %578 : vector<2x16x16xf32>
      %581 = arith.addf %576, %580 : vector<2x16x16xf32>
      %c95 = arith.constant 95 : index
      %582 = memref.load %arg2[%c95] : memref<98xf32, #tpu.memory_space<smem>>
      %583 = vector.extract_strided_slice %551 {offsets = [0, 6, 0], sizes = [2, 16, 16], strides = [1, 1, 1]} : vector<2x22x16xf32> to vector<2x16x16xf32>
      %584 = vector.broadcast %582 : f32 to vector<2x16x16xf32>
      %585 = arith.mulf %584, %583 : vector<2x16x16xf32>
      %586 = arith.addf %581, %585 : vector<2x16x16xf32>
      %587 = vector.extract_strided_slice %406 {offsets = [0, 0, 5], sizes = [2, 22, 16], strides = [1, 1, 1]} : vector<2x22x22xf32> to vector<2x22x16xf32>
      %c54 = arith.constant 54 : index
      %588 = memref.load %arg2[%c54] : memref<98xf32, #tpu.memory_space<smem>>
      %589 = vector.extract_strided_slice %587 {offsets = [0, 0, 0], sizes = [2, 16, 16], strides = [1, 1, 1]} : vector<2x22x16xf32> to vector<2x16x16xf32>
      %590 = vector.broadcast %588 : f32 to vector<2x16x16xf32>
      %591 = arith.mulf %590, %589 : vector<2x16x16xf32>
      %592 = arith.addf %586, %591 : vector<2x16x16xf32>
      %c61 = arith.constant 61 : index
      %593 = memref.load %arg2[%c61] : memref<98xf32, #tpu.memory_space<smem>>
      %594 = vector.extract_strided_slice %587 {offsets = [0, 1, 0], sizes = [2, 16, 16], strides = [1, 1, 1]} : vector<2x22x16xf32> to vector<2x16x16xf32>
      %595 = vector.broadcast %593 : f32 to vector<2x16x16xf32>
      %596 = arith.mulf %595, %594 : vector<2x16x16xf32>
      %597 = arith.addf %592, %596 : vector<2x16x16xf32>
      %c68 = arith.constant 68 : index
      %598 = memref.load %arg2[%c68] : memref<98xf32, #tpu.memory_space<smem>>
      %599 = vector.extract_strided_slice %587 {offsets = [0, 2, 0], sizes = [2, 16, 16], strides = [1, 1, 1]} : vector<2x22x16xf32> to vector<2x16x16xf32>
      %600 = vector.broadcast %598 : f32 to vector<2x16x16xf32>
      %601 = arith.mulf %600, %599 : vector<2x16x16xf32>
      %602 = arith.addf %597, %601 : vector<2x16x16xf32>
      %c75 = arith.constant 75 : index
      %603 = memref.load %arg2[%c75] : memref<98xf32, #tpu.memory_space<smem>>
      %604 = vector.extract_strided_slice %587 {offsets = [0, 3, 0], sizes = [2, 16, 16], strides = [1, 1, 1]} : vector<2x22x16xf32> to vector<2x16x16xf32>
      %605 = vector.broadcast %603 : f32 to vector<2x16x16xf32>
      %606 = arith.mulf %605, %604 : vector<2x16x16xf32>
      %607 = arith.addf %602, %606 : vector<2x16x16xf32>
      %c82 = arith.constant 82 : index
      %608 = memref.load %arg2[%c82] : memref<98xf32, #tpu.memory_space<smem>>
      %609 = vector.extract_strided_slice %587 {offsets = [0, 4, 0], sizes = [2, 16, 16], strides = [1, 1, 1]} : vector<2x22x16xf32> to vector<2x16x16xf32>
      %610 = vector.broadcast %608 : f32 to vector<2x16x16xf32>
      %611 = arith.mulf %610, %609 : vector<2x16x16xf32>
      %612 = arith.addf %607, %611 : vector<2x16x16xf32>
      %c89 = arith.constant 89 : index
      %613 = memref.load %arg2[%c89] : memref<98xf32, #tpu.memory_space<smem>>
      %614 = vector.extract_strided_slice %587 {offsets = [0, 5, 0], sizes = [2, 16, 16], strides = [1, 1, 1]} : vector<2x22x16xf32> to vector<2x16x16xf32>
      %615 = vector.broadcast %613 : f32 to vector<2x16x16xf32>
      %616 = arith.mulf %615, %614 : vector<2x16x16xf32>
      %617 = arith.addf %612, %616 : vector<2x16x16xf32>
      %c96 = arith.constant 96 : index
      %618 = memref.load %arg2[%c96] : memref<98xf32, #tpu.memory_space<smem>>
      %619 = vector.extract_strided_slice %587 {offsets = [0, 6, 0], sizes = [2, 16, 16], strides = [1, 1, 1]} : vector<2x22x16xf32> to vector<2x16x16xf32>
      %620 = vector.broadcast %618 : f32 to vector<2x16x16xf32>
      %621 = arith.mulf %620, %619 : vector<2x16x16xf32>
      %622 = arith.addf %617, %621 : vector<2x16x16xf32>
      %623 = vector.extract_strided_slice %406 {offsets = [0, 0, 6], sizes = [2, 22, 16], strides = [1, 1, 1]} : vector<2x22x22xf32> to vector<2x22x16xf32>
      %c55 = arith.constant 55 : index
      %624 = memref.load %arg2[%c55] : memref<98xf32, #tpu.memory_space<smem>>
      %625 = vector.extract_strided_slice %623 {offsets = [0, 0, 0], sizes = [2, 16, 16], strides = [1, 1, 1]} : vector<2x22x16xf32> to vector<2x16x16xf32>
      %626 = vector.broadcast %624 : f32 to vector<2x16x16xf32>
      %627 = arith.mulf %626, %625 : vector<2x16x16xf32>
      %628 = arith.addf %622, %627 : vector<2x16x16xf32>
      %c62 = arith.constant 62 : index
      %629 = memref.load %arg2[%c62] : memref<98xf32, #tpu.memory_space<smem>>
      %630 = vector.extract_strided_slice %623 {offsets = [0, 1, 0], sizes = [2, 16, 16], strides = [1, 1, 1]} : vector<2x22x16xf32> to vector<2x16x16xf32>
      %631 = vector.broadcast %629 : f32 to vector<2x16x16xf32>
      %632 = arith.mulf %631, %630 : vector<2x16x16xf32>
      %633 = arith.addf %628, %632 : vector<2x16x16xf32>
      %c69 = arith.constant 69 : index
      %634 = memref.load %arg2[%c69] : memref<98xf32, #tpu.memory_space<smem>>
      %635 = vector.extract_strided_slice %623 {offsets = [0, 2, 0], sizes = [2, 16, 16], strides = [1, 1, 1]} : vector<2x22x16xf32> to vector<2x16x16xf32>
      %636 = vector.broadcast %634 : f32 to vector<2x16x16xf32>
      %637 = arith.mulf %636, %635 : vector<2x16x16xf32>
      %638 = arith.addf %633, %637 : vector<2x16x16xf32>
      %c76 = arith.constant 76 : index
      %639 = memref.load %arg2[%c76] : memref<98xf32, #tpu.memory_space<smem>>
      %640 = vector.extract_strided_slice %623 {offsets = [0, 3, 0], sizes = [2, 16, 16], strides = [1, 1, 1]} : vector<2x22x16xf32> to vector<2x16x16xf32>
      %641 = vector.broadcast %639 : f32 to vector<2x16x16xf32>
      %642 = arith.mulf %641, %640 : vector<2x16x16xf32>
      %643 = arith.addf %638, %642 : vector<2x16x16xf32>
      %c83 = arith.constant 83 : index
      %644 = memref.load %arg2[%c83] : memref<98xf32, #tpu.memory_space<smem>>
      %645 = vector.extract_strided_slice %623 {offsets = [0, 4, 0], sizes = [2, 16, 16], strides = [1, 1, 1]} : vector<2x22x16xf32> to vector<2x16x16xf32>
      %646 = vector.broadcast %644 : f32 to vector<2x16x16xf32>
      %647 = arith.mulf %646, %645 : vector<2x16x16xf32>
      %648 = arith.addf %643, %647 : vector<2x16x16xf32>
      %c90 = arith.constant 90 : index
      %649 = memref.load %arg2[%c90] : memref<98xf32, #tpu.memory_space<smem>>
      %650 = vector.extract_strided_slice %623 {offsets = [0, 5, 0], sizes = [2, 16, 16], strides = [1, 1, 1]} : vector<2x22x16xf32> to vector<2x16x16xf32>
      %651 = vector.broadcast %649 : f32 to vector<2x16x16xf32>
      %652 = arith.mulf %651, %650 : vector<2x16x16xf32>
      %653 = arith.addf %648, %652 : vector<2x16x16xf32>
      %c97 = arith.constant 97 : index
      %654 = memref.load %arg2[%c97] : memref<98xf32, #tpu.memory_space<smem>>
      %655 = vector.extract_strided_slice %623 {offsets = [0, 6, 0], sizes = [2, 16, 16], strides = [1, 1, 1]} : vector<2x22x16xf32> to vector<2x16x16xf32>
      %656 = vector.broadcast %654 : f32 to vector<2x16x16xf32>
      %657 = arith.mulf %656, %655 : vector<2x16x16xf32>
      %658 = arith.addf %653, %657 : vector<2x16x16xf32>
      %659 = arith.negf %658 : vector<2x16x16xf32>
      %660 = math.exp %659 : vector<2x16x16xf32>
      %cst_162 = arith.constant 1.000000e+00 : f32
      %661 = vector.broadcast %cst_162 : f32 to vector<2x16x16xf32>
      %662 = arith.addf %661, %660 : vector<2x16x16xf32>
      %663 = arith.divf %661, %662 : vector<2x16x16xf32>
      %664 = vector.extract_strided_slice %663 {offsets = [0, 0, 0], sizes = [2, 1, 16], strides = [1, 1, 1]} : vector<2x16x16xf32> to vector<2x1x16xf32>
      %665 = vector.shape_cast %664 : vector<2x1x16xf32> to vector<2x16xf32>
      %c0_163 = arith.constant 0 : index
      %c0_164 = arith.constant 0 : index
      %c0_165 = arith.constant 0 : index
      %666 = vector.load %arg5[%c0_163, %c0_164, %c0_165] : memref<2x1x256xf32, #tpu.memory_space<vmem>>, vector<2x1x16xf32>
      %667 = vector.shape_cast %666 : vector<2x1x16xf32> to vector<2x16xf32>
      %668 = vector.shape_cast %665 : vector<2x16xf32> to vector<2x1x16xf32>
      tpu.vector_store %arg5[%c0_163, %c0_164, %c0_165], %668 {strides = array<i32>} : memref<2x1x256xf32, #tpu.memory_space<vmem>>, vector<2x1x16xf32>,
      %669 = vector.extract_strided_slice %663 {offsets = [0, 1, 0], sizes = [2, 1, 16], strides = [1, 1, 1]} : vector<2x16x16xf32> to vector<2x1x16xf32>
      %670 = vector.shape_cast %669 : vector<2x1x16xf32> to vector<2x16xf32>
      %c0_166 = arith.constant 0 : index
      %c0_167 = arith.constant 0 : index
      %c16_168 = arith.constant 16 : index
      %671 = vector.load %arg5[%c0_166, %c0_167, %c16_168] : memref<2x1x256xf32, #tpu.memory_space<vmem>>, vector<2x1x16xf32>
      %672 = vector.shape_cast %671 : vector<2x1x16xf32> to vector<2x16xf32>
      %673 = vector.shape_cast %670 : vector<2x16xf32> to vector<2x1x16xf32>
      tpu.vector_store %arg5[%c0_166, %c0_167, %c16_168], %673 {strides = array<i32>} : memref<2x1x256xf32, #tpu.memory_space<vmem>>, vector<2x1x16xf32>,
      %674 = vector.extract_strided_slice %663 {offsets = [0, 2, 0], sizes = [2, 1, 16], strides = [1, 1, 1]} : vector<2x16x16xf32> to vector<2x1x16xf32>
      %675 = vector.shape_cast %674 : vector<2x1x16xf32> to vector<2x16xf32>
      %c0_169 = arith.constant 0 : index
      %c0_170 = arith.constant 0 : index
      %c32_171 = arith.constant 32 : index
      %676 = vector.load %arg5[%c0_169, %c0_170, %c32_171] : memref<2x1x256xf32, #tpu.memory_space<vmem>>, vector<2x1x16xf32>
      %677 = vector.shape_cast %676 : vector<2x1x16xf32> to vector<2x16xf32>
      %678 = vector.shape_cast %675 : vector<2x16xf32> to vector<2x1x16xf32>
      tpu.vector_store %arg5[%c0_169, %c0_170, %c32_171], %678 {strides = array<i32>} : memref<2x1x256xf32, #tpu.memory_space<vmem>>, vector<2x1x16xf32>,
      %679 = vector.extract_strided_slice %663 {offsets = [0, 3, 0], sizes = [2, 1, 16], strides = [1, 1, 1]} : vector<2x16x16xf32> to vector<2x1x16xf32>
      %680 = vector.shape_cast %679 : vector<2x1x16xf32> to vector<2x16xf32>
      %c0_172 = arith.constant 0 : index
      %c0_173 = arith.constant 0 : index
      %c48_174 = arith.constant 48 : index
      %681 = vector.load %arg5[%c0_172, %c0_173, %c48_174] : memref<2x1x256xf32, #tpu.memory_space<vmem>>, vector<2x1x16xf32>
      %682 = vector.shape_cast %681 : vector<2x1x16xf32> to vector<2x16xf32>
      %683 = vector.shape_cast %680 : vector<2x16xf32> to vector<2x1x16xf32>
      tpu.vector_store %arg5[%c0_172, %c0_173, %c48_174], %683 {strides = array<i32>} : memref<2x1x256xf32, #tpu.memory_space<vmem>>, vector<2x1x16xf32>,
      %684 = vector.extract_strided_slice %663 {offsets = [0, 4, 0], sizes = [2, 1, 16], strides = [1, 1, 1]} : vector<2x16x16xf32> to vector<2x1x16xf32>
      %685 = vector.shape_cast %684 : vector<2x1x16xf32> to vector<2x16xf32>
      %c0_175 = arith.constant 0 : index
      %c0_176 = arith.constant 0 : index
      %c64_177 = arith.constant 64 : index
      %686 = vector.load %arg5[%c0_175, %c0_176, %c64_177] : memref<2x1x256xf32, #tpu.memory_space<vmem>>, vector<2x1x16xf32>
      %687 = vector.shape_cast %686 : vector<2x1x16xf32> to vector<2x16xf32>
      %688 = vector.shape_cast %685 : vector<2x16xf32> to vector<2x1x16xf32>
      tpu.vector_store %arg5[%c0_175, %c0_176, %c64_177], %688 {strides = array<i32>} : memref<2x1x256xf32, #tpu.memory_space<vmem>>, vector<2x1x16xf32>,
      %689 = vector.extract_strided_slice %663 {offsets = [0, 5, 0], sizes = [2, 1, 16], strides = [1, 1, 1]} : vector<2x16x16xf32> to vector<2x1x16xf32>
      %690 = vector.shape_cast %689 : vector<2x1x16xf32> to vector<2x16xf32>
      %c0_178 = arith.constant 0 : index
      %c0_179 = arith.constant 0 : index
      %c80_180 = arith.constant 80 : index
      %691 = vector.load %arg5[%c0_178, %c0_179, %c80_180] : memref<2x1x256xf32, #tpu.memory_space<vmem>>, vector<2x1x16xf32>
      %692 = vector.shape_cast %691 : vector<2x1x16xf32> to vector<2x16xf32>
      %693 = vector.shape_cast %690 : vector<2x16xf32> to vector<2x1x16xf32>
      tpu.vector_store %arg5[%c0_178, %c0_179, %c80_180], %693 {strides = array<i32>} : memref<2x1x256xf32, #tpu.memory_space<vmem>>, vector<2x1x16xf32>,
      %694 = vector.extract_strided_slice %663 {offsets = [0, 6, 0], sizes = [2, 1, 16], strides = [1, 1, 1]} : vector<2x16x16xf32> to vector<2x1x16xf32>
      %695 = vector.shape_cast %694 : vector<2x1x16xf32> to vector<2x16xf32>
      %c0_181 = arith.constant 0 : index
      %c0_182 = arith.constant 0 : index
      %c96_183 = arith.constant 96 : index
      %696 = vector.load %arg5[%c0_181, %c0_182, %c96_183] : memref<2x1x256xf32, #tpu.memory_space<vmem>>, vector<2x1x16xf32>
      %697 = vector.shape_cast %696 : vector<2x1x16xf32> to vector<2x16xf32>
      %698 = vector.shape_cast %695 : vector<2x16xf32> to vector<2x1x16xf32>
      tpu.vector_store %arg5[%c0_181, %c0_182, %c96_183], %698 {strides = array<i32>} : memref<2x1x256xf32, #tpu.memory_space<vmem>>, vector<2x1x16xf32>,
      %699 = vector.extract_strided_slice %663 {offsets = [0, 7, 0], sizes = [2, 1, 16], strides = [1, 1, 1]} : vector<2x16x16xf32> to vector<2x1x16xf32>
      %700 = vector.shape_cast %699 : vector<2x1x16xf32> to vector<2x16xf32>
      %c0_184 = arith.constant 0 : index
      %c0_185 = arith.constant 0 : index
      %c112 = arith.constant 112 : index
      %701 = vector.load %arg5[%c0_184, %c0_185, %c112] : memref<2x1x256xf32, #tpu.memory_space<vmem>>, vector<2x1x16xf32>
      %702 = vector.shape_cast %701 : vector<2x1x16xf32> to vector<2x16xf32>
      %703 = vector.shape_cast %700 : vector<2x16xf32> to vector<2x1x16xf32>
      tpu.vector_store %arg5[%c0_184, %c0_185, %c112], %703 {strides = array<i32>} : memref<2x1x256xf32, #tpu.memory_space<vmem>>, vector<2x1x16xf32>,
      %704 = vector.extract_strided_slice %663 {offsets = [0, 8, 0], sizes = [2, 1, 16], strides = [1, 1, 1]} : vector<2x16x16xf32> to vector<2x1x16xf32>
      %705 = vector.shape_cast %704 : vector<2x1x16xf32> to vector<2x16xf32>
      %c0_186 = arith.constant 0 : index
      %c0_187 = arith.constant 0 : index
      %c128 = arith.constant 128 : index
      %706 = vector.load %arg5[%c0_186, %c0_187, %c128] : memref<2x1x256xf32, #tpu.memory_space<vmem>>, vector<2x1x16xf32>
      %707 = vector.shape_cast %706 : vector<2x1x16xf32> to vector<2x16xf32>
      %708 = vector.shape_cast %705 : vector<2x16xf32> to vector<2x1x16xf32>
      tpu.vector_store %arg5[%c0_186, %c0_187, %c128], %708 {strides = array<i32>} : memref<2x1x256xf32, #tpu.memory_space<vmem>>, vector<2x1x16xf32>,
      %709 = vector.extract_strided_slice %663 {offsets = [0, 9, 0], sizes = [2, 1, 16], strides = [1, 1, 1]} : vector<2x16x16xf32> to vector<2x1x16xf32>
      %710 = vector.shape_cast %709 : vector<2x1x16xf32> to vector<2x16xf32>
      %c0_188 = arith.constant 0 : index
      %c0_189 = arith.constant 0 : index
      %c144 = arith.constant 144 : index
      %711 = vector.load %arg5[%c0_188, %c0_189, %c144] : memref<2x1x256xf32, #tpu.memory_space<vmem>>, vector<2x1x16xf32>
      %712 = vector.shape_cast %711 : vector<2x1x16xf32> to vector<2x16xf32>
      %713 = vector.shape_cast %710 : vector<2x16xf32> to vector<2x1x16xf32>
      tpu.vector_store %arg5[%c0_188, %c0_189, %c144], %713 {strides = array<i32>} : memref<2x1x256xf32, #tpu.memory_space<vmem>>, vector<2x1x16xf32>,
      %714 = vector.extract_strided_slice %663 {offsets = [0, 10, 0], sizes = [2, 1, 16], strides = [1, 1, 1]} : vector<2x16x16xf32> to vector<2x1x16xf32>
      %715 = vector.shape_cast %714 : vector<2x1x16xf32> to vector<2x16xf32>
      %c0_190 = arith.constant 0 : index
      %c0_191 = arith.constant 0 : index
      %c160 = arith.constant 160 : index
      %716 = vector.load %arg5[%c0_190, %c0_191, %c160] : memref<2x1x256xf32, #tpu.memory_space<vmem>>, vector<2x1x16xf32>
      %717 = vector.shape_cast %716 : vector<2x1x16xf32> to vector<2x16xf32>
      %718 = vector.shape_cast %715 : vector<2x16xf32> to vector<2x1x16xf32>
      tpu.vector_store %arg5[%c0_190, %c0_191, %c160], %718 {strides = array<i32>} : memref<2x1x256xf32, #tpu.memory_space<vmem>>, vector<2x1x16xf32>,
      %719 = vector.extract_strided_slice %663 {offsets = [0, 11, 0], sizes = [2, 1, 16], strides = [1, 1, 1]} : vector<2x16x16xf32> to vector<2x1x16xf32>
      %720 = vector.shape_cast %719 : vector<2x1x16xf32> to vector<2x16xf32>
      %c0_192 = arith.constant 0 : index
      %c0_193 = arith.constant 0 : index
      %c176 = arith.constant 176 : index
      %721 = vector.load %arg5[%c0_192, %c0_193, %c176] : memref<2x1x256xf32, #tpu.memory_space<vmem>>, vector<2x1x16xf32>
      %722 = vector.shape_cast %721 : vector<2x1x16xf32> to vector<2x16xf32>
      %723 = vector.shape_cast %720 : vector<2x16xf32> to vector<2x1x16xf32>
      tpu.vector_store %arg5[%c0_192, %c0_193, %c176], %723 {strides = array<i32>} : memref<2x1x256xf32, #tpu.memory_space<vmem>>, vector<2x1x16xf32>,
      %724 = vector.extract_strided_slice %663 {offsets = [0, 12, 0], sizes = [2, 1, 16], strides = [1, 1, 1]} : vector<2x16x16xf32> to vector<2x1x16xf32>
      %725 = vector.shape_cast %724 : vector<2x1x16xf32> to vector<2x16xf32>
      %c0_194 = arith.constant 0 : index
      %c0_195 = arith.constant 0 : index
      %c192 = arith.constant 192 : index
      %726 = vector.load %arg5[%c0_194, %c0_195, %c192] : memref<2x1x256xf32, #tpu.memory_space<vmem>>, vector<2x1x16xf32>
      %727 = vector.shape_cast %726 : vector<2x1x16xf32> to vector<2x16xf32>
      %728 = vector.shape_cast %725 : vector<2x16xf32> to vector<2x1x16xf32>
      tpu.vector_store %arg5[%c0_194, %c0_195, %c192], %728 {strides = array<i32>} : memref<2x1x256xf32, #tpu.memory_space<vmem>>, vector<2x1x16xf32>,
      %729 = vector.extract_strided_slice %663 {offsets = [0, 13, 0], sizes = [2, 1, 16], strides = [1, 1, 1]} : vector<2x16x16xf32> to vector<2x1x16xf32>
      %730 = vector.shape_cast %729 : vector<2x1x16xf32> to vector<2x16xf32>
      %c0_196 = arith.constant 0 : index
      %c0_197 = arith.constant 0 : index
      %c208 = arith.constant 208 : index
      %731 = vector.load %arg5[%c0_196, %c0_197, %c208] : memref<2x1x256xf32, #tpu.memory_space<vmem>>, vector<2x1x16xf32>
      %732 = vector.shape_cast %731 : vector<2x1x16xf32> to vector<2x16xf32>
      %733 = vector.shape_cast %730 : vector<2x16xf32> to vector<2x1x16xf32>
      tpu.vector_store %arg5[%c0_196, %c0_197, %c208], %733 {strides = array<i32>} : memref<2x1x256xf32, #tpu.memory_space<vmem>>, vector<2x1x16xf32>,
      %734 = vector.extract_strided_slice %663 {offsets = [0, 14, 0], sizes = [2, 1, 16], strides = [1, 1, 1]} : vector<2x16x16xf32> to vector<2x1x16xf32>
      %735 = vector.shape_cast %734 : vector<2x1x16xf32> to vector<2x16xf32>
      %c0_198 = arith.constant 0 : index
      %c0_199 = arith.constant 0 : index
      %c224 = arith.constant 224 : index
      %736 = vector.load %arg5[%c0_198, %c0_199, %c224] : memref<2x1x256xf32, #tpu.memory_space<vmem>>, vector<2x1x16xf32>
      %737 = vector.shape_cast %736 : vector<2x1x16xf32> to vector<2x16xf32>
      %738 = vector.shape_cast %735 : vector<2x16xf32> to vector<2x1x16xf32>
      tpu.vector_store %arg5[%c0_198, %c0_199, %c224], %738 {strides = array<i32>} : memref<2x1x256xf32, #tpu.memory_space<vmem>>, vector<2x1x16xf32>,
      %739 = vector.extract_strided_slice %663 {offsets = [0, 15, 0], sizes = [2, 1, 16], strides = [1, 1, 1]} : vector<2x16x16xf32> to vector<2x1x16xf32>
      %740 = vector.shape_cast %739 : vector<2x1x16xf32> to vector<2x16xf32>
      %c0_200 = arith.constant 0 : index
      %c0_201 = arith.constant 0 : index
      %c240 = arith.constant 240 : index
      %741 = vector.load %arg5[%c0_200, %c0_201, %c240] : memref<2x1x256xf32, #tpu.memory_space<vmem>>, vector<2x1x16xf32>
      %742 = vector.shape_cast %741 : vector<2x1x16xf32> to vector<2x16xf32>
      %743 = vector.shape_cast %740 : vector<2x16xf32> to vector<2x1x16xf32>
      tpu.vector_store %arg5[%c0_200, %c0_201, %c240], %743 {strides = array<i32>} : memref<2x1x256xf32, #tpu.memory_space<vmem>>, vector<2x1x16xf32>,
    } else {
    }
    return
  }
  func.func @transform_0(%arg0: i32, %arg1: i32) -> i32 {
    %c0_i32 = arith.constant 0 : i32
    %c0_i32_0 = arith.constant 0 : i32
    return %c0_i32 : i32
  }
  func.func @transform_1(%arg0: i32, %arg1: i32) -> i32 {
    %c0_i32 = arith.constant 0 : i32
    %c0_i32_0 = arith.constant 0 : i32
    return %c0_i32 : i32
  }
  func.func @transform_2(%arg0: i32, %arg1: i32) -> (i32, i32, i32) {
    %c0_i32 = arith.constant 0 : i32
    %c0_i32_0 = arith.constant 0 : i32
    return %arg0, %arg1, %c0_i32 : i32, i32, i32
  }
  func.func @transform_3(%arg0: i32, %arg1: i32) -> (i32, i32, i32) {
    %c0_i32 = arith.constant 0 : i32
    %c0_i32_0 = arith.constant 0 : i32
    %c0_i32_1 = arith.constant 0 : i32
    return %arg0, %c0_i32, %c0_i32_0 : i32, i32, i32
  }
}

</mosaic_0001>

<llo_original>
// kernel: tpu_custom_call.1
$region0: #{tpu_custom_call.1}
  #allocation0 [shape = 'u32[]', space=smem, size = 0x4, offset = 0x4, fixed_abs, tag = 'smem constant byte address 0x4 - core index']
  #allocation1 [shape = 'u32[72,128]{1,0:T(1,128)}', space=vmem, size = 0x9000, scoped, tag = 'internal scratch']
  #allocation2 [shape = 'f32[2,256]{1,0:T(2,128)}', space=vmem, size = 0x800, scoped, tag = 'scratch operand']
  #allocation3 [shape = 'f32[2,256]{1,0:T(2,128)}', space=vmem, size = 0x800, scoped, tag = 'scratch operand']
  #allocation4 [shape = 'f32[2,2,22,22]{3,2,1,0:T(8,128)}', space=vmem, size = 0xc000, scoped, tag = 'scratch operand']
  #allocation5 [shape = 'f32[1]{0:T(128)S(6)}', space=smem, size = 0x200, scoped, tag = 'scoped memory for tpu_custom_call.1']
  %s0 = inlined_call_operand.vmem [shape: f32[98], index: 0, kind: input, shape index: {}]
  %s1 = inlined_call_operand.<no memory space> [shape: f32[1], index: 1, kind: input, shape index: {}]
  %s2 = inlined_call_operand.hbm [shape: f32[2,4,256], index: 2, kind: input, shape index: {}]
  %s3 = inlined_call_operand.hbm [shape: f32[2,1,256], index: 3, kind: output, shape index: {}]
  %s4 = sld [smem:[#allocation0]]
  $region38: #{tpu_custom_call.1} parent=0
    _
  %s6 = ssub.s32 1, %s4
  %s7 = scalar_select 0, %s6, %s4
  %8 = sst [smem:[#allocation5]] %s1
  $region1: #{tpu_custom_call.1} parent=0
    #allocation6 [shape = 'u8[512]{0}', space=smem, size = 0x200, scoped, tag = 'input window, operand 0, single buffered']
    #allocation7 [shape = 's32[1]{0}', space=sflag, size = 0x4, scoped, tag = 'scoped memory for tpu_custom_call.1']
    #allocation8 [shape = 's32[1]{0}', space=sflag, size = 0x4, scoped, tag = 'scoped memory for tpu_custom_call.1']
    #allocation9 [shape = 's32[1]{0}', space=sflag, size = 0x4, scoped, tag = 'scoped memory for tpu_custom_call.1']
    #allocation10 [shape = 'u8[8192]{0}', space=vmem, size = 0x2000, scoped, tag = 'input window, operand 2, single buffered']
    #allocation11 [shape = 'u8[2048]{0}', space=vmem, size = 0x800, scoped, tag = 'output window, operand 0, single buffered']
    %9 = vsyncpa [#allocation9], 0
    %10 = vsyncpa [#allocation7], 0
    %11 = vsyncpa [#allocation8], 0
    // Predicated region
    $region2: #{tpu_custom_call.1} parent=1 // pred_check
      _
    $region3: #{tpu_custom_call.1} parent=1 // pred_check_branch
      %13 = sbr.rel (0) target = $region5
    $region4: #{tpu_custom_call.1} parent=1 // pred_region
      %15 = vsyncadd [#allocation9], 0
      %s17 = sshll.u32 %s0, 4
      %s18 = int_to_ptr.vmem [resolvable:$true] %s17
      %20 = dma.vmem_to_smem %s18, 16, [#allocation6], [#allocation9]
    $region5: #{tpu_custom_call.1} parent=1 // pred_fallthru
      _
    // Predicated region
    $region6: #{tpu_custom_call.1} parent=1 // pred_check
      _
    $region7: #{tpu_custom_call.1} parent=1 // pred_check_branch
      %22 = sbr.rel (0) target = $region9
    $region8: #{tpu_custom_call.1} parent=1 // pred_region
      _
    $region9: #{tpu_custom_call.1} parent=1 // pred_fallthru
      _
    // Predicated region
    $region10: #{tpu_custom_call.1} parent=1 // pred_check
      _
    $region11: #{tpu_custom_call.1} parent=1 // pred_check_branch
      %24 = sbr.rel (0) target = $region13
    $region12: #{tpu_custom_call.1} parent=1 // pred_region
      %26 = vsyncadd [#allocation7], 0
      %s27 = sshll.u32 %s2, 4
      %s28 = int_to_ptr.hbm [resolvable:$true] %s27
      %s29 = sshll.u32 [#allocation10], 4
      %s30 = int_to_ptr.vmem [resolvable:$true] %s29
      %35 = dma.hbm_to_vmem [thread:$0]  %s28, 256, %s30, [#allocation7], 128, 128, 8
    $region13: #{tpu_custom_call.1} parent=1 // pred_fallthru
      _
    // Predicated region
    $region14: #{tpu_custom_call.1} parent=1 // pred_check
      _
    $region15: #{tpu_custom_call.1} parent=1 // pred_check_branch
      %37 = sbr.rel (0) target = $region17
    $region16: #{tpu_custom_call.1} parent=1 // pred_region
      %39 = dma.done [#allocation9], 16
    $region17: #{tpu_custom_call.1} parent=1 // pred_fallthru
      _
    // Predicated region
    $region18: #{tpu_custom_call.1} parent=1 // pred_check
      _
    $region19: #{tpu_custom_call.1} parent=1 // pred_check_branch
      %41 = sbr.rel (0) target = $region21
    $region20: #{tpu_custom_call.1} parent=1 // pred_region
      %43 = dma.done [#allocation7], 256
    $region21: #{tpu_custom_call.1} parent=1 // pred_fallthru
      _
    %44 = sfence
    %p45 = scmp.eq.s32.totalorder 0, 0
    // Predicated region
    $region22: #{tpu_custom_call.1} parent=1 // pred_check
      %p46 = pneg %p45
    $region23: #{tpu_custom_call.1} parent=1 // pred_check_branch
      %48 = sbr.rel (%p46) target = $region25
    $region24: #{tpu_custom_call.1} parent=1 // pred_region
      %49 = vst [vmem:[#allocation2] sm:$0xf] 0.0
      %50 = vst [vmem:[#allocation3] sm:$0xf] -inf
    $region25: #{tpu_custom_call.1} parent=1 // pred_fallthru
      _
    %v51 = vld [vmem:[#allocation10] sm:$0xff]
    %v52 = vld [vmem:[#allocation10 + $0x8] sm:$0xff]
    %v53 = vld [vmem:[#allocation2] sm:$0xf]
    %56 = vst [vmem:[#allocation1] ss:$2 sm:$0xff] %v51
    %v57 = vld.sshfl [vmem:[#allocation1] sm:$0xff pattern:$0x75316420]
    %v58 = vld.sshfl [vmem:[#allocation1 + $0x8] sm:$0xff pattern:$0x75316420]
    %s59 = scalar_lea.vmem [#allocation1], 16
    %60 = vst [vmem:[%s59] ss:$2 sm:$0xff] %v52
    %v61 = vld.sshfl [vmem:[#allocation1 + $0x10] sm:$0xff pattern:$0x75316420]
    %v62 = vld.sshfl [vmem:[#allocation1 + $0x18] sm:$0xff pattern:$0x75316420]
    %vm67 = vcmask 1043456
    %v68 = vsel %vm67, %v57, 0.0
    %v69 = vrot.slane %v68, 4
    %v70 = vadd.f32 %v68, %v69
    %v71 = vrot.slane %v70, 2
    %v72 = vadd.f32 %v70, %v71
    %v73 = vrot.slane %v72, 1
    %v74 = vadd.f32 %v72, %v73
    %v75 = vsel %vm67, %v58, 0.0
    %v76 = vrot.slane %v75, 4
    %v77 = vadd.f32 %v75, %v76
    %v78 = vrot.slane %v77, 2
    %v79 = vadd.f32 %v77, %v78
    %v80 = vrot.slane %v79, 1
    %v81 = vadd.f32 %v79, %v80
    %v82 = vsel %vm67, %v61, 0.0
    %v83 = vrot.slane %v82, 4
    %v84 = vadd.f32 %v82, %v83
    %v85 = vrot.slane %v84, 2
    %v86 = vadd.f32 %v84, %v85
    %v87 = vrot.slane %v86, 1
    %v88 = vadd.f32 %v86, %v87
    %v89 = vsel %vm67, %v62, 0.0
    %v90 = vrot.slane %v89, 4
    %v91 = vadd.f32 %v89, %v90
    %v92 = vrot.slane %v91, 2
    %v93 = vadd.f32 %v91, %v92
    %v94 = vrot.slane %v93, 1
    %v95 = vadd.f32 %v93, %v94
    %v100 = vrot.slane %v81, 6
    %v101 = vrot.slane %v95, 6
    %vm102 = vcmask 1041408
    %v103 = vsel %vm102, %v74, %v100
    %v104 = vsel %vm102, %v88, %v101
    %vm105 = vcmask 1042434
    %vm106 = vcmask 1044484
    %v107 = vsel %vm106, %v103, %v103
    %vm108 = vcmask 1046534
    %v109 = vsel %vm108, %v103, %v107
    %v110 = vrot.slane %v104, 7
    %vm111 = vcmask 1041409
    %v112 = vsel %vm111, %v110, %v109
    %vm113 = vcmask 1043459
    %v114 = vsel %vm113, %v110, %v112
    %vm115 = vcmask 1045509
    %v116 = vsel %vm115, %v110, %v114
    %vm117 = vcmask 1047559
    %v118 = vsel %vm117, %v110, %v116
    %v120 = vadd.f32 %v53, %v118
    %121 = vst [vmem:[#allocation2] sm:$0xf] %v120
    %v122 = vld [vmem:[#allocation3] sm:$0xf]
    %123 = vst [vmem:[#allocation1] ss:$2 sm:$0xff] %v51
    %v124 = vld.sshfl [vmem:[#allocation1] sm:$0xff pattern:$0x75316420]
    %v125 = vld.sshfl [vmem:[#allocation1 + $0x8] sm:$0xff pattern:$0x75316420]
    %s126 = scalar_lea.vmem [#allocation1], 16
    %127 = vst [vmem:[%s126] ss:$2 sm:$0xff] %v52
    %v128 = vld.sshfl [vmem:[#allocation1 + $0x10] sm:$0xff pattern:$0x75316420]
    %v129 = vld.sshfl [vmem:[#allocation1 + $0x18] sm:$0xff pattern:$0x75316420]
    %v134 = vsel %vm67, %v124, -inf
    %v135 = vrot.slane %v134, 4
    %v136 = vmax.f32 %v134, %v135
    %v137 = vrot.slane %v136, 2
    %v138 = vmax.f32 %v136, %v137
    %v139 = vrot.slane %v138, 1
    %v140 = vmax.f32 %v138, %v139
    %v141 = vsel %vm67, %v125, -inf
    %v142 = vrot.slane %v141, 4
    %v143 = vmax.f32 %v141, %v142
    %v144 = vrot.slane %v143, 2
    %v145 = vmax.f32 %v143, %v144
    %v146 = vrot.slane %v145, 1
    %v147 = vmax.f32 %v145, %v146
    %v148 = vsel %vm67, %v128, -inf
    %v149 = vrot.slane %v148, 4
    %v150 = vmax.f32 %v148, %v149
    %v151 = vrot.slane %v150, 2
    %v152 = vmax.f32 %v150, %v151
    %v153 = vrot.slane %v152, 1
    %v154 = vmax.f32 %v152, %v153
    %v155 = vsel %vm67, %v129, -inf
    %v156 = vrot.slane %v155, 4
    %v157 = vmax.f32 %v155, %v156
    %v158 = vrot.slane %v157, 2
    %v159 = vmax.f32 %v157, %v158
    %v160 = vrot.slane %v159, 1
    %v161 = vmax.f32 %v159, %v160
    %v166 = vrot.slane %v147, 6
    %v167 = vrot.slane %v161, 6
    %v168 = vsel %vm102, %v140, %v166
    %v169 = vsel %vm102, %v154, %v167
    %v170 = vsel %vm106, %v168, %v168
    %v171 = vsel %vm108, %v168, %v170
    %v172 = vrot.slane %v169, 7
    %v173 = vsel %vm111, %v172, %v171
    %v174 = vsel %vm113, %v172, %v173
    %v175 = vsel %vm115, %v172, %v174
    %v176 = vsel %vm117, %v172, %v175
    %v178 = vmax.f32 %v122, %v176
    %179 = vst [vmem:[#allocation3] sm:$0xf] %v178
    // Predicated region
    $region26: #{tpu_custom_call.1} parent=1 // pred_check
      %p180 = pneg %p45
    $region27: #{tpu_custom_call.1} parent=1 // pred_check_branch
      %182 = sbr.rel (%p180) target = $region29
    $region28: #{tpu_custom_call.1} parent=1 // pred_region
      %v183 = vld [vmem:[#allocation2] sm:$0xf]
      %v184 = vmul.f32 %v183, 0.25
      %v185 = vld [vmem:[#allocation3] sm:$0xf]
      %vm186 = vcmask 179200
      %187 = vst.msk [vmem:[#allocation4] sm:$0xff] %vm186, 0.0
      %188 = vst.msk [vmem:[#allocation4 + $0x8] sm:$0xff] %vm186, 0.0
      %vm189 = vcmask 177152
      %190 = vst.msk [vmem:[#allocation4 + $0x10] sm:$0x3f] %vm189, 0.0
      %191 = vst.msk [vmem:[#allocation4 + $0x18] sm:$0xff] %vm186, 0.0
      %192 = vst.msk [vmem:[#allocation4 + $0x20] sm:$0xff] %vm186, 0.0
      %193 = vst.msk [vmem:[#allocation4 + $0x28] sm:$0x3f] %vm189, 0.0
      %194 = vst.msk [vmem:[#allocation4 + $0x30] sm:$0xff] %vm186, 0.0
      %195 = vst.msk [vmem:[#allocation4 + $0x38] sm:$0xff] %vm186, 0.0
      %196 = vst.msk [vmem:[#allocation4 + $0x40] sm:$0x3f] %vm189, 0.0
      %197 = vst.msk [vmem:[#allocation4 + $0x48] sm:$0xff] %vm186, 0.0
      %198 = vst.msk [vmem:[#allocation4 + $0x50] sm:$0xff] %vm186, 0.0
      %199 = vst.msk [vmem:[#allocation4 + $0x58] sm:$0x3f] %vm189, 0.0
      %v201 = vrot.slane %v184, 1
      %v202 = vrot.slane %v184, 2
      %v203 = vrot.slane %v184, 3
      %vm204 = vcmask 1040384
      %v205 = vsel %vm204, %v184, %v201
      %v206 = vsel %vm105, %v202, %v203
      %v207 = vsel %vm102, %v205, %v206
      %v208 = vsel %vm111, %v184, %v201
      %v209 = vsel %vm113, %v202, %v203
      %vm210 = vcmask 1042433
      %v211 = vsel %vm210, %v208, %v209
      %v212 = vrot.slane %v211, 1
      %v213 = vperm.slane %v207, 0
      %v214 = vperm.slane %v212, 0
      %215 = vrot.lane.b32.xlu0 %v213, 3
      %v216 = vpop.permute.xlu0 %215
      %217 = vrot.lane.b32.xlu0 %v214, 3
      %v218 = vpop.permute.xlu0 %217
      %vm221 = vcmask 147480
      %222 = vst.msk [vmem:[#allocation4 + $0x3] sm:$0x1] %vm221, %v216
      %223 = vst.msk [vmem:[#allocation4 + $0x1b] sm:$0x1] %vm221, %v218
      %v225 = vrot.slane %v185, 1
      %v226 = vrot.slane %v185, 2
      %v227 = vrot.slane %v185, 3
      %v228 = vsel %vm204, %v185, %v225
      %v229 = vsel %vm105, %v226, %v227
      %v230 = vsel %vm102, %v228, %v229
      %v231 = vsel %vm111, %v185, %v225
      %v232 = vsel %vm113, %v226, %v227
      %v233 = vsel %vm210, %v231, %v232
      %v234 = vrot.slane %v233, 1
      %v235 = vperm.slane %v230, 0
      %v236 = vperm.slane %v234, 0
      %237 = vrot.lane.b32.xlu0 %v235, 3
      %v238 = vpop.permute.xlu0 %237
      %239 = vrot.lane.b32.xlu0 %v236, 3
      %v240 = vpop.permute.xlu0 %239
      %s243 = scalar_lea.vmem [#allocation4], 48
      %244 = vst.msk [vmem:[%s243 + $0x3] sm:$0x1] %vm221, %v238
      %245 = vst.msk [vmem:[%s243 + $0x1b] sm:$0x1] %vm221, %v240
      %246 = vrot.lane.b32.xlu0 %v213, 115
      %v247 = vpop.permute.xlu0 %246
      %248 = vrot.lane.b32.xlu0 %v214, 115
      %v249 = vpop.permute.xlu0 %248
      %252 = vst.msk [vmem:[#allocation4 + $0x4] sm:$0x1] %vm221, %v247
      %253 = vst.msk [vmem:[#allocation4 + $0x1c] sm:$0x1] %vm221, %v249
      %254 = vrot.lane.b32.xlu0 %v235, 115
      %v255 = vpop.permute.xlu0 %254
      %256 = vrot.lane.b32.xlu0 %v236, 115
      %v257 = vpop.permute.xlu0 %256
      %260 = vst.msk [vmem:[%s243 + $0x4] sm:$0x1] %vm221, %v255
      %261 = vst.msk [vmem:[%s243 + $0x1c] sm:$0x1] %vm221, %v257
      %262 = vrot.lane.b32.xlu0 %v213, 99
      %v263 = vpop.permute.xlu0 %262
      %264 = vrot.lane.b32.xlu0 %v214, 99
      %v265 = vpop.permute.xlu0 %264
      %268 = vst.msk [vmem:[#allocation4 + $0x5] sm:$0x1] %vm221, %v263
      %269 = vst.msk [vmem:[#allocation4 + $0x1d] sm:$0x1] %vm221, %v265
      %270 = vrot.lane.b32.xlu0 %v235, 99
      %v271 = vpop.permute.xlu0 %270
      %272 = vrot.lane.b32.xlu0 %v236, 99
      %v273 = vpop.permute.xlu0 %272
      %276 = vst.msk [vmem:[%s243 + $0x5] sm:$0x1] %vm221, %v271
      %277 = vst.msk [vmem:[%s243 + $0x1d] sm:$0x1] %vm221, %v273
      %278 = vrot.lane.b32.xlu0 %v213, 83
      %v279 = vpop.permute.xlu0 %278
      %280 = vrot.lane.b32.xlu0 %v214, 83
      %v281 = vpop.permute.xlu0 %280
      %284 = vst.msk [vmem:[#allocation4 + $0x6] sm:$0x1] %vm221, %v279
      %285 = vst.msk [vmem:[#allocation4 + $0x1e] sm:$0x1] %vm221, %v281
      %286 = vrot.lane.b32.xlu0 %v235, 83
      %v287 = vpop.permute.xlu0 %286
      %288 = vrot.lane.b32.xlu0 %v236, 83
      %v289 = vpop.permute.xlu0 %288
      %292 = vst.msk [vmem:[%s243 + $0x6] sm:$0x1] %vm221, %v287
      %293 = vst.msk [vmem:[%s243 + $0x1e] sm:$0x1] %vm221, %v289
      %294 = vrot.lane.b32.xlu0 %v213, 67
      %v295 = vpop.permute.xlu0 %294
      %296 = vrot.lane.b32.xlu0 %v214, 67
      %v297 = vpop.permute.xlu0 %296
      %300 = vst.msk [vmem:[#allocation4 + $0x7] sm:$0x1] %vm221, %v295
      %301 = vst.msk [vmem:[#allocation4 + $0x1f] sm:$0x1] %vm221, %v297
      %302 = vrot.lane.b32.xlu0 %v235, 67
      %v303 = vpop.permute.xlu0 %302
      %304 = vrot.lane.b32.xlu0 %v236, 67
      %v305 = vpop.permute.xlu0 %304
      %308 = vst.msk [vmem:[%s243 + $0x7] sm:$0x1] %vm221, %v303
      %309 = vst.msk [vmem:[%s243 + $0x1f] sm:$0x1] %vm221, %v305
      %310 = vrot.lane.b32.xlu0 %v213, 51
      %v311 = vpop.permute.xlu0 %310
      %312 = vrot.lane.b32.xlu0 %v214, 51
      %v313 = vpop.permute.xlu0 %312
      %316 = vst.msk [vmem:[#allocation4 + $0x8] sm:$0x1] %vm221, %v311
      %317 = vst.msk [vmem:[#allocation4 + $0x20] sm:$0x1] %vm221, %v313
      %318 = vrot.lane.b32.xlu0 %v235, 51
      %v319 = vpop.permute.xlu0 %318
      %320 = vrot.lane.b32.xlu0 %v236, 51
      %v321 = vpop.permute.xlu0 %320
      %324 = vst.msk [vmem:[%s243 + $0x8] sm:$0x1] %vm221, %v319
      %325 = vst.msk [vmem:[%s243 + $0x20] sm:$0x1] %vm221, %v321
      %326 = vrot.lane.b32.xlu0 %v213, 35
      %v327 = vpop.permute.xlu0 %326
      %328 = vrot.lane.b32.xlu0 %v214, 35
      %v329 = vpop.permute.xlu0 %328
      %332 = vst.msk [vmem:[#allocation4 + $0x9] sm:$0x1] %vm221, %v327
      %333 = vst.msk [vmem:[#allocation4 + $0x21] sm:$0x1] %vm221, %v329
      %334 = vrot.lane.b32.xlu0 %v235, 35
      %v335 = vpop.permute.xlu0 %334
      %336 = vrot.lane.b32.xlu0 %v236, 35
      %v337 = vpop.permute.xlu0 %336
      %340 = vst.msk [vmem:[%s243 + $0x9] sm:$0x1] %vm221, %v335
      %341 = vst.msk [vmem:[%s243 + $0x21] sm:$0x1] %vm221, %v337
      %342 = vrot.lane.b32.xlu0 %v213, 19
      %v343 = vpop.permute.xlu0 %342
      %344 = vrot.lane.b32.xlu0 %v214, 19
      %v345 = vpop.permute.xlu0 %344
      %348 = vst.msk [vmem:[#allocation4 + $0xa] sm:$0x1] %vm221, %v343
      %349 = vst.msk [vmem:[#allocation4 + $0x22] sm:$0x1] %vm221, %v345
      %350 = vrot.lane.b32.xlu0 %v235, 19
      %v351 = vpop.permute.xlu0 %350
      %352 = vrot.lane.b32.xlu0 %v236, 19
      %v353 = vpop.permute.xlu0 %352
      %356 = vst.msk [vmem:[%s243 + $0xa] sm:$0x1] %vm221, %v351
      %357 = vst.msk [vmem:[%s243 + $0x22] sm:$0x1] %vm221, %v353
      %v358 = vrot.slane %v207, 1
      %v359 = vrot.slane %v212, 1
      %v360 = vperm.slane %v358, 0
      %v361 = vperm.slane %v359, 0
      %362 = vrot.lane.b32.xlu0 %v360, 3
      %v363 = vpop.permute.xlu0 %362
      %364 = vrot.lane.b32.xlu0 %v361, 3
      %v365 = vpop.permute.xlu0 %364
      %368 = vst.msk [vmem:[#allocation4 + $0xb] sm:$0x1] %vm221, %v363
      %369 = vst.msk [vmem:[#allocation4 + $0x23] sm:$0x1] %vm221, %v365
      %v370 = vrot.slane %v230, 1
      %v371 = vrot.slane %v234, 1
      %v372 = vperm.slane %v370, 0
      %v373 = vperm.slane %v371, 0
      %374 = vrot.lane.b32.xlu0 %v372, 3
      %v375 = vpop.permute.xlu0 %374
      %376 = vrot.lane.b32.xlu0 %v373, 3
      %v377 = vpop.permute.xlu0 %376
      %380 = vst.msk [vmem:[%s243 + $0xb] sm:$0x1] %vm221, %v375
      %381 = vst.msk [vmem:[%s243 + $0x23] sm:$0x1] %vm221, %v377
      %382 = vrot.lane.b32.xlu0 %v207, 112
      %v383 = vpop.permute.xlu0 %382
      %384 = vrot.lane.b32.xlu0 %v212, 112
      %v385 = vpop.permute.xlu0 %384
      %v386 = vrot.slane %v383, 1
      %v387 = vrot.slane %v385, 1
      %v388 = vperm.slane %v386, 0
      %v389 = vperm.slane %v387, 0
      %390 = vrot.lane.b32.xlu0 %v388, 3
      %v391 = vpop.permute.xlu0 %390
      %392 = vrot.lane.b32.xlu0 %v389, 3
      %v393 = vpop.permute.xlu0 %392
      %396 = vst.msk [vmem:[#allocation4 + $0xc] sm:$0x1] %vm221, %v391
      %397 = vst.msk [vmem:[#allocation4 + $0x24] sm:$0x1] %vm221, %v393
      %398 = vrot.lane.b32.xlu0 %v230, 112
      %v399 = vpop.permute.xlu0 %398
      %400 = vrot.lane.b32.xlu0 %v234, 112
      %v401 = vpop.permute.xlu0 %400
      %v402 = vrot.slane %v399, 1
      %v403 = vrot.slane %v401, 1
      %v404 = vperm.slane %v402, 0
      %v405 = vperm.slane %v403, 0
      %406 = vrot.lane.b32.xlu0 %v404, 3
      %v407 = vpop.permute.xlu0 %406
      %408 = vrot.lane.b32.xlu0 %v405, 3
      %v409 = vpop.permute.xlu0 %408
      %412 = vst.msk [vmem:[%s243 + $0xc] sm:$0x1] %vm221, %v407
      %413 = vst.msk [vmem:[%s243 + $0x24] sm:$0x1] %vm221, %v409
      %414 = vrot.lane.b32.xlu0 %v207, 96
      %v415 = vpop.permute.xlu0 %414
      %416 = vrot.lane.b32.xlu0 %v212, 96
      %v417 = vpop.permute.xlu0 %416
      %v418 = vrot.slane %v415, 1
      %v419 = vrot.slane %v417, 1
      %v420 = vperm.slane %v418, 0
      %v421 = vperm.slane %v419, 0
      %422 = vrot.lane.b32.xlu0 %v420, 3
      %v423 = vpop.permute.xlu0 %422
      %424 = vrot.lane.b32.xlu0 %v421, 3
      %v425 = vpop.permute.xlu0 %424
      %428 = vst.msk [vmem:[#allocation4 + $0xd] sm:$0x1] %vm221, %v423
      %429 = vst.msk [vmem:[#allocation4 + $0x25] sm:$0x1] %vm221, %v425
      %430 = vrot.lane.b32.xlu0 %v230, 96
      %v431 = vpop.permute.xlu0 %430
      %432 = vrot.lane.b32.xlu0 %v234, 96
      %v433 = vpop.permute.xlu0 %432
      %v434 = vrot.slane %v431, 1
      %v435 = vrot.slane %v433, 1
      %v436 = vperm.slane %v434, 0
      %v437 = vperm.slane %v435, 0
      %438 = vrot.lane.b32.xlu0 %v436, 3
      %v439 = vpop.permute.xlu0 %438
      %440 = vrot.lane.b32.xlu0 %v437, 3
      %v441 = vpop.permute.xlu0 %440
      %444 = vst.msk [vmem:[%s243 + $0xd] sm:$0x1] %vm221, %v439
      %445 = vst.msk [vmem:[%s243 + $0x25] sm:$0x1] %vm221, %v441
      %446 = vrot.lane.b32.xlu0 %v207, 80
      %v447 = vpop.permute.xlu0 %446
      %448 = vrot.lane.b32.xlu0 %v212, 80
      %v449 = vpop.permute.xlu0 %448
      %v450 = vrot.slane %v447, 1
      %v451 = vrot.slane %v449, 1
      %v452 = vperm.slane %v450, 0
      %v453 = vperm.slane %v451, 0
      %454 = vrot.lane.b32.xlu0 %v452, 3
      %v455 = vpop.permute.xlu0 %454
      %456 = vrot.lane.b32.xlu0 %v453, 3
      %v457 = vpop.permute.xlu0 %456
      %460 = vst.msk [vmem:[#allocation4 + $0xe] sm:$0x1] %vm221, %v455
      %461 = vst.msk [vmem:[#allocation4 + $0x26] sm:$0x1] %vm221, %v457
      %462 = vrot.lane.b32.xlu0 %v230, 80
      %v463 = vpop.permute.xlu0 %462
      %464 = vrot.lane.b32.xlu0 %v234, 80
      %v465 = vpop.permute.xlu0 %464
      %v466 = vrot.slane %v463, 1
      %v467 = vrot.slane %v465, 1
      %v468 = vperm.slane %v466, 0
      %v469 = vperm.slane %v467, 0
      %470 = vrot.lane.b32.xlu0 %v468, 3
      %v471 = vpop.permute.xlu0 %470
      %472 = vrot.lane.b32.xlu0 %v469, 3
      %v473 = vpop.permute.xlu0 %472
      %476 = vst.msk [vmem:[%s243 + $0xe] sm:$0x1] %vm221, %v471
      %477 = vst.msk [vmem:[%s243 + $0x26] sm:$0x1] %vm221, %v473
      %478 = vrot.lane.b32.xlu0 %v207, 64
      %v479 = vpop.permute.xlu0 %478
      %480 = vrot.lane.b32.xlu0 %v212, 64
      %v481 = vpop.permute.xlu0 %480
      %v482 = vrot.slane %v479, 1
      %v483 = vrot.slane %v481, 1
      %v484 = vperm.slane %v482, 0
      %v485 = vperm.slane %v483, 0
      %486 = vrot.lane.b32.xlu0 %v484, 3
      %v487 = vpop.permute.xlu0 %486
      %488 = vrot.lane.b32.xlu0 %v485, 3
      %v489 = vpop.permute.xlu0 %488
      %492 = vst.msk [vmem:[#allocation4 + $0xf] sm:$0x1] %vm221, %v487
      %493 = vst.msk [vmem:[#allocation4 + $0x27] sm:$0x1] %vm221, %v489
      %494 = vrot.lane.b32.xlu0 %v230, 64
      %v495 = vpop.permute.xlu0 %494
      %496 = vrot.lane.b32.xlu0 %v234, 64
      %v497 = vpop.permute.xlu0 %496
      %v498 = vrot.slane %v495, 1
      %v499 = vrot.slane %v497, 1
      %v500 = vperm.slane %v498, 0
      %v501 = vperm.slane %v499, 0
      %502 = vrot.lane.b32.xlu0 %v500, 3
      %v503 = vpop.permute.xlu0 %502
      %504 = vrot.lane.b32.xlu0 %v501, 3
      %v505 = vpop.permute.xlu0 %504
      %508 = vst.msk [vmem:[%s243 + $0xf] sm:$0x1] %vm221, %v503
      %509 = vst.msk [vmem:[%s243 + $0x27] sm:$0x1] %vm221, %v505
      %510 = vrot.lane.b32.xlu0 %v207, 48
      %v511 = vpop.permute.xlu0 %510
      %512 = vrot.lane.b32.xlu0 %v212, 48
      %v513 = vpop.permute.xlu0 %512
      %v514 = vrot.slane %v511, 1
      %v515 = vrot.slane %v513, 1
      %v516 = vperm.slane %v514, 0
      %v517 = vperm.slane %v515, 0
      %518 = vrot.lane.b32.xlu0 %v516, 3
      %v519 = vpop.permute.xlu0 %518
      %520 = vrot.lane.b32.xlu0 %v517, 3
      %v521 = vpop.permute.xlu0 %520
      %524 = vst.msk [vmem:[#allocation4 + $0x10] sm:$0x1] %vm221, %v519
      %525 = vst.msk [vmem:[#allocation4 + $0x28] sm:$0x1] %vm221, %v521
      %526 = vrot.lane.b32.xlu0 %v230, 48
      %v527 = vpop.permute.xlu0 %526
      %528 = vrot.lane.b32.xlu0 %v234, 48
      %v529 = vpop.permute.xlu0 %528
      %v530 = vrot.slane %v527, 1
      %v531 = vrot.slane %v529, 1
      %v532 = vperm.slane %v530, 0
      %v533 = vperm.slane %v531, 0
      %534 = vrot.lane.b32.xlu0 %v532, 3
      %v535 = vpop.permute.xlu0 %534
      %536 = vrot.lane.b32.xlu0 %v533, 3
      %v537 = vpop.permute.xlu0 %536
      %540 = vst.msk [vmem:[%s243 + $0x10] sm:$0x1] %vm221, %v535
      %541 = vst.msk [vmem:[%s243 + $0x28] sm:$0x1] %vm221, %v537
      %542 = vrot.lane.b32.xlu0 %v207, 32
      %v543 = vpop.permute.xlu0 %542
      %544 = vrot.lane.b32.xlu0 %v212, 32
      %v545 = vpop.permute.xlu0 %544
      %v546 = vrot.slane %v543, 1
      %v547 = vrot.slane %v545, 1
      %v548 = vperm.slane %v546, 0
      %v549 = vperm.slane %v547, 0
      %550 = vrot.lane.b32.xlu0 %v548, 3
      %v551 = vpop.permute.xlu0 %550
      %552 = vrot.lane.b32.xlu0 %v549, 3
      %v553 = vpop.permute.xlu0 %552
      %556 = vst.msk [vmem:[#allocation4 + $0x11] sm:$0x1] %vm221, %v551
      %557 = vst.msk [vmem:[#allocation4 + $0x29] sm:$0x1] %vm221, %v553
      %558 = vrot.lane.b32.xlu0 %v230, 32
      %v559 = vpop.permute.xlu0 %558
      %560 = vrot.lane.b32.xlu0 %v234, 32
      %v561 = vpop.permute.xlu0 %560
      %v562 = vrot.slane %v559, 1
      %v563 = vrot.slane %v561, 1
      %v564 = vperm.slane %v562, 0
      %v565 = vperm.slane %v563, 0
      %566 = vrot.lane.b32.xlu0 %v564, 3
      %v567 = vpop.permute.xlu0 %566
      %568 = vrot.lane.b32.xlu0 %v565, 3
      %v569 = vpop.permute.xlu0 %568
      %572 = vst.msk [vmem:[%s243 + $0x11] sm:$0x1] %vm221, %v567
      %573 = vst.msk [vmem:[%s243 + $0x29] sm:$0x1] %vm221, %v569
      %574 = vrot.lane.b32.xlu0 %v207, 16
      %v575 = vpop.permute.xlu0 %574
      %576 = vrot.lane.b32.xlu0 %v212, 16
      %v577 = vpop.permute.xlu0 %576
      %v578 = vrot.slane %v575, 1
      %v579 = vrot.slane %v577, 1
      %v580 = vperm.slane %v578, 0
      %v581 = vperm.slane %v579, 0
      %582 = vrot.lane.b32.xlu0 %v580, 3
      %v583 = vpop.permute.xlu0 %582
      %584 = vrot.lane.b32.xlu0 %v581, 3
      %v585 = vpop.permute.xlu0 %584
      %588 = vst.msk [vmem:[#allocation4 + $0x12] sm:$0x1] %vm221, %v583
      %589 = vst.msk [vmem:[#allocation4 + $0x2a] sm:$0x1] %vm221, %v585
      %590 = vrot.lane.b32.xlu0 %v230, 16
      %v591 = vpop.permute.xlu0 %590
      %592 = vrot.lane.b32.xlu0 %v234, 16
      %v593 = vpop.permute.xlu0 %592
      %v594 = vrot.slane %v591, 1
      %v595 = vrot.slane %v593, 1
      %v596 = vperm.slane %v594, 0
      %v597 = vperm.slane %v595, 0
      %598 = vrot.lane.b32.xlu0 %v596, 3
      %v599 = vpop.permute.xlu0 %598
      %600 = vrot.lane.b32.xlu0 %v597, 3
      %v601 = vpop.permute.xlu0 %600
      %604 = vst.msk [vmem:[%s243 + $0x12] sm:$0x1] %vm221, %v599
      %605 = vst.msk [vmem:[%s243 + $0x2a] sm:$0x1] %vm221, %v601
      %s606 = sld [smem:[#allocation5]]
      %v607 = vstv %s606
      %v608 = vld [vmem:[#allocation4] sm:$0xff]
      %v609 = vld [vmem:[#allocation4 + $0x8] sm:$0xff]
      %v610 = vld [vmem:[#allocation4 + $0x10] sm:$0x3f]
      %v611 = vld [vmem:[#allocation4 + $0x18] sm:$0xff]
      %v612 = vld [vmem:[#allocation4 + $0x20] sm:$0xff]
      %v613 = vld [vmem:[#allocation4 + $0x28] sm:$0x3f]
      %s614 = sld [smem:[#allocation6]]
      %v615 = vstv %s614
      %v616 = vmul.f32 %v615, %v608
      %v617 = vmul.f32 %v615, %v609
      %v618 = vmul.f32 %v615, %v611
      %v619 = vmul.f32 %v615, %v612
      %v620 = vadd.f32 %v607, %v616
      %v621 = vadd.f32 %v607, %v617
      %v622 = vadd.f32 %v607, %v618
      %v623 = vadd.f32 %v607, %v619
      %s624 = sld [smem:[#allocation6 + $0x7]]
      %v625 = vstv %s624
      %v626 = vmul.f32 %v625, %v608
      %v627 = vmul.f32 %v625, %v609
      %v628 = vmul.f32 %v625, %v610
      %v629 = vmul.f32 %v625, %v611
      %v630 = vmul.f32 %v625, %v612
      %v631 = vmul.f32 %v625, %v613
      %vm638 = vcmask 1046528
      %v639 = vrot.slane %v626, 1
      %v640 = vrot.slane %v627, 1
      %v641 = vsel %vm638, %v639, %v640
      %v642 = vrot.slane %v628, 1
      %v643 = vsel %vm638, %v640, %v642
      %v644 = vrot.slane %v629, 1
      %v645 = vrot.slane %v630, 1
      %v646 = vsel %vm638, %v644, %v645
      %v647 = vrot.slane %v631, 1
      %v648 = vsel %vm638, %v645, %v647
      %v653 = vadd.f32 %v620, %v641
      %v654 = vadd.f32 %v621, %v643
      %v655 = vadd.f32 %v622, %v646
      %v656 = vadd.f32 %v623, %v648
      %s657 = sld [smem:[#allocation6 + $0xe]]
      %v658 = vstv %s657
      %v659 = vmul.f32 %v658, %v608
      %v660 = vmul.f32 %v658, %v609
      %v661 = vmul.f32 %v658, %v610
      %v662 = vmul.f32 %v658, %v611
      %v663 = vmul.f32 %v658, %v612
      %v664 = vmul.f32 %v658, %v613
      %vm671 = vcmask 1045504
      %v672 = vrot.slane %v659, 2
      %v673 = vrot.slane %v660, 2
      %v674 = vsel %vm671, %v672, %v673
      %v675 = vrot.slane %v661, 2
      %v676 = vsel %vm671, %v673, %v675
      %v677 = vrot.slane %v662, 2
      %v678 = vrot.slane %v663, 2
      %v679 = vsel %vm671, %v677, %v678
      %v680 = vrot.slane %v664, 2
      %v681 = vsel %vm671, %v678, %v680
      %v686 = vadd.f32 %v653, %v674
      %v687 = vadd.f32 %v654, %v676
      %v688 = vadd.f32 %v655, %v679
      %v689 = vadd.f32 %v656, %v681
      %s690 = sld [smem:[#allocation6 + $0x15]]
      %v691 = vstv %s690
      %v692 = vmul.f32 %v691, %v608
      %v693 = vmul.f32 %v691, %v609
      %v694 = vmul.f32 %v691, %v610
      %v695 = vmul.f32 %v691, %v611
      %v696 = vmul.f32 %v691, %v612
      %v697 = vmul.f32 %v691, %v613
      %vm704 = vcmask 1044480
      %v705 = vrot.slane %v692, 3
      %v706 = vrot.slane %v693, 3
      %v707 = vsel %vm704, %v705, %v706
      %v708 = vrot.slane %v694, 3
      %v709 = vsel %vm704, %v706, %v708
      %v710 = vrot.slane %v695, 3
      %v711 = vrot.slane %v696, 3
      %v712 = vsel %vm704, %v710, %v711
      %v713 = vrot.slane %v697, 3
      %v714 = vsel %vm704, %v711, %v713
      %v719 = vadd.f32 %v686, %v707
      %v720 = vadd.f32 %v687, %v709
      %v721 = vadd.f32 %v688, %v712
      %v722 = vadd.f32 %v689, %v714
      %s723 = sld [smem:[#allocation6 + $0x1c]]
      %v724 = vstv %s723
      %v725 = vmul.f32 %v724, %v608
      %v726 = vmul.f32 %v724, %v609
      %v727 = vmul.f32 %v724, %v610
      %v728 = vmul.f32 %v724, %v611
      %v729 = vmul.f32 %v724, %v612
      %v730 = vmul.f32 %v724, %v613
      %v737 = vrot.slane %v725, 4
      %v738 = vrot.slane %v726, 4
      %v739 = vsel %vm67, %v737, %v738
      %v740 = vrot.slane %v727, 4
      %v741 = vsel %vm67, %v738, %v740
      %v742 = vrot.slane %v728, 4
      %v743 = vrot.slane %v729, 4
      %v744 = vsel %vm67, %v742, %v743
      %v745 = vrot.slane %v730, 4
      %v746 = vsel %vm67, %v743, %v745
      %v751 = vadd.f32 %v719, %v739
      %v752 = vadd.f32 %v720, %v741
      %v753 = vadd.f32 %v721, %v744
      %v754 = vadd.f32 %v722, %v746
      %s755 = sld [smem:[#allocation6 + $0x23]]
      %v756 = vstv %s755
      %v757 = vmul.f32 %v756, %v608
      %v758 = vmul.f32 %v756, %v609
      %v759 = vmul.f32 %v756, %v610
      %v760 = vmul.f32 %v756, %v611
      %v761 = vmul.f32 %v756, %v612
      %v762 = vmul.f32 %v756, %v613
      %vm769 = vcmask 1042432
      %v770 = vrot.slane %v757, 5
      %v771 = vrot.slane %v758, 5
      %v772 = vsel %vm769, %v770, %v771
      %v773 = vrot.slane %v759, 5
      %v774 = vsel %vm769, %v771, %v773
      %v775 = vrot.slane %v760, 5
      %v776 = vrot.slane %v761, 5
      %v777 = vsel %vm769, %v775, %v776
      %v778 = vrot.slane %v762, 5
      %v779 = vsel %vm769, %v776, %v778
      %v784 = vadd.f32 %v751, %v772
      %v785 = vadd.f32 %v752, %v774
      %v786 = vadd.f32 %v753, %v777
      %v787 = vadd.f32 %v754, %v779
      %s788 = sld [smem:[#allocation6 + $0x2a]]
      %v789 = vstv %s788
      %v790 = vmul.f32 %v789, %v608
      %v791 = vmul.f32 %v789, %v609
      %v792 = vmul.f32 %v789, %v610
      %v793 = vmul.f32 %v789, %v611
      %v794 = vmul.f32 %v789, %v612
      %v795 = vmul.f32 %v789, %v613
      %v802 = vrot.slane %v790, 6
      %v803 = vrot.slane %v791, 6
      %v804 = vsel %vm102, %v802, %v803
      %v805 = vrot.slane %v792, 6
      %v806 = vsel %vm102, %v803, %v805
      %v807 = vrot.slane %v793, 6
      %v808 = vrot.slane %v794, 6
      %v809 = vsel %vm102, %v807, %v808
      %v810 = vrot.slane %v795, 6
      %v811 = vsel %vm102, %v808, %v810
      %v816 = vadd.f32 %v784, %v804
      %v817 = vadd.f32 %v785, %v806
      %v818 = vadd.f32 %v786, %v809
      %v819 = vadd.f32 %v787, %v811
      %s820 = sld [smem:[#allocation6 + $0x1]]
      %v821 = vstv %s820
      %v822 = vmul.f32 %v821, %v608
      %v823 = vmul.f32 %v821, %v609
      %v824 = vmul.f32 %v821, %v611
      %v825 = vmul.f32 %v821, %v612
      %830 = vrot.lane.b32.xlu0 %v822, 127
      %v831 = vpop.permute.xlu0 %830
      %832 = vrot.lane.b32.xlu0 %v823, 127
      %v833 = vpop.permute.xlu0 %832
      %834 = vrot.lane.b32.xlu0 %v824, 127
      %v835 = vpop.permute.xlu0 %834
      %836 = vrot.lane.b32.xlu0 %v825, 127
      %v837 = vpop.permute.xlu0 %836
      %v842 = vadd.f32 %v816, %v831
      %v843 = vadd.f32 %v817, %v833
      %v844 = vadd.f32 %v818, %v835
      %v845 = vadd.f32 %v819, %v837
      %s846 = sld [smem:[#allocation6 + $0x8]]
      %v847 = vstv %s846
      %v848 = vmul.f32 %v847, %v608
      %v849 = vmul.f32 %v847, %v609
      %v850 = vmul.f32 %v847, %v610
      %v851 = vmul.f32 %v847, %v611
      %v852 = vmul.f32 %v847, %v612
      %v853 = vmul.f32 %v847, %v613
      %v860 = vrot.slane %v848, 1
      %v861 = vrot.slane %v849, 1
      %v862 = vsel %vm638, %v860, %v861
      %v863 = vrot.slane %v850, 1
      %v864 = vsel %vm638, %v861, %v863
      %v865 = vrot.slane %v851, 1
      %v866 = vrot.slane %v852, 1
      %v867 = vsel %vm638, %v865, %v866
      %v868 = vrot.slane %v853, 1
      %v869 = vsel %vm638, %v866, %v868
      %870 = vrot.lane.b32.xlu0 %v862, 127
      %v871 = vpop.permute.xlu0 %870
      %872 = vrot.lane.b32.xlu0 %v864, 127
      %v873 = vpop.permute.xlu0 %872
      %874 = vrot.lane.b32.xlu0 %v867, 127
      %v875 = vpop.permute.xlu0 %874
      %876 = vrot.lane.b32.xlu0 %v869, 127
      %v877 = vpop.permute.xlu0 %876
      %v882 = vadd.f32 %v842, %v871
      %v883 = vadd.f32 %v843, %v873
      %v884 = vadd.f32 %v844, %v875
      %v885 = vadd.f32 %v845, %v877
      %s886 = sld [smem:[#allocation6 + $0xf]]
      %v887 = vstv %s886
      %v888 = vmul.f32 %v887, %v608
      %v889 = vmul.f32 %v887, %v609
      %v890 = vmul.f32 %v887, %v610
      %v891 = vmul.f32 %v887, %v611
      %v892 = vmul.f32 %v887, %v612
      %v893 = vmul.f32 %v887, %v613
      %v900 = vrot.slane %v888, 2
      %v901 = vrot.slane %v889, 2
      %v902 = vsel %vm671, %v900, %v901
      %v903 = vrot.slane %v890, 2
      %v904 = vsel %vm671, %v901, %v903
      %v905 = vrot.slane %v891, 2
      %v906 = vrot.slane %v892, 2
      %v907 = vsel %vm671, %v905, %v906
      %v908 = vrot.slane %v893, 2
      %v909 = vsel %vm671, %v906, %v908
      %910 = vrot.lane.b32.xlu0 %v902, 127
      %v911 = vpop.permute.xlu0 %910
      %912 = vrot.lane.b32.xlu0 %v904, 127
      %v913 = vpop.permute.xlu0 %912
      %914 = vrot.lane.b32.xlu0 %v907, 127
      %v915 = vpop.permute.xlu0 %914
      %916 = vrot.lane.b32.xlu0 %v909, 127
      %v917 = vpop.permute.xlu0 %916
      %v922 = vadd.f32 %v882, %v911
      %v923 = vadd.f32 %v883, %v913
      %v924 = vadd.f32 %v884, %v915
      %v925 = vadd.f32 %v885, %v917
      %s926 = sld [smem:[#allocation6 + $0x16]]
      %v927 = vstv %s926
      %v928 = vmul.f32 %v927, %v608
      %v929 = vmul.f32 %v927, %v609
      %v930 = vmul.f32 %v927, %v610
      %v931 = vmul.f32 %v927, %v611
      %v932 = vmul.f32 %v927, %v612
      %v933 = vmul.f32 %v927, %v613
      %v940 = vrot.slane %v928, 3
      %v941 = vrot.slane %v929, 3
      %v942 = vsel %vm704, %v940, %v941
      %v943 = vrot.slane %v930, 3
      %v944 = vsel %vm704, %v941, %v943
      %v945 = vrot.slane %v931, 3
      %v946 = vrot.slane %v932, 3
      %v947 = vsel %vm704, %v945, %v946
      %v948 = vrot.slane %v933, 3
      %v949 = vsel %vm704, %v946, %v948
      %950 = vrot.lane.b32.xlu0 %v942, 127
      %v951 = vpop.permute.xlu0 %950
      %952 = vrot.lane.b32.xlu0 %v944, 127
      %v953 = vpop.permute.xlu0 %952
      %954 = vrot.lane.b32.xlu0 %v947, 127
      %v955 = vpop.permute.xlu0 %954
      %956 = vrot.lane.b32.xlu0 %v949, 127
      %v957 = vpop.permute.xlu0 %956
      %v962 = vadd.f32 %v922, %v951
      %v963 = vadd.f32 %v923, %v953
      %v964 = vadd.f32 %v924, %v955
      %v965 = vadd.f32 %v925, %v957
      %s966 = sld [smem:[#allocation6 + $0x1d]]
      %v967 = vstv %s966
      %v968 = vmul.f32 %v967, %v608
      %v969 = vmul.f32 %v967, %v609
      %v970 = vmul.f32 %v967, %v610
      %v971 = vmul.f32 %v967, %v611
      %v972 = vmul.f32 %v967, %v612
      %v973 = vmul.f32 %v967, %v613
      %v980 = vrot.slane %v968, 4
      %v981 = vrot.slane %v969, 4
      %v982 = vsel %vm67, %v980, %v981
      %v983 = vrot.slane %v970, 4
      %v984 = vsel %vm67, %v981, %v983
      %v985 = vrot.slane %v971, 4
      %v986 = vrot.slane %v972, 4
      %v987 = vsel %vm67, %v985, %v986
      %v988 = vrot.slane %v973, 4
      %v989 = vsel %vm67, %v986, %v988
      %990 = vrot.lane.b32.xlu0 %v982, 127
      %v991 = vpop.permute.xlu0 %990
      %992 = vrot.lane.b32.xlu0 %v984, 127
      %v993 = vpop.permute.xlu0 %992
      %994 = vrot.lane.b32.xlu0 %v987, 127
      %v995 = vpop.permute.xlu0 %994
      %996 = vrot.lane.b32.xlu0 %v989, 127
      %v997 = vpop.permute.xlu0 %996
      %v1002 = vadd.f32 %v962, %v991
      %v1003 = vadd.f32 %v963, %v993
      %v1004 = vadd.f32 %v964, %v995
      %v1005 = vadd.f32 %v965, %v997
      %s1006 = sld [smem:[#allocation6 + $0x24]]
      %v1007 = vstv %s1006
      %v1008 = vmul.f32 %v1007, %v608
      %v1009 = vmul.f32 %v1007, %v609
      %v1010 = vmul.f32 %v1007, %v610
      %v1011 = vmul.f32 %v1007, %v611
      %v1012 = vmul.f32 %v1007, %v612
      %v1013 = vmul.f32 %v1007, %v613
      %v1020 = vrot.slane %v1008, 5
      %v1021 = vrot.slane %v1009, 5
      %v1022 = vsel %vm769, %v1020, %v1021
      %v1023 = vrot.slane %v1010, 5
      %v1024 = vsel %vm769, %v1021, %v1023
      %v1025 = vrot.slane %v1011, 5
      %v1026 = vrot.slane %v1012, 5
      %v1027 = vsel %vm769, %v1025, %v1026
      %v1028 = vrot.slane %v1013, 5
      %v1029 = vsel %vm769, %v1026, %v1028
      %1030 = vrot.lane.b32.xlu0 %v1022, 127
      %v1031 = vpop.permute.xlu0 %1030
      %1032 = vrot.lane.b32.xlu0 %v1024, 127
      %v1033 = vpop.permute.xlu0 %1032
      %1034 = vrot.lane.b32.xlu0 %v1027, 127
      %v1035 = vpop.permute.xlu0 %1034
      %1036 = vrot.lane.b32.xlu0 %v1029, 127
      %v1037 = vpop.permute.xlu0 %1036
      %v1042 = vadd.f32 %v1002, %v1031
      %v1043 = vadd.f32 %v1003, %v1033
      %v1044 = vadd.f32 %v1004, %v1035
      %v1045 = vadd.f32 %v1005, %v1037
      %s1046 = sld [smem:[#allocation6 + $0x2b]]
      %v1047 = vstv %s1046
      %v1048 = vmul.f32 %v1047, %v608
      %v1049 = vmul.f32 %v1047, %v609
      %v1050 = vmul.f32 %v1047, %v610
      %v1051 = vmul.f32 %v1047, %v611
      %v1052 = vmul.f32 %v1047, %v612
      %v1053 = vmul.f32 %v1047, %v613
      %v1060 = vrot.slane %v1048, 6
      %v1061 = vrot.slane %v1049, 6
      %v1062 = vsel %vm102, %v1060, %v1061
      %v1063 = vrot.slane %v1050, 6
      %v1064 = vsel %vm102, %v1061, %v1063
      %v1065 = vrot.slane %v1051, 6
      %v1066 = vrot.slane %v1052, 6
      %v1067 = vsel %vm102, %v1065, %v1066
      %v1068 = vrot.slane %v1053, 6
      %v1069 = vsel %vm102, %v1066, %v1068
      %1070 = vrot.lane.b32.xlu0 %v1062, 127
      %v1071 = vpop.permute.xlu0 %1070
      %1072 = vrot.lane.b32.xlu0 %v1064, 127
      %v1073 = vpop.permute.xlu0 %1072
      %1074 = vrot.lane.b32.xlu0 %v1067, 127
      %v1075 = vpop.permute.xlu0 %1074
      %1076 = vrot.lane.b32.xlu0 %v1069, 127
      %v1077 = vpop.permute.xlu0 %1076
      %v1082 = vadd.f32 %v1042, %v1071
      %v1083 = vadd.f32 %v1043, %v1073
      %v1084 = vadd.f32 %v1044, %v1075
      %v1085 = vadd.f32 %v1045, %v1077
      %s1086 = sld [smem:[#allocation6 + $0x2]]
      %v1087 = vstv %s1086
      %v1088 = vmul.f32 %v1087, %v608
      %v1089 = vmul.f32 %v1087, %v609
      %v1090 = vmul.f32 %v1087, %v611
      %v1091 = vmul.f32 %v1087, %v612
      %1096 = vrot.lane.b32.xlu0 %v1088, 126
      %v1097 = vpop.permute.xlu0 %1096
      %1098 = vrot.lane.b32.xlu0 %v1089, 126
      %v1099 = vpop.permute.xlu0 %1098
      %1100 = vrot.lane.b32.xlu0 %v1090, 126
      %v1101 = vpop.permute.xlu0 %1100
      %1102 = vrot.lane.b32.xlu0 %v1091, 126
      %v1103 = vpop.permute.xlu0 %1102
      %v1108 = vadd.f32 %v1082, %v1097
      %v1109 = vadd.f32 %v1083, %v1099
      %v1110 = vadd.f32 %v1084, %v1101
      %v1111 = vadd.f32 %v1085, %v1103
      %s1112 = sld [smem:[#allocation6 + $0x9]]
      %v1113 = vstv %s1112
      %v1114 = vmul.f32 %v1113, %v608
      %v1115 = vmul.f32 %v1113, %v609
      %v1116 = vmul.f32 %v1113, %v610
      %v1117 = vmul.f32 %v1113, %v611
      %v1118 = vmul.f32 %v1113, %v612
      %v1119 = vmul.f32 %v1113, %v613
      %v1126 = vrot.slane %v1114, 1
      %v1127 = vrot.slane %v1115, 1
      %v1128 = vsel %vm638, %v1126, %v1127
      %v1129 = vrot.slane %v1116, 1
      %v1130 = vsel %vm638, %v1127, %v1129
      %v1131 = vrot.slane %v1117, 1
      %v1132 = vrot.slane %v1118, 1
      %v1133 = vsel %vm638, %v1131, %v1132
      %v1134 = vrot.slane %v1119, 1
      %v1135 = vsel %vm638, %v1132, %v1134
      %1136 = vrot.lane.b32.xlu0 %v1128, 126
      %v1137 = vpop.permute.xlu0 %1136
      %1138 = vrot.lane.b32.xlu0 %v1130, 126
      %v1139 = vpop.permute.xlu0 %1138
      %1140 = vrot.lane.b32.xlu0 %v1133, 126
      %v1141 = vpop.permute.xlu0 %1140
      %1142 = vrot.lane.b32.xlu0 %v1135, 126
      %v1143 = vpop.permute.xlu0 %1142
      %v1148 = vadd.f32 %v1108, %v1137
      %v1149 = vadd.f32 %v1109, %v1139
      %v1150 = vadd.f32 %v1110, %v1141
      %v1151 = vadd.f32 %v1111, %v1143
      %s1152 = sld [smem:[#allocation6 + $0x10]]
      %v1153 = vstv %s1152
      %v1154 = vmul.f32 %v1153, %v608
      %v1155 = vmul.f32 %v1153, %v609
      %v1156 = vmul.f32 %v1153, %v610
      %v1157 = vmul.f32 %v1153, %v611
      %v1158 = vmul.f32 %v1153, %v612
      %v1159 = vmul.f32 %v1153, %v613
      %v1166 = vrot.slane %v1154, 2
      %v1167 = vrot.slane %v1155, 2
      %v1168 = vsel %vm671, %v1166, %v1167
      %v1169 = vrot.slane %v1156, 2
      %v1170 = vsel %vm671, %v1167, %v1169
      %v1171 = vrot.slane %v1157, 2
      %v1172 = vrot.slane %v1158, 2
      %v1173 = vsel %vm671, %v1171, %v1172
      %v1174 = vrot.slane %v1159, 2
      %v1175 = vsel %vm671, %v1172, %v1174
      %1176 = vrot.lane.b32.xlu0 %v1168, 126
      %v1177 = vpop.permute.xlu0 %1176
      %1178 = vrot.lane.b32.xlu0 %v1170, 126
      %v1179 = vpop.permute.xlu0 %1178
      %1180 = vrot.lane.b32.xlu0 %v1173, 126
      %v1181 = vpop.permute.xlu0 %1180
      %1182 = vrot.lane.b32.xlu0 %v1175, 126
      %v1183 = vpop.permute.xlu0 %1182
      %v1188 = vadd.f32 %v1148, %v1177
      %v1189 = vadd.f32 %v1149, %v1179
      %v1190 = vadd.f32 %v1150, %v1181
      %v1191 = vadd.f32 %v1151, %v1183
      %s1192 = sld [smem:[#allocation6 + $0x17]]
      %v1193 = vstv %s1192
      %v1194 = vmul.f32 %v1193, %v608
      %v1195 = vmul.f32 %v1193, %v609
      %v1196 = vmul.f32 %v1193, %v610
      %v1197 = vmul.f32 %v1193, %v611
      %v1198 = vmul.f32 %v1193, %v612
      %v1199 = vmul.f32 %v1193, %v613
      %v1206 = vrot.slane %v1194, 3
      %v1207 = vrot.slane %v1195, 3
      %v1208 = vsel %vm704, %v1206, %v1207
      %v1209 = vrot.slane %v1196, 3
      %v1210 = vsel %vm704, %v1207, %v1209
      %v1211 = vrot.slane %v1197, 3
      %v1212 = vrot.slane %v1198, 3
      %v1213 = vsel %vm704, %v1211, %v1212
      %v1214 = vrot.slane %v1199, 3
      %v1215 = vsel %vm704, %v1212, %v1214
      %1216 = vrot.lane.b32.xlu0 %v1208, 126
      %v1217 = vpop.permute.xlu0 %1216
      %1218 = vrot.lane.b32.xlu0 %v1210, 126
      %v1219 = vpop.permute.xlu0 %1218
      %1220 = vrot.lane.b32.xlu0 %v1213, 126
      %v1221 = vpop.permute.xlu0 %1220
      %1222 = vrot.lane.b32.xlu0 %v1215, 126
      %v1223 = vpop.permute.xlu0 %1222
      %v1228 = vadd.f32 %v1188, %v1217
      %v1229 = vadd.f32 %v1189, %v1219
      %v1230 = vadd.f32 %v1190, %v1221
      %v1231 = vadd.f32 %v1191, %v1223
      %s1232 = sld [smem:[#allocation6 + $0x1e]]
      %v1233 = vstv %s1232
      %v1234 = vmul.f32 %v1233, %v608
      %v1235 = vmul.f32 %v1233, %v609
      %v1236 = vmul.f32 %v1233, %v610
      %v1237 = vmul.f32 %v1233, %v611
      %v1238 = vmul.f32 %v1233, %v612
      %v1239 = vmul.f32 %v1233, %v613
      %v1246 = vrot.slane %v1234, 4
      %v1247 = vrot.slane %v1235, 4
      %v1248 = vsel %vm67, %v1246, %v1247
      %v1249 = vrot.slane %v1236, 4
      %v1250 = vsel %vm67, %v1247, %v1249
      %v1251 = vrot.slane %v1237, 4
      %v1252 = vrot.slane %v1238, 4
      %v1253 = vsel %vm67, %v1251, %v1252
      %v1254 = vrot.slane %v1239, 4
      %v1255 = vsel %vm67, %v1252, %v1254
      %1256 = vrot.lane.b32.xlu0 %v1248, 126
      %v1257 = vpop.permute.xlu0 %1256
      %1258 = vrot.lane.b32.xlu0 %v1250, 126
      %v1259 = vpop.permute.xlu0 %1258
      %1260 = vrot.lane.b32.xlu0 %v1253, 126
      %v1261 = vpop.permute.xlu0 %1260
      %1262 = vrot.lane.b32.xlu0 %v1255, 126
      %v1263 = vpop.permute.xlu0 %1262
      %v1268 = vadd.f32 %v1228, %v1257
      %v1269 = vadd.f32 %v1229, %v1259
      %v1270 = vadd.f32 %v1230, %v1261
      %v1271 = vadd.f32 %v1231, %v1263
      %s1272 = sld [smem:[#allocation6 + $0x25]]
      %v1273 = vstv %s1272
      %v1274 = vmul.f32 %v1273, %v608
      %v1275 = vmul.f32 %v1273, %v609
      %v1276 = vmul.f32 %v1273, %v610
      %v1277 = vmul.f32 %v1273, %v611
      %v1278 = vmul.f32 %v1273, %v612
      %v1279 = vmul.f32 %v1273, %v613
      %v1286 = vrot.slane %v1274, 5
      %v1287 = vrot.slane %v1275, 5
      %v1288 = vsel %vm769, %v1286, %v1287
      %v1289 = vrot.slane %v1276, 5
      %v1290 = vsel %vm769, %v1287, %v1289
      %v1291 = vrot.slane %v1277, 5
      %v1292 = vrot.slane %v1278, 5
      %v1293 = vsel %vm769, %v1291, %v1292
      %v1294 = vrot.slane %v1279, 5
      %v1295 = vsel %vm769, %v1292, %v1294
      %1296 = vrot.lane.b32.xlu0 %v1288, 126
      %v1297 = vpop.permute.xlu0 %1296
      %1298 = vrot.lane.b32.xlu0 %v1290, 126
      %v1299 = vpop.permute.xlu0 %1298
      %1300 = vrot.lane.b32.xlu0 %v1293, 126
      %v1301 = vpop.permute.xlu0 %1300
      %1302 = vrot.lane.b32.xlu0 %v1295, 126
      %v1303 = vpop.permute.xlu0 %1302
      %v1308 = vadd.f32 %v1268, %v1297
      %v1309 = vadd.f32 %v1269, %v1299
      %v1310 = vadd.f32 %v1270, %v1301
      %v1311 = vadd.f32 %v1271, %v1303
      %s1312 = sld [smem:[#allocation6 + $0x2c]]
      %v1313 = vstv %s1312
      %v1314 = vmul.f32 %v1313, %v608
      %v1315 = vmul.f32 %v1313, %v609
      %v1316 = vmul.f32 %v1313, %v610
      %v1317 = vmul.f32 %v1313, %v611
      %v1318 = vmul.f32 %v1313, %v612
      %v1319 = vmul.f32 %v1313, %v613
      %v1326 = vrot.slane %v1314, 6
      %v1327 = vrot.slane %v1315, 6
      %v1328 = vsel %vm102, %v1326, %v1327
      %v1329 = vrot.slane %v1316, 6
      %v1330 = vsel %vm102, %v1327, %v1329
      %v1331 = vrot.slane %v1317, 6
      %v1332 = vrot.slane %v1318, 6
      %v1333 = vsel %vm102, %v1331, %v1332
      %v1334 = vrot.slane %v1319, 6
      %v1335 = vsel %vm102, %v1332, %v1334
      %1336 = vrot.lane.b32.xlu0 %v1328, 126
      %v1337 = vpop.permute.xlu0 %1336
      %1338 = vrot.lane.b32.xlu0 %v1330, 126
      %v1339 = vpop.permute.xlu0 %1338
      %1340 = vrot.lane.b32.xlu0 %v1333, 126
      %v1341 = vpop.permute.xlu0 %1340
      %1342 = vrot.lane.b32.xlu0 %v1335, 126
      %v1343 = vpop.permute.xlu0 %1342
      %v1348 = vadd.f32 %v1308, %v1337
      %v1349 = vadd.f32 %v1309, %v1339
      %v1350 = vadd.f32 %v1310, %v1341
      %v1351 = vadd.f32 %v1311, %v1343
      %s1352 = sld [smem:[#allocation6 + $0x3]]
      %v1353 = vstv %s1352
      %v1354 = vmul.f32 %v1353, %v608
      %v1355 = vmul.f32 %v1353, %v609
      %v1356 = vmul.f32 %v1353, %v611
      %v1357 = vmul.f32 %v1353, %v612
      %1362 = vrot.lane.b32.xlu0 %v1354, 125
      %v1363 = vpop.permute.xlu0 %1362
      %1364 = vrot.lane.b32.xlu0 %v1355, 125
      %v1365 = vpop.permute.xlu0 %1364
      %1366 = vrot.lane.b32.xlu0 %v1356, 125
      %v1367 = vpop.permute.xlu0 %1366
      %1368 = vrot.lane.b32.xlu0 %v1357, 125
      %v1369 = vpop.permute.xlu0 %1368
      %v1374 = vadd.f32 %v1348, %v1363
      %v1375 = vadd.f32 %v1349, %v1365
      %v1376 = vadd.f32 %v1350, %v1367
      %v1377 = vadd.f32 %v1351, %v1369
      %s1378 = sld [smem:[#allocation6 + $0xa]]
      %v1379 = vstv %s1378
      %v1380 = vmul.f32 %v1379, %v608
      %v1381 = vmul.f32 %v1379, %v609
      %v1382 = vmul.f32 %v1379, %v610
      %v1383 = vmul.f32 %v1379, %v611
      %v1384 = vmul.f32 %v1379, %v612
      %v1385 = vmul.f32 %v1379, %v613
      %v1392 = vrot.slane %v1380, 1
      %v1393 = vrot.slane %v1381, 1
      %v1394 = vsel %vm638, %v1392, %v1393
      %v1395 = vrot.slane %v1382, 1
      %v1396 = vsel %vm638, %v1393, %v1395
      %v1397 = vrot.slane %v1383, 1
      %v1398 = vrot.slane %v1384, 1
      %v1399 = vsel %vm638, %v1397, %v1398
      %v1400 = vrot.slane %v1385, 1
      %v1401 = vsel %vm638, %v1398, %v1400
      %1402 = vrot.lane.b32.xlu0 %v1394, 125
      %v1403 = vpop.permute.xlu0 %1402
      %1404 = vrot.lane.b32.xlu0 %v1396, 125
      %v1405 = vpop.permute.xlu0 %1404
      %1406 = vrot.lane.b32.xlu0 %v1399, 125
      %v1407 = vpop.permute.xlu0 %1406
      %1408 = vrot.lane.b32.xlu0 %v1401, 125
      %v1409 = vpop.permute.xlu0 %1408
      %v1414 = vadd.f32 %v1374, %v1403
      %v1415 = vadd.f32 %v1375, %v1405
      %v1416 = vadd.f32 %v1376, %v1407
      %v1417 = vadd.f32 %v1377, %v1409
      %s1418 = sld [smem:[#allocation6 + $0x11]]
      %v1419 = vstv %s1418
      %v1420 = vmul.f32 %v1419, %v608
      %v1421 = vmul.f32 %v1419, %v609
      %v1422 = vmul.f32 %v1419, %v610
      %v1423 = vmul.f32 %v1419, %v611
      %v1424 = vmul.f32 %v1419, %v612
      %v1425 = vmul.f32 %v1419, %v613
      %v1432 = vrot.slane %v1420, 2
      %v1433 = vrot.slane %v1421, 2
      %v1434 = vsel %vm671, %v1432, %v1433
      %v1435 = vrot.slane %v1422, 2
      %v1436 = vsel %vm671, %v1433, %v1435
      %v1437 = vrot.slane %v1423, 2
      %v1438 = vrot.slane %v1424, 2
      %v1439 = vsel %vm671, %v1437, %v1438
      %v1440 = vrot.slane %v1425, 2
      %v1441 = vsel %vm671, %v1438, %v1440
      %1442 = vrot.lane.b32.xlu0 %v1434, 125
      %v1443 = vpop.permute.xlu0 %1442
      %1444 = vrot.lane.b32.xlu0 %v1436, 125
      %v1445 = vpop.permute.xlu0 %1444
      %1446 = vrot.lane.b32.xlu0 %v1439, 125
      %v1447 = vpop.permute.xlu0 %1446
      %1448 = vrot.lane.b32.xlu0 %v1441, 125
      %v1449 = vpop.permute.xlu0 %1448
      %v1454 = vadd.f32 %v1414, %v1443
      %v1455 = vadd.f32 %v1415, %v1445
      %v1456 = vadd.f32 %v1416, %v1447
      %v1457 = vadd.f32 %v1417, %v1449
      %s1458 = sld [smem:[#allocation6 + $0x18]]
      %v1459 = vstv %s1458
      %v1460 = vmul.f32 %v1459, %v608
      %v1461 = vmul.f32 %v1459, %v609
      %v1462 = vmul.f32 %v1459, %v610
      %v1463 = vmul.f32 %v1459, %v611
      %v1464 = vmul.f32 %v1459, %v612
      %v1465 = vmul.f32 %v1459, %v613
      %v1472 = vrot.slane %v1460, 3
      %v1473 = vrot.slane %v1461, 3
      %v1474 = vsel %vm704, %v1472, %v1473
      %v1475 = vrot.slane %v1462, 3
      %v1476 = vsel %vm704, %v1473, %v1475
      %v1477 = vrot.slane %v1463, 3
      %v1478 = vrot.slane %v1464, 3
      %v1479 = vsel %vm704, %v1477, %v1478
      %v1480 = vrot.slane %v1465, 3
      %v1481 = vsel %vm704, %v1478, %v1480
      %1482 = vrot.lane.b32.xlu0 %v1474, 125
      %v1483 = vpop.permute.xlu0 %1482
      %1484 = vrot.lane.b32.xlu0 %v1476, 125
      %v1485 = vpop.permute.xlu0 %1484
      %1486 = vrot.lane.b32.xlu0 %v1479, 125
      %v1487 = vpop.permute.xlu0 %1486
      %1488 = vrot.lane.b32.xlu0 %v1481, 125
      %v1489 = vpop.permute.xlu0 %1488
      %v1494 = vadd.f32 %v1454, %v1483
      %v1495 = vadd.f32 %v1455, %v1485
      %v1496 = vadd.f32 %v1456, %v1487
      %v1497 = vadd.f32 %v1457, %v1489
      %s1498 = sld [smem:[#allocation6 + $0x1f]]
      %v1499 = vstv %s1498
      %v1500 = vmul.f32 %v1499, %v608
      %v1501 = vmul.f32 %v1499, %v609
      %v1502 = vmul.f32 %v1499, %v610
      %v1503 = vmul.f32 %v1499, %v611
      %v1504 = vmul.f32 %v1499, %v612
      %v1505 = vmul.f32 %v1499, %v613
      %v1512 = vrot.slane %v1500, 4
      %v1513 = vrot.slane %v1501, 4
      %v1514 = vsel %vm67, %v1512, %v1513
      %v1515 = vrot.slane %v1502, 4
      %v1516 = vsel %vm67, %v1513, %v1515
      %v1517 = vrot.slane %v1503, 4
      %v1518 = vrot.slane %v1504, 4
      %v1519 = vsel %vm67, %v1517, %v1518
      %v1520 = vrot.slane %v1505, 4
      %v1521 = vsel %vm67, %v1518, %v1520
      %1522 = vrot.lane.b32.xlu0 %v1514, 125
      %v1523 = vpop.permute.xlu0 %1522
      %1524 = vrot.lane.b32.xlu0 %v1516, 125
      %v1525 = vpop.permute.xlu0 %1524
      %1526 = vrot.lane.b32.xlu0 %v1519, 125
      %v1527 = vpop.permute.xlu0 %1526
      %1528 = vrot.lane.b32.xlu0 %v1521, 125
      %v1529 = vpop.permute.xlu0 %1528
      %v1534 = vadd.f32 %v1494, %v1523
      %v1535 = vadd.f32 %v1495, %v1525
      %v1536 = vadd.f32 %v1496, %v1527
      %v1537 = vadd.f32 %v1497, %v1529
      %s1538 = sld [smem:[#allocation6 + $0x26]]
      %v1539 = vstv %s1538
      %v1540 = vmul.f32 %v1539, %v608
      %v1541 = vmul.f32 %v1539, %v609
      %v1542 = vmul.f32 %v1539, %v610
      %v1543 = vmul.f32 %v1539, %v611
      %v1544 = vmul.f32 %v1539, %v612
      %v1545 = vmul.f32 %v1539, %v613
      %v1552 = vrot.slane %v1540, 5
      %v1553 = vrot.slane %v1541, 5
      %v1554 = vsel %vm769, %v1552, %v1553
      %v1555 = vrot.slane %v1542, 5
      %v1556 = vsel %vm769, %v1553, %v1555
      %v1557 = vrot.slane %v1543, 5
      %v1558 = vrot.slane %v1544, 5
      %v1559 = vsel %vm769, %v1557, %v1558
      %v1560 = vrot.slane %v1545, 5
      %v1561 = vsel %vm769, %v1558, %v1560
      %1562 = vrot.lane.b32.xlu0 %v1554, 125
      %v1563 = vpop.permute.xlu0 %1562
      %1564 = vrot.lane.b32.xlu0 %v1556, 125
      %v1565 = vpop.permute.xlu0 %1564
      %1566 = vrot.lane.b32.xlu0 %v1559, 125
      %v1567 = vpop.permute.xlu0 %1566
      %1568 = vrot.lane.b32.xlu0 %v1561, 125
      %v1569 = vpop.permute.xlu0 %1568
      %v1574 = vadd.f32 %v1534, %v1563
      %v1575 = vadd.f32 %v1535, %v1565
      %v1576 = vadd.f32 %v1536, %v1567
      %v1577 = vadd.f32 %v1537, %v1569
      %s1578 = sld [smem:[#allocation6 + $0x2d]]
      %v1579 = vstv %s1578
      %v1580 = vmul.f32 %v1579, %v608
      %v1581 = vmul.f32 %v1579, %v609
      %v1582 = vmul.f32 %v1579, %v610
      %v1583 = vmul.f32 %v1579, %v611
      %v1584 = vmul.f32 %v1579, %v612
      %v1585 = vmul.f32 %v1579, %v613
      %v1592 = vrot.slane %v1580, 6
      %v1593 = vrot.slane %v1581, 6
      %v1594 = vsel %vm102, %v1592, %v1593
      %v1595 = vrot.slane %v1582, 6
      %v1596 = vsel %vm102, %v1593, %v1595
      %v1597 = vrot.slane %v1583, 6
      %v1598 = vrot.slane %v1584, 6
      %v1599 = vsel %vm102, %v1597, %v1598
      %v1600 = vrot.slane %v1585, 6
      %v1601 = vsel %vm102, %v1598, %v1600
      %1602 = vrot.lane.b32.xlu0 %v1594, 125
      %v1603 = vpop.permute.xlu0 %1602
      %1604 = vrot.lane.b32.xlu0 %v1596, 125
      %v1605 = vpop.permute.xlu0 %1604
      %1606 = vrot.lane.b32.xlu0 %v1599, 125
      %v1607 = vpop.permute.xlu0 %1606
      %1608 = vrot.lane.b32.xlu0 %v1601, 125
      %v1609 = vpop.permute.xlu0 %1608
      %v1614 = vadd.f32 %v1574, %v1603
      %v1615 = vadd.f32 %v1575, %v1605
      %v1616 = vadd.f32 %v1576, %v1607
      %v1617 = vadd.f32 %v1577, %v1609
      %s1618 = sld [smem:[#allocation6 + $0x4]]
      %v1619 = vstv %s1618
      %v1620 = vmul.f32 %v1619, %v608
      %v1621 = vmul.f32 %v1619, %v609
      %v1622 = vmul.f32 %v1619, %v611
      %v1623 = vmul.f32 %v1619, %v612
      %1628 = vrot.lane.b32.xlu0 %v1620, 124
      %v1629 = vpop.permute.xlu0 %1628
      %1630 = vrot.lane.b32.xlu0 %v1621, 124
      %v1631 = vpop.permute.xlu0 %1630
      %1632 = vrot.lane.b32.xlu0 %v1622, 124
      %v1633 = vpop.permute.xlu0 %1632
      %1634 = vrot.lane.b32.xlu0 %v1623, 124
      %v1635 = vpop.permute.xlu0 %1634
      %v1640 = vadd.f32 %v1614, %v1629
      %v1641 = vadd.f32 %v1615, %v1631
      %v1642 = vadd.f32 %v1616, %v1633
      %v1643 = vadd.f32 %v1617, %v1635
      %s1644 = sld [smem:[#allocation6 + $0xb]]
      %v1645 = vstv %s1644
      %v1646 = vmul.f32 %v1645, %v608
      %v1647 = vmul.f32 %v1645, %v609
      %v1648 = vmul.f32 %v1645, %v610
      %v1649 = vmul.f32 %v1645, %v611
      %v1650 = vmul.f32 %v1645, %v612
      %v1651 = vmul.f32 %v1645, %v613
      %v1658 = vrot.slane %v1646, 1
      %v1659 = vrot.slane %v1647, 1
      %v1660 = vsel %vm638, %v1658, %v1659
      %v1661 = vrot.slane %v1648, 1
      %v1662 = vsel %vm638, %v1659, %v1661
      %v1663 = vrot.slane %v1649, 1
      %v1664 = vrot.slane %v1650, 1
      %v1665 = vsel %vm638, %v1663, %v1664
      %v1666 = vrot.slane %v1651, 1
      %v1667 = vsel %vm638, %v1664, %v1666
      %1668 = vrot.lane.b32.xlu0 %v1660, 124
      %v1669 = vpop.permute.xlu0 %1668
      %1670 = vrot.lane.b32.xlu0 %v1662, 124
      %v1671 = vpop.permute.xlu0 %1670
      %1672 = vrot.lane.b32.xlu0 %v1665, 124
      %v1673 = vpop.permute.xlu0 %1672
      %1674 = vrot.lane.b32.xlu0 %v1667, 124
      %v1675 = vpop.permute.xlu0 %1674
      %v1680 = vadd.f32 %v1640, %v1669
      %v1681 = vadd.f32 %v1641, %v1671
      %v1682 = vadd.f32 %v1642, %v1673
      %v1683 = vadd.f32 %v1643, %v1675
      %s1684 = sld [smem:[#allocation6 + $0x12]]
      %v1685 = vstv %s1684
      %v1686 = vmul.f32 %v1685, %v608
      %v1687 = vmul.f32 %v1685, %v609
      %v1688 = vmul.f32 %v1685, %v610
      %v1689 = vmul.f32 %v1685, %v611
      %v1690 = vmul.f32 %v1685, %v612
      %v1691 = vmul.f32 %v1685, %v613
      %v1698 = vrot.slane %v1686, 2
      %v1699 = vrot.slane %v1687, 2
      %v1700 = vsel %vm671, %v1698, %v1699
      %v1701 = vrot.slane %v1688, 2
      %v1702 = vsel %vm671, %v1699, %v1701
      %v1703 = vrot.slane %v1689, 2
      %v1704 = vrot.slane %v1690, 2
      %v1705 = vsel %vm671, %v1703, %v1704
      %v1706 = vrot.slane %v1691, 2
      %v1707 = vsel %vm671, %v1704, %v1706
      %1708 = vrot.lane.b32.xlu0 %v1700, 124
      %v1709 = vpop.permute.xlu0 %1708
      %1710 = vrot.lane.b32.xlu0 %v1702, 124
      %v1711 = vpop.permute.xlu0 %1710
      %1712 = vrot.lane.b32.xlu0 %v1705, 124
      %v1713 = vpop.permute.xlu0 %1712
      %1714 = vrot.lane.b32.xlu0 %v1707, 124
      %v1715 = vpop.permute.xlu0 %1714
      %v1720 = vadd.f32 %v1680, %v1709
      %v1721 = vadd.f32 %v1681, %v1711
      %v1722 = vadd.f32 %v1682, %v1713
      %v1723 = vadd.f32 %v1683, %v1715
      %s1724 = sld [smem:[#allocation6 + $0x19]]
      %v1725 = vstv %s1724
      %v1726 = vmul.f32 %v1725, %v608
      %v1727 = vmul.f32 %v1725, %v609
      %v1728 = vmul.f32 %v1725, %v610
      %v1729 = vmul.f32 %v1725, %v611
      %v1730 = vmul.f32 %v1725, %v612
      %v1731 = vmul.f32 %v1725, %v613
      %v1738 = vrot.slane %v1726, 3
      %v1739 = vrot.slane %v1727, 3
      %v1740 = vsel %vm704, %v1738, %v1739
      %v1741 = vrot.slane %v1728, 3
      %v1742 = vsel %vm704, %v1739, %v1741
      %v1743 = vrot.slane %v1729, 3
      %v1744 = vrot.slane %v1730, 3
      %v1745 = vsel %vm704, %v1743, %v1744
      %v1746 = vrot.slane %v1731, 3
      %v1747 = vsel %vm704, %v1744, %v1746
      %1748 = vrot.lane.b32.xlu0 %v1740, 124
      %v1749 = vpop.permute.xlu0 %1748
      %1750 = vrot.lane.b32.xlu0 %v1742, 124
      %v1751 = vpop.permute.xlu0 %1750
      %1752 = vrot.lane.b32.xlu0 %v1745, 124
      %v1753 = vpop.permute.xlu0 %1752
      %1754 = vrot.lane.b32.xlu0 %v1747, 124
      %v1755 = vpop.permute.xlu0 %1754
      %v1760 = vadd.f32 %v1720, %v1749
      %v1761 = vadd.f32 %v1721, %v1751
      %v1762 = vadd.f32 %v1722, %v1753
      %v1763 = vadd.f32 %v1723, %v1755
      %s1764 = sld [smem:[#allocation6 + $0x20]]
      %v1765 = vstv %s1764
      %v1766 = vmul.f32 %v1765, %v608
      %v1767 = vmul.f32 %v1765, %v609
      %v1768 = vmul.f32 %v1765, %v610
      %v1769 = vmul.f32 %v1765, %v611
      %v1770 = vmul.f32 %v1765, %v612
      %v1771 = vmul.f32 %v1765, %v613
      %v1778 = vrot.slane %v1766, 4
      %v1779 = vrot.slane %v1767, 4
      %v1780 = vsel %vm67, %v1778, %v1779
      %v1781 = vrot.slane %v1768, 4
      %v1782 = vsel %vm67, %v1779, %v1781
      %v1783 = vrot.slane %v1769, 4
      %v1784 = vrot.slane %v1770, 4
      %v1785 = vsel %vm67, %v1783, %v1784
      %v1786 = vrot.slane %v1771, 4
      %v1787 = vsel %vm67, %v1784, %v1786
      %1788 = vrot.lane.b32.xlu0 %v1780, 124
      %v1789 = vpop.permute.xlu0 %1788
      %1790 = vrot.lane.b32.xlu0 %v1782, 124
      %v1791 = vpop.permute.xlu0 %1790
      %1792 = vrot.lane.b32.xlu0 %v1785, 124
      %v1793 = vpop.permute.xlu0 %1792
      %1794 = vrot.lane.b32.xlu0 %v1787, 124
      %v1795 = vpop.permute.xlu0 %1794
      %v1800 = vadd.f32 %v1760, %v1789
      %v1801 = vadd.f32 %v1761, %v1791
      %v1802 = vadd.f32 %v1762, %v1793
      %v1803 = vadd.f32 %v1763, %v1795
      %s1804 = sld [smem:[#allocation6 + $0x27]]
      %v1805 = vstv %s1804
      %v1806 = vmul.f32 %v1805, %v608
      %v1807 = vmul.f32 %v1805, %v609
      %v1808 = vmul.f32 %v1805, %v610
      %v1809 = vmul.f32 %v1805, %v611
      %v1810 = vmul.f32 %v1805, %v612
      %v1811 = vmul.f32 %v1805, %v613
      %v1818 = vrot.slane %v1806, 5
      %v1819 = vrot.slane %v1807, 5
      %v1820 = vsel %vm769, %v1818, %v1819
      %v1821 = vrot.slane %v1808, 5
      %v1822 = vsel %vm769, %v1819, %v1821
      %v1823 = vrot.slane %v1809, 5
      %v1824 = vrot.slane %v1810, 5
      %v1825 = vsel %vm769, %v1823, %v1824
      %v1826 = vrot.slane %v1811, 5
      %v1827 = vsel %vm769, %v1824, %v1826
      %1828 = vrot.lane.b32.xlu0 %v1820, 124
      %v1829 = vpop.permute.xlu0 %1828
      %1830 = vrot.lane.b32.xlu0 %v1822, 124
      %v1831 = vpop.permute.xlu0 %1830
      %1832 = vrot.lane.b32.xlu0 %v1825, 124
      %v1833 = vpop.permute.xlu0 %1832
      %1834 = vrot.lane.b32.xlu0 %v1827, 124
      %v1835 = vpop.permute.xlu0 %1834
      %v1840 = vadd.f32 %v1800, %v1829
      %v1841 = vadd.f32 %v1801, %v1831
      %v1842 = vadd.f32 %v1802, %v1833
      %v1843 = vadd.f32 %v1803, %v1835
      %s1844 = sld [smem:[#allocation6 + $0x2e]]
      %v1845 = vstv %s1844
      %v1846 = vmul.f32 %v1845, %v608
      %v1847 = vmul.f32 %v1845, %v609
      %v1848 = vmul.f32 %v1845, %v610
      %v1849 = vmul.f32 %v1845, %v611
      %v1850 = vmul.f32 %v1845, %v612
      %v1851 = vmul.f32 %v1845, %v613
      %v1858 = vrot.slane %v1846, 6
      %v1859 = vrot.slane %v1847, 6
      %v1860 = vsel %vm102, %v1858, %v1859
      %v1861 = vrot.slane %v1848, 6
      %v1862 = vsel %vm102, %v1859, %v1861
      %v1863 = vrot.slane %v1849, 6
      %v1864 = vrot.slane %v1850, 6
      %v1865 = vsel %vm102, %v1863, %v1864
      %v1866 = vrot.slane %v1851, 6
      %v1867 = vsel %vm102, %v1864, %v1866
      %1868 = vrot.lane.b32.xlu0 %v1860, 124
      %v1869 = vpop.permute.xlu0 %1868
      %1870 = vrot.lane.b32.xlu0 %v1862, 124
      %v1871 = vpop.permute.xlu0 %1870
      %1872 = vrot.lane.b32.xlu0 %v1865, 124
      %v1873 = vpop.permute.xlu0 %1872
      %1874 = vrot.lane.b32.xlu0 %v1867, 124
      %v1875 = vpop.permute.xlu0 %1874
      %v1880 = vadd.f32 %v1840, %v1869
      %v1881 = vadd.f32 %v1841, %v1871
      %v1882 = vadd.f32 %v1842, %v1873
      %v1883 = vadd.f32 %v1843, %v1875
      %s1884 = sld [smem:[#allocation6 + $0x5]]
      %v1885 = vstv %s1884
      %v1886 = vmul.f32 %v1885, %v608
      %v1887 = vmul.f32 %v1885, %v609
      %v1888 = vmul.f32 %v1885, %v611
      %v1889 = vmul.f32 %v1885, %v612
      %1894 = vrot.lane.b32.xlu0 %v1886, 123
      %v1895 = vpop.permute.xlu0 %1894
      %1896 = vrot.lane.b32.xlu0 %v1887, 123
      %v1897 = vpop.permute.xlu0 %1896
      %1898 = vrot.lane.b32.xlu0 %v1888, 123
      %v1899 = vpop.permute.xlu0 %1898
      %1900 = vrot.lane.b32.xlu0 %v1889, 123
      %v1901 = vpop.permute.xlu0 %1900
      %v1906 = vadd.f32 %v1880, %v1895
      %v1907 = vadd.f32 %v1881, %v1897
      %v1908 = vadd.f32 %v1882, %v1899
      %v1909 = vadd.f32 %v1883, %v1901
      %s1910 = sld [smem:[#allocation6 + $0xc]]
      %v1911 = vstv %s1910
      %v1912 = vmul.f32 %v1911, %v608
      %v1913 = vmul.f32 %v1911, %v609
      %v1914 = vmul.f32 %v1911, %v610
      %v1915 = vmul.f32 %v1911, %v611
      %v1916 = vmul.f32 %v1911, %v612
      %v1917 = vmul.f32 %v1911, %v613
      %v1924 = vrot.slane %v1912, 1
      %v1925 = vrot.slane %v1913, 1
      %v1926 = vsel %vm638, %v1924, %v1925
      %v1927 = vrot.slane %v1914, 1
      %v1928 = vsel %vm638, %v1925, %v1927
      %v1929 = vrot.slane %v1915, 1
      %v1930 = vrot.slane %v1916, 1
      %v1931 = vsel %vm638, %v1929, %v1930
      %v1932 = vrot.slane %v1917, 1
      %v1933 = vsel %vm638, %v1930, %v1932
      %1934 = vrot.lane.b32.xlu0 %v1926, 123
      %v1935 = vpop.permute.xlu0 %1934
      %1936 = vrot.lane.b32.xlu0 %v1928, 123
      %v1937 = vpop.permute.xlu0 %1936
      %1938 = vrot.lane.b32.xlu0 %v1931, 123
      %v1939 = vpop.permute.xlu0 %1938
      %1940 = vrot.lane.b32.xlu0 %v1933, 123
      %v1941 = vpop.permute.xlu0 %1940
      %v1946 = vadd.f32 %v1906, %v1935
      %v1947 = vadd.f32 %v1907, %v1937
      %v1948 = vadd.f32 %v1908, %v1939
      %v1949 = vadd.f32 %v1909, %v1941
      %s1950 = sld [smem:[#allocation6 + $0x13]]
      %v1951 = vstv %s1950
      %v1952 = vmul.f32 %v1951, %v608
      %v1953 = vmul.f32 %v1951, %v609
      %v1954 = vmul.f32 %v1951, %v610
      %v1955 = vmul.f32 %v1951, %v611
      %v1956 = vmul.f32 %v1951, %v612
      %v1957 = vmul.f32 %v1951, %v613
      %v1964 = vrot.slane %v1952, 2
      %v1965 = vrot.slane %v1953, 2
      %v1966 = vsel %vm671, %v1964, %v1965
      %v1967 = vrot.slane %v1954, 2
      %v1968 = vsel %vm671, %v1965, %v1967
      %v1969 = vrot.slane %v1955, 2
      %v1970 = vrot.slane %v1956, 2
      %v1971 = vsel %vm671, %v1969, %v1970
      %v1972 = vrot.slane %v1957, 2
      %v1973 = vsel %vm671, %v1970, %v1972
      %1974 = vrot.lane.b32.xlu0 %v1966, 123
      %v1975 = vpop.permute.xlu0 %1974
      %1976 = vrot.lane.b32.xlu0 %v1968, 123
      %v1977 = vpop.permute.xlu0 %1976
      %1978 = vrot.lane.b32.xlu0 %v1971, 123
      %v1979 = vpop.permute.xlu0 %1978
      %1980 = vrot.lane.b32.xlu0 %v1973, 123
      %v1981 = vpop.permute.xlu0 %1980
      %v1986 = vadd.f32 %v1946, %v1975
      %v1987 = vadd.f32 %v1947, %v1977
      %v1988 = vadd.f32 %v1948, %v1979
      %v1989 = vadd.f32 %v1949, %v1981
      %s1990 = sld [smem:[#allocation6 + $0x1a]]
      %v1991 = vstv %s1990
      %v1992 = vmul.f32 %v1991, %v608
      %v1993 = vmul.f32 %v1991, %v609
      %v1994 = vmul.f32 %v1991, %v610
      %v1995 = vmul.f32 %v1991, %v611
      %v1996 = vmul.f32 %v1991, %v612
      %v1997 = vmul.f32 %v1991, %v613
      %v2004 = vrot.slane %v1992, 3
      %v2005 = vrot.slane %v1993, 3
      %v2006 = vsel %vm704, %v2004, %v2005
      %v2007 = vrot.slane %v1994, 3
      %v2008 = vsel %vm704, %v2005, %v2007
      %v2009 = vrot.slane %v1995, 3
      %v2010 = vrot.slane %v1996, 3
      %v2011 = vsel %vm704, %v2009, %v2010
      %v2012 = vrot.slane %v1997, 3
      %v2013 = vsel %vm704, %v2010, %v2012
      %2014 = vrot.lane.b32.xlu0 %v2006, 123
      %v2015 = vpop.permute.xlu0 %2014
      %2016 = vrot.lane.b32.xlu0 %v2008, 123
      %v2017 = vpop.permute.xlu0 %2016
      %2018 = vrot.lane.b32.xlu0 %v2011, 123
      %v2019 = vpop.permute.xlu0 %2018
      %2020 = vrot.lane.b32.xlu0 %v2013, 123
      %v2021 = vpop.permute.xlu0 %2020
      %v2026 = vadd.f32 %v1986, %v2015
      %v2027 = vadd.f32 %v1987, %v2017
      %v2028 = vadd.f32 %v1988, %v2019
      %v2029 = vadd.f32 %v1989, %v2021
      %s2030 = sld [smem:[#allocation6 + $0x21]]
      %v2031 = vstv %s2030
      %v2032 = vmul.f32 %v2031, %v608
      %v2033 = vmul.f32 %v2031, %v609
      %v2034 = vmul.f32 %v2031, %v610
      %v2035 = vmul.f32 %v2031, %v611
      %v2036 = vmul.f32 %v2031, %v612
      %v2037 = vmul.f32 %v2031, %v613
      %v2044 = vrot.slane %v2032, 4
      %v2045 = vrot.slane %v2033, 4
      %v2046 = vsel %vm67, %v2044, %v2045
      %v2047 = vrot.slane %v2034, 4
      %v2048 = vsel %vm67, %v2045, %v2047
      %v2049 = vrot.slane %v2035, 4
      %v2050 = vrot.slane %v2036, 4
      %v2051 = vsel %vm67, %v2049, %v2050
      %v2052 = vrot.slane %v2037, 4
      %v2053 = vsel %vm67, %v2050, %v2052
      %2054 = vrot.lane.b32.xlu0 %v2046, 123
      %v2055 = vpop.permute.xlu0 %2054
      %2056 = vrot.lane.b32.xlu0 %v2048, 123
      %v2057 = vpop.permute.xlu0 %2056
      %2058 = vrot.lane.b32.xlu0 %v2051, 123
      %v2059 = vpop.permute.xlu0 %2058
      %2060 = vrot.lane.b32.xlu0 %v2053, 123
      %v2061 = vpop.permute.xlu0 %2060
      %v2066 = vadd.f32 %v2026, %v2055
      %v2067 = vadd.f32 %v2027, %v2057
      %v2068 = vadd.f32 %v2028, %v2059
      %v2069 = vadd.f32 %v2029, %v2061
      %s2070 = sld [smem:[#allocation6 + $0x28]]
      %v2071 = vstv %s2070
      %v2072 = vmul.f32 %v2071, %v608
      %v2073 = vmul.f32 %v2071, %v609
      %v2074 = vmul.f32 %v2071, %v610
      %v2075 = vmul.f32 %v2071, %v611
      %v2076 = vmul.f32 %v2071, %v612
      %v2077 = vmul.f32 %v2071, %v613
      %v2084 = vrot.slane %v2072, 5
      %v2085 = vrot.slane %v2073, 5
      %v2086 = vsel %vm769, %v2084, %v2085
      %v2087 = vrot.slane %v2074, 5
      %v2088 = vsel %vm769, %v2085, %v2087
      %v2089 = vrot.slane %v2075, 5
      %v2090 = vrot.slane %v2076, 5
      %v2091 = vsel %vm769, %v2089, %v2090
      %v2092 = vrot.slane %v2077, 5
      %v2093 = vsel %vm769, %v2090, %v2092
      %2094 = vrot.lane.b32.xlu0 %v2086, 123
      %v2095 = vpop.permute.xlu0 %2094
      %2096 = vrot.lane.b32.xlu0 %v2088, 123
      %v2097 = vpop.permute.xlu0 %2096
      %2098 = vrot.lane.b32.xlu0 %v2091, 123
      %v2099 = vpop.permute.xlu0 %2098
      %2100 = vrot.lane.b32.xlu0 %v2093, 123
      %v2101 = vpop.permute.xlu0 %2100
      %v2106 = vadd.f32 %v2066, %v2095
      %v2107 = vadd.f32 %v2067, %v2097
      %v2108 = vadd.f32 %v2068, %v2099
      %v2109 = vadd.f32 %v2069, %v2101
      %s2110 = sld [smem:[#allocation6 + $0x2f]]
      %v2111 = vstv %s2110
      %v2112 = vmul.f32 %v2111, %v608
      %v2113 = vmul.f32 %v2111, %v609
      %v2114 = vmul.f32 %v2111, %v610
      %v2115 = vmul.f32 %v2111, %v611
      %v2116 = vmul.f32 %v2111, %v612
      %v2117 = vmul.f32 %v2111, %v613
      %v2124 = vrot.slane %v2112, 6
      %v2125 = vrot.slane %v2113, 6
      %v2126 = vsel %vm102, %v2124, %v2125
      %v2127 = vrot.slane %v2114, 6
      %v2128 = vsel %vm102, %v2125, %v2127
      %v2129 = vrot.slane %v2115, 6
      %v2130 = vrot.slane %v2116, 6
      %v2131 = vsel %vm102, %v2129, %v2130
      %v2132 = vrot.slane %v2117, 6
      %v2133 = vsel %vm102, %v2130, %v2132
      %2134 = vrot.lane.b32.xlu0 %v2126, 123
      %v2135 = vpop.permute.xlu0 %2134
      %2136 = vrot.lane.b32.xlu0 %v2128, 123
      %v2137 = vpop.permute.xlu0 %2136
      %2138 = vrot.lane.b32.xlu0 %v2131, 123
      %v2139 = vpop.permute.xlu0 %2138
      %2140 = vrot.lane.b32.xlu0 %v2133, 123
      %v2141 = vpop.permute.xlu0 %2140
      %v2146 = vadd.f32 %v2106, %v2135
      %v2147 = vadd.f32 %v2107, %v2137
      %v2148 = vadd.f32 %v2108, %v2139
      %v2149 = vadd.f32 %v2109, %v2141
      %s2150 = sld [smem:[#allocation6 + $0x6]]
      %v2151 = vstv %s2150
      %v2152 = vmul.f32 %v2151, %v608
      %v2153 = vmul.f32 %v2151, %v609
      %v2154 = vmul.f32 %v2151, %v611
      %v2155 = vmul.f32 %v2151, %v612
      %2160 = vrot.lane.b32.xlu0 %v2152, 122
      %v2161 = vpop.permute.xlu0 %2160
      %2162 = vrot.lane.b32.xlu0 %v2153, 122
      %v2163 = vpop.permute.xlu0 %2162
      %2164 = vrot.lane.b32.xlu0 %v2154, 122
      %v2165 = vpop.permute.xlu0 %2164
      %2166 = vrot.lane.b32.xlu0 %v2155, 122
      %v2167 = vpop.permute.xlu0 %2166
      %v2172 = vadd.f32 %v2146, %v2161
      %v2173 = vadd.f32 %v2147, %v2163
      %v2174 = vadd.f32 %v2148, %v2165
      %v2175 = vadd.f32 %v2149, %v2167
      %s2176 = sld [smem:[#allocation6 + $0xd]]
      %v2177 = vstv %s2176
      %v2178 = vmul.f32 %v2177, %v608
      %v2179 = vmul.f32 %v2177, %v609
      %v2180 = vmul.f32 %v2177, %v610
      %v2181 = vmul.f32 %v2177, %v611
      %v2182 = vmul.f32 %v2177, %v612
      %v2183 = vmul.f32 %v2177, %v613
      %v2190 = vrot.slane %v2178, 1
      %v2191 = vrot.slane %v2179, 1
      %v2192 = vsel %vm638, %v2190, %v2191
      %v2193 = vrot.slane %v2180, 1
      %v2194 = vsel %vm638, %v2191, %v2193
      %v2195 = vrot.slane %v2181, 1
      %v2196 = vrot.slane %v2182, 1
      %v2197 = vsel %vm638, %v2195, %v2196
      %v2198 = vrot.slane %v2183, 1
      %v2199 = vsel %vm638, %v2196, %v2198
      %2200 = vrot.lane.b32.xlu0 %v2192, 122
      %v2201 = vpop.permute.xlu0 %2200
      %2202 = vrot.lane.b32.xlu0 %v2194, 122
      %v2203 = vpop.permute.xlu0 %2202
      %2204 = vrot.lane.b32.xlu0 %v2197, 122
      %v2205 = vpop.permute.xlu0 %2204
      %2206 = vrot.lane.b32.xlu0 %v2199, 122
      %v2207 = vpop.permute.xlu0 %2206
      %v2212 = vadd.f32 %v2172, %v2201
      %v2213 = vadd.f32 %v2173, %v2203
      %v2214 = vadd.f32 %v2174, %v2205
      %v2215 = vadd.f32 %v2175, %v2207
      %s2216 = sld [smem:[#allocation6 + $0x14]]
      %v2217 = vstv %s2216
      %v2218 = vmul.f32 %v2217, %v608
      %v2219 = vmul.f32 %v2217, %v609
      %v2220 = vmul.f32 %v2217, %v610
      %v2221 = vmul.f32 %v2217, %v611
      %v2222 = vmul.f32 %v2217, %v612
      %v2223 = vmul.f32 %v2217, %v613
      %v2230 = vrot.slane %v2218, 2
      %v2231 = vrot.slane %v2219, 2
      %v2232 = vsel %vm671, %v2230, %v2231
      %v2233 = vrot.slane %v2220, 2
      %v2234 = vsel %vm671, %v2231, %v2233
      %v2235 = vrot.slane %v2221, 2
      %v2236 = vrot.slane %v2222, 2
      %v2237 = vsel %vm671, %v2235, %v2236
      %v2238 = vrot.slane %v2223, 2
      %v2239 = vsel %vm671, %v2236, %v2238
      %2240 = vrot.lane.b32.xlu0 %v2232, 122
      %v2241 = vpop.permute.xlu0 %2240
      %2242 = vrot.lane.b32.xlu0 %v2234, 122
      %v2243 = vpop.permute.xlu0 %2242
      %2244 = vrot.lane.b32.xlu0 %v2237, 122
      %v2245 = vpop.permute.xlu0 %2244
      %2246 = vrot.lane.b32.xlu0 %v2239, 122
      %v2247 = vpop.permute.xlu0 %2246
      %v2252 = vadd.f32 %v2212, %v2241
      %v2253 = vadd.f32 %v2213, %v2243
      %v2254 = vadd.f32 %v2214, %v2245
      %v2255 = vadd.f32 %v2215, %v2247
      %s2256 = sld [smem:[#allocation6 + $0x1b]]
      %v2257 = vstv %s2256
      %v2258 = vmul.f32 %v2257, %v608
      %v2259 = vmul.f32 %v2257, %v609
      %v2260 = vmul.f32 %v2257, %v610
      %v2261 = vmul.f32 %v2257, %v611
      %v2262 = vmul.f32 %v2257, %v612
      %v2263 = vmul.f32 %v2257, %v613
      %v2270 = vrot.slane %v2258, 3
      %v2271 = vrot.slane %v2259, 3
      %v2272 = vsel %vm704, %v2270, %v2271
      %v2273 = vrot.slane %v2260, 3
      %v2274 = vsel %vm704, %v2271, %v2273
      %v2275 = vrot.slane %v2261, 3
      %v2276 = vrot.slane %v2262, 3
      %v2277 = vsel %vm704, %v2275, %v2276
      %v2278 = vrot.slane %v2263, 3
      %v2279 = vsel %vm704, %v2276, %v2278
      %2280 = vrot.lane.b32.xlu0 %v2272, 122
      %v2281 = vpop.permute.xlu0 %2280
      %2282 = vrot.lane.b32.xlu0 %v2274, 122
      %v2283 = vpop.permute.xlu0 %2282
      %2284 = vrot.lane.b32.xlu0 %v2277, 122
      %v2285 = vpop.permute.xlu0 %2284
      %2286 = vrot.lane.b32.xlu0 %v2279, 122
      %v2287 = vpop.permute.xlu0 %2286
      %v2292 = vadd.f32 %v2252, %v2281
      %v2293 = vadd.f32 %v2253, %v2283
      %v2294 = vadd.f32 %v2254, %v2285
      %v2295 = vadd.f32 %v2255, %v2287
      %s2296 = sld [smem:[#allocation6 + $0x22]]
      %v2297 = vstv %s2296
      %v2298 = vmul.f32 %v2297, %v608
      %v2299 = vmul.f32 %v2297, %v609
      %v2300 = vmul.f32 %v2297, %v610
      %v2301 = vmul.f32 %v2297, %v611
      %v2302 = vmul.f32 %v2297, %v612
      %v2303 = vmul.f32 %v2297, %v613
      %v2310 = vrot.slane %v2298, 4
      %v2311 = vrot.slane %v2299, 4
      %v2312 = vsel %vm67, %v2310, %v2311
      %v2313 = vrot.slane %v2300, 4
      %v2314 = vsel %vm67, %v2311, %v2313
      %v2315 = vrot.slane %v2301, 4
      %v2316 = vrot.slane %v2302, 4
      %v2317 = vsel %vm67, %v2315, %v2316
      %v2318 = vrot.slane %v2303, 4
      %v2319 = vsel %vm67, %v2316, %v2318
      %2320 = vrot.lane.b32.xlu0 %v2312, 122
      %v2321 = vpop.permute.xlu0 %2320
      %2322 = vrot.lane.b32.xlu0 %v2314, 122
      %v2323 = vpop.permute.xlu0 %2322
      %2324 = vrot.lane.b32.xlu0 %v2317, 122
      %v2325 = vpop.permute.xlu0 %2324
      %2326 = vrot.lane.b32.xlu0 %v2319, 122
      %v2327 = vpop.permute.xlu0 %2326
      %v2332 = vadd.f32 %v2292, %v2321
      %v2333 = vadd.f32 %v2293, %v2323
      %v2334 = vadd.f32 %v2294, %v2325
      %v2335 = vadd.f32 %v2295, %v2327
      %s2336 = sld [smem:[#allocation6 + $0x29]]
      %v2337 = vstv %s2336
      %v2338 = vmul.f32 %v2337, %v608
      %v2339 = vmul.f32 %v2337, %v609
      %v2340 = vmul.f32 %v2337, %v610
      %v2341 = vmul.f32 %v2337, %v611
      %v2342 = vmul.f32 %v2337, %v612
      %v2343 = vmul.f32 %v2337, %v613
      %v2350 = vrot.slane %v2338, 5
      %v2351 = vrot.slane %v2339, 5
      %v2352 = vsel %vm769, %v2350, %v2351
      %v2353 = vrot.slane %v2340, 5
      %v2354 = vsel %vm769, %v2351, %v2353
      %v2355 = vrot.slane %v2341, 5
      %v2356 = vrot.slane %v2342, 5
      %v2357 = vsel %vm769, %v2355, %v2356
      %v2358 = vrot.slane %v2343, 5
      %v2359 = vsel %vm769, %v2356, %v2358
      %2360 = vrot.lane.b32.xlu0 %v2352, 122
      %v2361 = vpop.permute.xlu0 %2360
      %2362 = vrot.lane.b32.xlu0 %v2354, 122
      %v2363 = vpop.permute.xlu0 %2362
      %2364 = vrot.lane.b32.xlu0 %v2357, 122
      %v2365 = vpop.permute.xlu0 %2364
      %2366 = vrot.lane.b32.xlu0 %v2359, 122
      %v2367 = vpop.permute.xlu0 %2366
      %v2372 = vadd.f32 %v2332, %v2361
      %v2373 = vadd.f32 %v2333, %v2363
      %v2374 = vadd.f32 %v2334, %v2365
      %v2375 = vadd.f32 %v2335, %v2367
      %s2376 = sld [smem:[#allocation6 + $0x30]]
      %v2377 = vstv %s2376
      %v2378 = vmul.f32 %v2377, %v608
      %v2379 = vmul.f32 %v2377, %v609
      %v2380 = vmul.f32 %v2377, %v610
      %v2381 = vmul.f32 %v2377, %v611
      %v2382 = vmul.f32 %v2377, %v612
      %v2383 = vmul.f32 %v2377, %v613
      %v2390 = vrot.slane %v2378, 6
      %v2391 = vrot.slane %v2379, 6
      %v2392 = vsel %vm102, %v2390, %v2391
      %v2393 = vrot.slane %v2380, 6
      %v2394 = vsel %vm102, %v2391, %v2393
      %v2395 = vrot.slane %v2381, 6
      %v2396 = vrot.slane %v2382, 6
      %v2397 = vsel %vm102, %v2395, %v2396
      %v2398 = vrot.slane %v2383, 6
      %v2399 = vsel %vm102, %v2396, %v2398
      %2400 = vrot.lane.b32.xlu0 %v2392, 122
      %v2401 = vpop.permute.xlu0 %2400
      %2402 = vrot.lane.b32.xlu0 %v2394, 122
      %v2403 = vpop.permute.xlu0 %2402
      %2404 = vrot.lane.b32.xlu0 %v2397, 122
      %v2405 = vpop.permute.xlu0 %2404
      %2406 = vrot.lane.b32.xlu0 %v2399, 122
      %v2407 = vpop.permute.xlu0 %2406
      %v2412 = vadd.f32 %v2372, %v2401
      %v2413 = vadd.f32 %v2373, %v2403
      %v2414 = vadd.f32 %v2374, %v2405
      %v2415 = vadd.f32 %v2375, %v2407
      %v2416 = vld [vmem:[%s243] sm:$0xff]
      %v2417 = vld [vmem:[%s243 + $0x8] sm:$0xff]
      %v2418 = vld [vmem:[%s243 + $0x10] sm:$0x3f]
      %v2419 = vld [vmem:[%s243 + $0x18] sm:$0xff]
      %v2420 = vld [vmem:[%s243 + $0x20] sm:$0xff]
      %v2421 = vld [vmem:[%s243 + $0x28] sm:$0x3f]
      %s2422 = sld [smem:[#allocation6 + $0x31]]
      %v2423 = vstv %s2422
      %v2424 = vmul.f32 %v2423, %v2416
      %v2425 = vmul.f32 %v2423, %v2417
      %v2426 = vmul.f32 %v2423, %v2419
      %v2427 = vmul.f32 %v2423, %v2420
      %v2428 = vadd.f32 %v2412, %v2424
      %v2429 = vadd.f32 %v2413, %v2425
      %v2430 = vadd.f32 %v2414, %v2426
      %v2431 = vadd.f32 %v2415, %v2427
      %s2432 = sld [smem:[#allocation6 + $0x38]]
      %v2433 = vstv %s2432
      %v2434 = vmul.f32 %v2433, %v2416
      %v2435 = vmul.f32 %v2433, %v2417
      %v2436 = vmul.f32 %v2433, %v2418
      %v2437 = vmul.f32 %v2433, %v2419
      %v2438 = vmul.f32 %v2433, %v2420
      %v2439 = vmul.f32 %v2433, %v2421
      %v2446 = vrot.slane %v2434, 1
      %v2447 = vrot.slane %v2435, 1
      %v2448 = vsel %vm638, %v2446, %v2447
      %v2449 = vrot.slane %v2436, 1
      %v2450 = vsel %vm638, %v2447, %v2449
      %v2451 = vrot.slane %v2437, 1
      %v2452 = vrot.slane %v2438, 1
      %v2453 = vsel %vm638, %v2451, %v2452
      %v2454 = vrot.slane %v2439, 1
      %v2455 = vsel %vm638, %v2452, %v2454
      %v2460 = vadd.f32 %v2428, %v2448
      %v2461 = vadd.f32 %v2429, %v2450
      %v2462 = vadd.f32 %v2430, %v2453
      %v2463 = vadd.f32 %v2431, %v2455
      %s2464 = sld [smem:[#allocation6 + $0x3f]]
      %v2465 = vstv %s2464
      %v2466 = vmul.f32 %v2465, %v2416
      %v2467 = vmul.f32 %v2465, %v2417
      %v2468 = vmul.f32 %v2465, %v2418
      %v2469 = vmul.f32 %v2465, %v2419
      %v2470 = vmul.f32 %v2465, %v2420
      %v2471 = vmul.f32 %v2465, %v2421
      %v2478 = vrot.slane %v2466, 2
      %v2479 = vrot.slane %v2467, 2
      %v2480 = vsel %vm671, %v2478, %v2479
      %v2481 = vrot.slane %v2468, 2
      %v2482 = vsel %vm671, %v2479, %v2481
      %v2483 = vrot.slane %v2469, 2
      %v2484 = vrot.slane %v2470, 2
      %v2485 = vsel %vm671, %v2483, %v2484
      %v2486 = vrot.slane %v2471, 2
      %v2487 = vsel %vm671, %v2484, %v2486
      %v2492 = vadd.f32 %v2460, %v2480
      %v2493 = vadd.f32 %v2461, %v2482
      %v2494 = vadd.f32 %v2462, %v2485
      %v2495 = vadd.f32 %v2463, %v2487
      %s2496 = sld [smem:[#allocation6 + $0x46]]
      %v2497 = vstv %s2496
      %v2498 = vmul.f32 %v2497, %v2416
      %v2499 = vmul.f32 %v2497, %v2417
      %v2500 = vmul.f32 %v2497, %v2418
      %v2501 = vmul.f32 %v2497, %v2419
      %v2502 = vmul.f32 %v2497, %v2420
      %v2503 = vmul.f32 %v2497, %v2421
      %v2510 = vrot.slane %v2498, 3
      %v2511 = vrot.slane %v2499, 3
      %v2512 = vsel %vm704, %v2510, %v2511
      %v2513 = vrot.slane %v2500, 3
      %v2514 = vsel %vm704, %v2511, %v2513
      %v2515 = vrot.slane %v2501, 3
      %v2516 = vrot.slane %v2502, 3
      %v2517 = vsel %vm704, %v2515, %v2516
      %v2518 = vrot.slane %v2503, 3
      %v2519 = vsel %vm704, %v2516, %v2518
      %v2524 = vadd.f32 %v2492, %v2512
      %v2525 = vadd.f32 %v2493, %v2514
      %v2526 = vadd.f32 %v2494, %v2517
      %v2527 = vadd.f32 %v2495, %v2519
      %s2528 = sld [smem:[#allocation6 + $0x4d]]
      %v2529 = vstv %s2528
      %v2530 = vmul.f32 %v2529, %v2416
      %v2531 = vmul.f32 %v2529, %v2417
      %v2532 = vmul.f32 %v2529, %v2418
      %v2533 = vmul.f32 %v2529, %v2419
      %v2534 = vmul.f32 %v2529, %v2420
      %v2535 = vmul.f32 %v2529, %v2421
      %v2542 = vrot.slane %v2530, 4
      %v2543 = vrot.slane %v2531, 4
      %v2544 = vsel %vm67, %v2542, %v2543
      %v2545 = vrot.slane %v2532, 4
      %v2546 = vsel %vm67, %v2543, %v2545
      %v2547 = vrot.slane %v2533, 4
      %v2548 = vrot.slane %v2534, 4
      %v2549 = vsel %vm67, %v2547, %v2548
      %v2550 = vrot.slane %v2535, 4
      %v2551 = vsel %vm67, %v2548, %v2550
      %v2556 = vadd.f32 %v2524, %v2544
      %v2557 = vadd.f32 %v2525, %v2546
      %v2558 = vadd.f32 %v2526, %v2549
      %v2559 = vadd.f32 %v2527, %v2551
      %s2560 = sld [smem:[#allocation6 + $0x54]]
      %v2561 = vstv %s2560
      %v2562 = vmul.f32 %v2561, %v2416
      %v2563 = vmul.f32 %v2561, %v2417
      %v2564 = vmul.f32 %v2561, %v2418
      %v2565 = vmul.f32 %v2561, %v2419
      %v2566 = vmul.f32 %v2561, %v2420
      %v2567 = vmul.f32 %v2561, %v2421
      %v2574 = vrot.slane %v2562, 5
      %v2575 = vrot.slane %v2563, 5
      %v2576 = vsel %vm769, %v2574, %v2575
      %v2577 = vrot.slane %v2564, 5
      %v2578 = vsel %vm769, %v2575, %v2577
      %v2579 = vrot.slane %v2565, 5
      %v2580 = vrot.slane %v2566, 5
      %v2581 = vsel %vm769, %v2579, %v2580
      %v2582 = vrot.slane %v2567, 5
      %v2583 = vsel %vm769, %v2580, %v2582
      %v2588 = vadd.f32 %v2556, %v2576
      %v2589 = vadd.f32 %v2557, %v2578
      %v2590 = vadd.f32 %v2558, %v2581
      %v2591 = vadd.f32 %v2559, %v2583
      %s2592 = sld [smem:[#allocation6 + $0x5b]]
      %v2593 = vstv %s2592
      %v2594 = vmul.f32 %v2593, %v2416
      %v2595 = vmul.f32 %v2593, %v2417
      %v2596 = vmul.f32 %v2593, %v2418
      %v2597 = vmul.f32 %v2593, %v2419
      %v2598 = vmul.f32 %v2593, %v2420
      %v2599 = vmul.f32 %v2593, %v2421
      %v2606 = vrot.slane %v2594, 6
      %v2607 = vrot.slane %v2595, 6
      %v2608 = vsel %vm102, %v2606, %v2607
      %v2609 = vrot.slane %v2596, 6
      %v2610 = vsel %vm102, %v2607, %v2609
      %v2611 = vrot.slane %v2597, 6
      %v2612 = vrot.slane %v2598, 6
      %v2613 = vsel %vm102, %v2611, %v2612
      %v2614 = vrot.slane %v2599, 6
      %v2615 = vsel %vm102, %v2612, %v2614
      %v2620 = vadd.f32 %v2588, %v2608
      %v2621 = vadd.f32 %v2589, %v2610
      %v2622 = vadd.f32 %v2590, %v2613
      %v2623 = vadd.f32 %v2591, %v2615
      %s2624 = sld [smem:[#allocation6 + $0x32]]
      %v2625 = vstv %s2624
      %v2626 = vmul.f32 %v2625, %v2416
      %v2627 = vmul.f32 %v2625, %v2417
      %v2628 = vmul.f32 %v2625, %v2419
      %v2629 = vmul.f32 %v2625, %v2420
      %2634 = vrot.lane.b32.xlu0 %v2626, 127
      %v2635 = vpop.permute.xlu0 %2634
      %2636 = vrot.lane.b32.xlu0 %v2627, 127
      %v2637 = vpop.permute.xlu0 %2636
      %2638 = vrot.lane.b32.xlu0 %v2628, 127
      %v2639 = vpop.permute.xlu0 %2638
      %2640 = vrot.lane.b32.xlu0 %v2629, 127
      %v2641 = vpop.permute.xlu0 %2640
      %v2646 = vadd.f32 %v2620, %v2635
      %v2647 = vadd.f32 %v2621, %v2637
      %v2648 = vadd.f32 %v2622, %v2639
      %v2649 = vadd.f32 %v2623, %v2641
      %s2650 = sld [smem:[#allocation6 + $0x39]]
      %v2651 = vstv %s2650
      %v2652 = vmul.f32 %v2651, %v2416
      %v2653 = vmul.f32 %v2651, %v2417
      %v2654 = vmul.f32 %v2651, %v2418
      %v2655 = vmul.f32 %v2651, %v2419
      %v2656 = vmul.f32 %v2651, %v2420
      %v2657 = vmul.f32 %v2651, %v2421
      %v2664 = vrot.slane %v2652, 1
      %v2665 = vrot.slane %v2653, 1
      %v2666 = vsel %vm638, %v2664, %v2665
      %v2667 = vrot.slane %v2654, 1
      %v2668 = vsel %vm638, %v2665, %v2667
      %v2669 = vrot.slane %v2655, 1
      %v2670 = vrot.slane %v2656, 1
      %v2671 = vsel %vm638, %v2669, %v2670
      %v2672 = vrot.slane %v2657, 1
      %v2673 = vsel %vm638, %v2670, %v2672
      %2674 = vrot.lane.b32.xlu0 %v2666, 127
      %v2675 = vpop.permute.xlu0 %2674
      %2676 = vrot.lane.b32.xlu0 %v2668, 127
      %v2677 = vpop.permute.xlu0 %2676
      %2678 = vrot.lane.b32.xlu0 %v2671, 127
      %v2679 = vpop.permute.xlu0 %2678
      %2680 = vrot.lane.b32.xlu0 %v2673, 127
      %v2681 = vpop.permute.xlu0 %2680
      %v2686 = vadd.f32 %v2646, %v2675
      %v2687 = vadd.f32 %v2647, %v2677
      %v2688 = vadd.f32 %v2648, %v2679
      %v2689 = vadd.f32 %v2649, %v2681
      %s2690 = sld [smem:[#allocation6 + $0x40]]
      %v2691 = vstv %s2690
      %v2692 = vmul.f32 %v2691, %v2416
      %v2693 = vmul.f32 %v2691, %v2417
      %v2694 = vmul.f32 %v2691, %v2418
      %v2695 = vmul.f32 %v2691, %v2419
      %v2696 = vmul.f32 %v2691, %v2420
      %v2697 = vmul.f32 %v2691, %v2421
      %v2704 = vrot.slane %v2692, 2
      %v2705 = vrot.slane %v2693, 2
      %v2706 = vsel %vm671, %v2704, %v2705
      %v2707 = vrot.slane %v2694, 2
      %v2708 = vsel %vm671, %v2705, %v2707
      %v2709 = vrot.slane %v2695, 2
      %v2710 = vrot.slane %v2696, 2
      %v2711 = vsel %vm671, %v2709, %v2710
      %v2712 = vrot.slane %v2697, 2
      %v2713 = vsel %vm671, %v2710, %v2712
      %2714 = vrot.lane.b32.xlu0 %v2706, 127
      %v2715 = vpop.permute.xlu0 %2714
      %2716 = vrot.lane.b32.xlu0 %v2708, 127
      %v2717 = vpop.permute.xlu0 %2716
      %2718 = vrot.lane.b32.xlu0 %v2711, 127
      %v2719 = vpop.permute.xlu0 %2718
      %2720 = vrot.lane.b32.xlu0 %v2713, 127
      %v2721 = vpop.permute.xlu0 %2720
      %v2726 = vadd.f32 %v2686, %v2715
      %v2727 = vadd.f32 %v2687, %v2717
      %v2728 = vadd.f32 %v2688, %v2719
      %v2729 = vadd.f32 %v2689, %v2721
      %s2730 = sld [smem:[#allocation6 + $0x47]]
      %v2731 = vstv %s2730
      %v2732 = vmul.f32 %v2731, %v2416
      %v2733 = vmul.f32 %v2731, %v2417
      %v2734 = vmul.f32 %v2731, %v2418
      %v2735 = vmul.f32 %v2731, %v2419
      %v2736 = vmul.f32 %v2731, %v2420
      %v2737 = vmul.f32 %v2731, %v2421
      %v2744 = vrot.slane %v2732, 3
      %v2745 = vrot.slane %v2733, 3
      %v2746 = vsel %vm704, %v2744, %v2745
      %v2747 = vrot.slane %v2734, 3
      %v2748 = vsel %vm704, %v2745, %v2747
      %v2749 = vrot.slane %v2735, 3
      %v2750 = vrot.slane %v2736, 3
      %v2751 = vsel %vm704, %v2749, %v2750
      %v2752 = vrot.slane %v2737, 3
      %v2753 = vsel %vm704, %v2750, %v2752
      %2754 = vrot.lane.b32.xlu0 %v2746, 127
      %v2755 = vpop.permute.xlu0 %2754
      %2756 = vrot.lane.b32.xlu0 %v2748, 127
      %v2757 = vpop.permute.xlu0 %2756
      %2758 = vrot.lane.b32.xlu0 %v2751, 127
      %v2759 = vpop.permute.xlu0 %2758
      %2760 = vrot.lane.b32.xlu0 %v2753, 127
      %v2761 = vpop.permute.xlu0 %2760
      %v2766 = vadd.f32 %v2726, %v2755
      %v2767 = vadd.f32 %v2727, %v2757
      %v2768 = vadd.f32 %v2728, %v2759
      %v2769 = vadd.f32 %v2729, %v2761
      %s2770 = sld [smem:[#allocation6 + $0x4e]]
      %v2771 = vstv %s2770
      %v2772 = vmul.f32 %v2771, %v2416
      %v2773 = vmul.f32 %v2771, %v2417
      %v2774 = vmul.f32 %v2771, %v2418
      %v2775 = vmul.f32 %v2771, %v2419
      %v2776 = vmul.f32 %v2771, %v2420
      %v2777 = vmul.f32 %v2771, %v2421
      %v2784 = vrot.slane %v2772, 4
      %v2785 = vrot.slane %v2773, 4
      %v2786 = vsel %vm67, %v2784, %v2785
      %v2787 = vrot.slane %v2774, 4
      %v2788 = vsel %vm67, %v2785, %v2787
      %v2789 = vrot.slane %v2775, 4
      %v2790 = vrot.slane %v2776, 4
      %v2791 = vsel %vm67, %v2789, %v2790
      %v2792 = vrot.slane %v2777, 4
      %v2793 = vsel %vm67, %v2790, %v2792
      %2794 = vrot.lane.b32.xlu0 %v2786, 127
      %v2795 = vpop.permute.xlu0 %2794
      %2796 = vrot.lane.b32.xlu0 %v2788, 127
      %v2797 = vpop.permute.xlu0 %2796
      %2798 = vrot.lane.b32.xlu0 %v2791, 127
      %v2799 = vpop.permute.xlu0 %2798
      %2800 = vrot.lane.b32.xlu0 %v2793, 127
      %v2801 = vpop.permute.xlu0 %2800
      %v2806 = vadd.f32 %v2766, %v2795
      %v2807 = vadd.f32 %v2767, %v2797
      %v2808 = vadd.f32 %v2768, %v2799
      %v2809 = vadd.f32 %v2769, %v2801
      %s2810 = sld [smem:[#allocation6 + $0x55]]
      %v2811 = vstv %s2810
      %v2812 = vmul.f32 %v2811, %v2416
      %v2813 = vmul.f32 %v2811, %v2417
      %v2814 = vmul.f32 %v2811, %v2418
      %v2815 = vmul.f32 %v2811, %v2419
      %v2816 = vmul.f32 %v2811, %v2420
      %v2817 = vmul.f32 %v2811, %v2421
      %v2824 = vrot.slane %v2812, 5
      %v2825 = vrot.slane %v2813, 5
      %v2826 = vsel %vm769, %v2824, %v2825
      %v2827 = vrot.slane %v2814, 5
      %v2828 = vsel %vm769, %v2825, %v2827
      %v2829 = vrot.slane %v2815, 5
      %v2830 = vrot.slane %v2816, 5
      %v2831 = vsel %vm769, %v2829, %v2830
      %v2832 = vrot.slane %v2817, 5
      %v2833 = vsel %vm769, %v2830, %v2832
      %2834 = vrot.lane.b32.xlu0 %v2826, 127
      %v2835 = vpop.permute.xlu0 %2834
      %2836 = vrot.lane.b32.xlu0 %v2828, 127
      %v2837 = vpop.permute.xlu0 %2836
      %2838 = vrot.lane.b32.xlu0 %v2831, 127
      %v2839 = vpop.permute.xlu0 %2838
      %2840 = vrot.lane.b32.xlu0 %v2833, 127
      %v2841 = vpop.permute.xlu0 %2840
      %v2846 = vadd.f32 %v2806, %v2835
      %v2847 = vadd.f32 %v2807, %v2837
      %v2848 = vadd.f32 %v2808, %v2839
      %v2849 = vadd.f32 %v2809, %v2841
      %s2850 = sld [smem:[#allocation6 + $0x5c]]
      %v2851 = vstv %s2850
      %v2852 = vmul.f32 %v2851, %v2416
      %v2853 = vmul.f32 %v2851, %v2417
      %v2854 = vmul.f32 %v2851, %v2418
      %v2855 = vmul.f32 %v2851, %v2419
      %v2856 = vmul.f32 %v2851, %v2420
      %v2857 = vmul.f32 %v2851, %v2421
      %v2864 = vrot.slane %v2852, 6
      %v2865 = vrot.slane %v2853, 6
      %v2866 = vsel %vm102, %v2864, %v2865
      %v2867 = vrot.slane %v2854, 6
      %v2868 = vsel %vm102, %v2865, %v2867
      %v2869 = vrot.slane %v2855, 6
      %v2870 = vrot.slane %v2856, 6
      %v2871 = vsel %vm102, %v2869, %v2870
      %v2872 = vrot.slane %v2857, 6
      %v2873 = vsel %vm102, %v2870, %v2872
      %2874 = vrot.lane.b32.xlu0 %v2866, 127
      %v2875 = vpop.permute.xlu0 %2874
      %2876 = vrot.lane.b32.xlu0 %v2868, 127
      %v2877 = vpop.permute.xlu0 %2876
      %2878 = vrot.lane.b32.xlu0 %v2871, 127
      %v2879 = vpop.permute.xlu0 %2878
      %2880 = vrot.lane.b32.xlu0 %v2873, 127
      %v2881 = vpop.permute.xlu0 %2880
      %v2886 = vadd.f32 %v2846, %v2875
      %v2887 = vadd.f32 %v2847, %v2877
      %v2888 = vadd.f32 %v2848, %v2879
      %v2889 = vadd.f32 %v2849, %v2881
      %s2890 = sld [smem:[#allocation6 + $0x33]]
      %v2891 = vstv %s2890
      %v2892 = vmul.f32 %v2891, %v2416
      %v2893 = vmul.f32 %v2891, %v2417
      %v2894 = vmul.f32 %v2891, %v2419
      %v2895 = vmul.f32 %v2891, %v2420
      %2900 = vrot.lane.b32.xlu0 %v2892, 126
      %v2901 = vpop.permute.xlu0 %2900
      %2902 = vrot.lane.b32.xlu0 %v2893, 126
      %v2903 = vpop.permute.xlu0 %2902
      %2904 = vrot.lane.b32.xlu0 %v2894, 126
      %v2905 = vpop.permute.xlu0 %2904
      %2906 = vrot.lane.b32.xlu0 %v2895, 126
      %v2907 = vpop.permute.xlu0 %2906
      %v2912 = vadd.f32 %v2886, %v2901
      %v2913 = vadd.f32 %v2887, %v2903
      %v2914 = vadd.f32 %v2888, %v2905
      %v2915 = vadd.f32 %v2889, %v2907
      %s2916 = sld [smem:[#allocation6 + $0x3a]]
      %v2917 = vstv %s2916
      %v2918 = vmul.f32 %v2917, %v2416
      %v2919 = vmul.f32 %v2917, %v2417
      %v2920 = vmul.f32 %v2917, %v2418
      %v2921 = vmul.f32 %v2917, %v2419
      %v2922 = vmul.f32 %v2917, %v2420
      %v2923 = vmul.f32 %v2917, %v2421
      %v2930 = vrot.slane %v2918, 1
      %v2931 = vrot.slane %v2919, 1
      %v2932 = vsel %vm638, %v2930, %v2931
      %v2933 = vrot.slane %v2920, 1
      %v2934 = vsel %vm638, %v2931, %v2933
      %v2935 = vrot.slane %v2921, 1
      %v2936 = vrot.slane %v2922, 1
      %v2937 = vsel %vm638, %v2935, %v2936
      %v2938 = vrot.slane %v2923, 1
      %v2939 = vsel %vm638, %v2936, %v2938
      %2940 = vrot.lane.b32.xlu0 %v2932, 126
      %v2941 = vpop.permute.xlu0 %2940
      %2942 = vrot.lane.b32.xlu0 %v2934, 126
      %v2943 = vpop.permute.xlu0 %2942
      %2944 = vrot.lane.b32.xlu0 %v2937, 126
      %v2945 = vpop.permute.xlu0 %2944
      %2946 = vrot.lane.b32.xlu0 %v2939, 126
      %v2947 = vpop.permute.xlu0 %2946
      %v2952 = vadd.f32 %v2912, %v2941
      %v2953 = vadd.f32 %v2913, %v2943
      %v2954 = vadd.f32 %v2914, %v2945
      %v2955 = vadd.f32 %v2915, %v2947
      %s2956 = sld [smem:[#allocation6 + $0x41]]
      %v2957 = vstv %s2956
      %v2958 = vmul.f32 %v2957, %v2416
      %v2959 = vmul.f32 %v2957, %v2417
      %v2960 = vmul.f32 %v2957, %v2418
      %v2961 = vmul.f32 %v2957, %v2419
      %v2962 = vmul.f32 %v2957, %v2420
      %v2963 = vmul.f32 %v2957, %v2421
      %v2970 = vrot.slane %v2958, 2
      %v2971 = vrot.slane %v2959, 2
      %v2972 = vsel %vm671, %v2970, %v2971
      %v2973 = vrot.slane %v2960, 2
      %v2974 = vsel %vm671, %v2971, %v2973
      %v2975 = vrot.slane %v2961, 2
      %v2976 = vrot.slane %v2962, 2
      %v2977 = vsel %vm671, %v2975, %v2976
      %v2978 = vrot.slane %v2963, 2
      %v2979 = vsel %vm671, %v2976, %v2978
      %2980 = vrot.lane.b32.xlu0 %v2972, 126
      %v2981 = vpop.permute.xlu0 %2980
      %2982 = vrot.lane.b32.xlu0 %v2974, 126
      %v2983 = vpop.permute.xlu0 %2982
      %2984 = vrot.lane.b32.xlu0 %v2977, 126
      %v2985 = vpop.permute.xlu0 %2984
      %2986 = vrot.lane.b32.xlu0 %v2979, 126
      %v2987 = vpop.permute.xlu0 %2986
      %v2992 = vadd.f32 %v2952, %v2981
      %v2993 = vadd.f32 %v2953, %v2983
      %v2994 = vadd.f32 %v2954, %v2985
      %v2995 = vadd.f32 %v2955, %v2987
      %s2996 = sld [smem:[#allocation6 + $0x48]]
      %v2997 = vstv %s2996
      %v2998 = vmul.f32 %v2997, %v2416
      %v2999 = vmul.f32 %v2997, %v2417
      %v3000 = vmul.f32 %v2997, %v2418
      %v3001 = vmul.f32 %v2997, %v2419
      %v3002 = vmul.f32 %v2997, %v2420
      %v3003 = vmul.f32 %v2997, %v2421
      %v3010 = vrot.slane %v2998, 3
      %v3011 = vrot.slane %v2999, 3
      %v3012 = vsel %vm704, %v3010, %v3011
      %v3013 = vrot.slane %v3000, 3
      %v3014 = vsel %vm704, %v3011, %v3013
      %v3015 = vrot.slane %v3001, 3
      %v3016 = vrot.slane %v3002, 3
      %v3017 = vsel %vm704, %v3015, %v3016
      %v3018 = vrot.slane %v3003, 3
      %v3019 = vsel %vm704, %v3016, %v3018
      %3020 = vrot.lane.b32.xlu0 %v3012, 126
      %v3021 = vpop.permute.xlu0 %3020
      %3022 = vrot.lane.b32.xlu0 %v3014, 126
      %v3023 = vpop.permute.xlu0 %3022
      %3024 = vrot.lane.b32.xlu0 %v3017, 126
      %v3025 = vpop.permute.xlu0 %3024
      %3026 = vrot.lane.b32.xlu0 %v3019, 126
      %v3027 = vpop.permute.xlu0 %3026
      %v3032 = vadd.f32 %v2992, %v3021
      %v3033 = vadd.f32 %v2993, %v3023
      %v3034 = vadd.f32 %v2994, %v3025
      %v3035 = vadd.f32 %v2995, %v3027
      %s3036 = sld [smem:[#allocation6 + $0x4f]]
      %v3037 = vstv %s3036
      %v3038 = vmul.f32 %v3037, %v2416
      %v3039 = vmul.f32 %v3037, %v2417
      %v3040 = vmul.f32 %v3037, %v2418
      %v3041 = vmul.f32 %v3037, %v2419
      %v3042 = vmul.f32 %v3037, %v2420
      %v3043 = vmul.f32 %v3037, %v2421
      %v3050 = vrot.slane %v3038, 4
      %v3051 = vrot.slane %v3039, 4
      %v3052 = vsel %vm67, %v3050, %v3051
      %v3053 = vrot.slane %v3040, 4
      %v3054 = vsel %vm67, %v3051, %v3053
      %v3055 = vrot.slane %v3041, 4
      %v3056 = vrot.slane %v3042, 4
      %v3057 = vsel %vm67, %v3055, %v3056
      %v3058 = vrot.slane %v3043, 4
      %v3059 = vsel %vm67, %v3056, %v3058
      %3060 = vrot.lane.b32.xlu0 %v3052, 126
      %v3061 = vpop.permute.xlu0 %3060
      %3062 = vrot.lane.b32.xlu0 %v3054, 126
      %v3063 = vpop.permute.xlu0 %3062
      %3064 = vrot.lane.b32.xlu0 %v3057, 126
      %v3065 = vpop.permute.xlu0 %3064
      %3066 = vrot.lane.b32.xlu0 %v3059, 126
      %v3067 = vpop.permute.xlu0 %3066
      %v3072 = vadd.f32 %v3032, %v3061
      %v3073 = vadd.f32 %v3033, %v3063
      %v3074 = vadd.f32 %v3034, %v3065
      %v3075 = vadd.f32 %v3035, %v3067
      %s3076 = sld [smem:[#allocation6 + $0x56]]
      %v3077 = vstv %s3076
      %v3078 = vmul.f32 %v3077, %v2416
      %v3079 = vmul.f32 %v3077, %v2417
      %v3080 = vmul.f32 %v3077, %v2418
      %v3081 = vmul.f32 %v3077, %v2419
      %v3082 = vmul.f32 %v3077, %v2420
      %v3083 = vmul.f32 %v3077, %v2421
      %v3090 = vrot.slane %v3078, 5
      %v3091 = vrot.slane %v3079, 5
      %v3092 = vsel %vm769, %v3090, %v3091
      %v3093 = vrot.slane %v3080, 5
      %v3094 = vsel %vm769, %v3091, %v3093
      %v3095 = vrot.slane %v3081, 5
      %v3096 = vrot.slane %v3082, 5
      %v3097 = vsel %vm769, %v3095, %v3096
      %v3098 = vrot.slane %v3083, 5
      %v3099 = vsel %vm769, %v3096, %v3098
      %3100 = vrot.lane.b32.xlu0 %v3092, 126
      %v3101 = vpop.permute.xlu0 %3100
      %3102 = vrot.lane.b32.xlu0 %v3094, 126
      %v3103 = vpop.permute.xlu0 %3102
      %3104 = vrot.lane.b32.xlu0 %v3097, 126
      %v3105 = vpop.permute.xlu0 %3104
      %3106 = vrot.lane.b32.xlu0 %v3099, 126
      %v3107 = vpop.permute.xlu0 %3106
      %v3112 = vadd.f32 %v3072, %v3101
      %v3113 = vadd.f32 %v3073, %v3103
      %v3114 = vadd.f32 %v3074, %v3105
      %v3115 = vadd.f32 %v3075, %v3107
      %s3116 = sld [smem:[#allocation6 + $0x5d]]
      %v3117 = vstv %s3116
      %v3118 = vmul.f32 %v3117, %v2416
      %v3119 = vmul.f32 %v3117, %v2417
      %v3120 = vmul.f32 %v3117, %v2418
      %v3121 = vmul.f32 %v3117, %v2419
      %v3122 = vmul.f32 %v3117, %v2420
      %v3123 = vmul.f32 %v3117, %v2421
      %v3130 = vrot.slane %v3118, 6
      %v3131 = vrot.slane %v3119, 6
      %v3132 = vsel %vm102, %v3130, %v3131
      %v3133 = vrot.slane %v3120, 6
      %v3134 = vsel %vm102, %v3131, %v3133
      %v3135 = vrot.slane %v3121, 6
      %v3136 = vrot.slane %v3122, 6
      %v3137 = vsel %vm102, %v3135, %v3136
      %v3138 = vrot.slane %v3123, 6
      %v3139 = vsel %vm102, %v3136, %v3138
      %3140 = vrot.lane.b32.xlu0 %v3132, 126
      %v3141 = vpop.permute.xlu0 %3140
      %3142 = vrot.lane.b32.xlu0 %v3134, 126
      %v3143 = vpop.permute.xlu0 %3142
      %3144 = vrot.lane.b32.xlu0 %v3137, 126
      %v3145 = vpop.permute.xlu0 %3144
      %3146 = vrot.lane.b32.xlu0 %v3139, 126
      %v3147 = vpop.permute.xlu0 %3146
      %v3152 = vadd.f32 %v3112, %v3141
      %v3153 = vadd.f32 %v3113, %v3143
      %v3154 = vadd.f32 %v3114, %v3145
      %v3155 = vadd.f32 %v3115, %v3147
      %s3156 = sld [smem:[#allocation6 + $0x34]]
      %v3157 = vstv %s3156
      %v3158 = vmul.f32 %v3157, %v2416
      %v3159 = vmul.f32 %v3157, %v2417
      %v3160 = vmul.f32 %v3157, %v2419
      %v3161 = vmul.f32 %v3157, %v2420
      %3166 = vrot.lane.b32.xlu0 %v3158, 125
      %v3167 = vpop.permute.xlu0 %3166
      %3168 = vrot.lane.b32.xlu0 %v3159, 125
      %v3169 = vpop.permute.xlu0 %3168
      %3170 = vrot.lane.b32.xlu0 %v3160, 125
      %v3171 = vpop.permute.xlu0 %3170
      %3172 = vrot.lane.b32.xlu0 %v3161, 125
      %v3173 = vpop.permute.xlu0 %3172
      %v3178 = vadd.f32 %v3152, %v3167
      %v3179 = vadd.f32 %v3153, %v3169
      %v3180 = vadd.f32 %v3154, %v3171
      %v3181 = vadd.f32 %v3155, %v3173
      %s3182 = sld [smem:[#allocation6 + $0x3b]]
      %v3183 = vstv %s3182
      %v3184 = vmul.f32 %v3183, %v2416
      %v3185 = vmul.f32 %v3183, %v2417
      %v3186 = vmul.f32 %v3183, %v2418
      %v3187 = vmul.f32 %v3183, %v2419
      %v3188 = vmul.f32 %v3183, %v2420
      %v3189 = vmul.f32 %v3183, %v2421
      %v3196 = vrot.slane %v3184, 1
      %v3197 = vrot.slane %v3185, 1
      %v3198 = vsel %vm638, %v3196, %v3197
      %v3199 = vrot.slane %v3186, 1
      %v3200 = vsel %vm638, %v3197, %v3199
      %v3201 = vrot.slane %v3187, 1
      %v3202 = vrot.slane %v3188, 1
      %v3203 = vsel %vm638, %v3201, %v3202
      %v3204 = vrot.slane %v3189, 1
      %v3205 = vsel %vm638, %v3202, %v3204
      %3206 = vrot.lane.b32.xlu0 %v3198, 125
      %v3207 = vpop.permute.xlu0 %3206
      %3208 = vrot.lane.b32.xlu0 %v3200, 125
      %v3209 = vpop.permute.xlu0 %3208
      %3210 = vrot.lane.b32.xlu0 %v3203, 125
      %v3211 = vpop.permute.xlu0 %3210
      %3212 = vrot.lane.b32.xlu0 %v3205, 125
      %v3213 = vpop.permute.xlu0 %3212
      %v3218 = vadd.f32 %v3178, %v3207
      %v3219 = vadd.f32 %v3179, %v3209
      %v3220 = vadd.f32 %v3180, %v3211
      %v3221 = vadd.f32 %v3181, %v3213
      %s3222 = sld [smem:[#allocation6 + $0x42]]
      %v3223 = vstv %s3222
      %v3224 = vmul.f32 %v3223, %v2416
      %v3225 = vmul.f32 %v3223, %v2417
      %v3226 = vmul.f32 %v3223, %v2418
      %v3227 = vmul.f32 %v3223, %v2419
      %v3228 = vmul.f32 %v3223, %v2420
      %v3229 = vmul.f32 %v3223, %v2421
      %v3236 = vrot.slane %v3224, 2
      %v3237 = vrot.slane %v3225, 2
      %v3238 = vsel %vm671, %v3236, %v3237
      %v3239 = vrot.slane %v3226, 2
      %v3240 = vsel %vm671, %v3237, %v3239
      %v3241 = vrot.slane %v3227, 2
      %v3242 = vrot.slane %v3228, 2
      %v3243 = vsel %vm671, %v3241, %v3242
      %v3244 = vrot.slane %v3229, 2
      %v3245 = vsel %vm671, %v3242, %v3244
      %3246 = vrot.lane.b32.xlu0 %v3238, 125
      %v3247 = vpop.permute.xlu0 %3246
      %3248 = vrot.lane.b32.xlu0 %v3240, 125
      %v3249 = vpop.permute.xlu0 %3248
      %3250 = vrot.lane.b32.xlu0 %v3243, 125
      %v3251 = vpop.permute.xlu0 %3250
      %3252 = vrot.lane.b32.xlu0 %v3245, 125
      %v3253 = vpop.permute.xlu0 %3252
      %v3258 = vadd.f32 %v3218, %v3247
      %v3259 = vadd.f32 %v3219, %v3249
      %v3260 = vadd.f32 %v3220, %v3251
      %v3261 = vadd.f32 %v3221, %v3253
      %s3262 = sld [smem:[#allocation6 + $0x49]]
      %v3263 = vstv %s3262
      %v3264 = vmul.f32 %v3263, %v2416
      %v3265 = vmul.f32 %v3263, %v2417
      %v3266 = vmul.f32 %v3263, %v2418
      %v3267 = vmul.f32 %v3263, %v2419
      %v3268 = vmul.f32 %v3263, %v2420
      %v3269 = vmul.f32 %v3263, %v2421
      %v3276 = vrot.slane %v3264, 3
      %v3277 = vrot.slane %v3265, 3
      %v3278 = vsel %vm704, %v3276, %v3277
      %v3279 = vrot.slane %v3266, 3
      %v3280 = vsel %vm704, %v3277, %v3279
      %v3281 = vrot.slane %v3267, 3
      %v3282 = vrot.slane %v3268, 3
      %v3283 = vsel %vm704, %v3281, %v3282
      %v3284 = vrot.slane %v3269, 3
      %v3285 = vsel %vm704, %v3282, %v3284
      %3286 = vrot.lane.b32.xlu0 %v3278, 125
      %v3287 = vpop.permute.xlu0 %3286
      %3288 = vrot.lane.b32.xlu0 %v3280, 125
      %v3289 = vpop.permute.xlu0 %3288
      %3290 = vrot.lane.b32.xlu0 %v3283, 125
      %v3291 = vpop.permute.xlu0 %3290
      %3292 = vrot.lane.b32.xlu0 %v3285, 125
      %v3293 = vpop.permute.xlu0 %3292
      %v3298 = vadd.f32 %v3258, %v3287
      %v3299 = vadd.f32 %v3259, %v3289
      %v3300 = vadd.f32 %v3260, %v3291
      %v3301 = vadd.f32 %v3261, %v3293
      %s3302 = sld [smem:[#allocation6 + $0x50]]
      %v3303 = vstv %s3302
      %v3304 = vmul.f32 %v3303, %v2416
      %v3305 = vmul.f32 %v3303, %v2417
      %v3306 = vmul.f32 %v3303, %v2418
      %v3307 = vmul.f32 %v3303, %v2419
      %v3308 = vmul.f32 %v3303, %v2420
      %v3309 = vmul.f32 %v3303, %v2421
      %v3316 = vrot.slane %v3304, 4
      %v3317 = vrot.slane %v3305, 4
      %v3318 = vsel %vm67, %v3316, %v3317
      %v3319 = vrot.slane %v3306, 4
      %v3320 = vsel %vm67, %v3317, %v3319
      %v3321 = vrot.slane %v3307, 4
      %v3322 = vrot.slane %v3308, 4
      %v3323 = vsel %vm67, %v3321, %v3322
      %v3324 = vrot.slane %v3309, 4
      %v3325 = vsel %vm67, %v3322, %v3324
      %3326 = vrot.lane.b32.xlu0 %v3318, 125
      %v3327 = vpop.permute.xlu0 %3326
      %3328 = vrot.lane.b32.xlu0 %v3320, 125
      %v3329 = vpop.permute.xlu0 %3328
      %3330 = vrot.lane.b32.xlu0 %v3323, 125
      %v3331 = vpop.permute.xlu0 %3330
      %3332 = vrot.lane.b32.xlu0 %v3325, 125
      %v3333 = vpop.permute.xlu0 %3332
      %v3338 = vadd.f32 %v3298, %v3327
      %v3339 = vadd.f32 %v3299, %v3329
      %v3340 = vadd.f32 %v3300, %v3331
      %v3341 = vadd.f32 %v3301, %v3333
      %s3342 = sld [smem:[#allocation6 + $0x57]]
      %v3343 = vstv %s3342
      %v3344 = vmul.f32 %v3343, %v2416
      %v3345 = vmul.f32 %v3343, %v2417
      %v3346 = vmul.f32 %v3343, %v2418
      %v3347 = vmul.f32 %v3343, %v2419
      %v3348 = vmul.f32 %v3343, %v2420
      %v3349 = vmul.f32 %v3343, %v2421
      %v3356 = vrot.slane %v3344, 5
      %v3357 = vrot.slane %v3345, 5
      %v3358 = vsel %vm769, %v3356, %v3357
      %v3359 = vrot.slane %v3346, 5
      %v3360 = vsel %vm769, %v3357, %v3359
      %v3361 = vrot.slane %v3347, 5
      %v3362 = vrot.slane %v3348, 5
      %v3363 = vsel %vm769, %v3361, %v3362
      %v3364 = vrot.slane %v3349, 5
      %v3365 = vsel %vm769, %v3362, %v3364
      %3366 = vrot.lane.b32.xlu0 %v3358, 125
      %v3367 = vpop.permute.xlu0 %3366
      %3368 = vrot.lane.b32.xlu0 %v3360, 125
      %v3369 = vpop.permute.xlu0 %3368
      %3370 = vrot.lane.b32.xlu0 %v3363, 125
      %v3371 = vpop.permute.xlu0 %3370
      %3372 = vrot.lane.b32.xlu0 %v3365, 125
      %v3373 = vpop.permute.xlu0 %3372
      %v3378 = vadd.f32 %v3338, %v3367
      %v3379 = vadd.f32 %v3339, %v3369
      %v3380 = vadd.f32 %v3340, %v3371
      %v3381 = vadd.f32 %v3341, %v3373
      %s3382 = sld [smem:[#allocation6 + $0x5e]]
      %v3383 = vstv %s3382
      %v3384 = vmul.f32 %v3383, %v2416
      %v3385 = vmul.f32 %v3383, %v2417
      %v3386 = vmul.f32 %v3383, %v2418
      %v3387 = vmul.f32 %v3383, %v2419
      %v3388 = vmul.f32 %v3383, %v2420
      %v3389 = vmul.f32 %v3383, %v2421
      %v3396 = vrot.slane %v3384, 6
      %v3397 = vrot.slane %v3385, 6
      %v3398 = vsel %vm102, %v3396, %v3397
      %v3399 = vrot.slane %v3386, 6
      %v3400 = vsel %vm102, %v3397, %v3399
      %v3401 = vrot.slane %v3387, 6
      %v3402 = vrot.slane %v3388, 6
      %v3403 = vsel %vm102, %v3401, %v3402
      %v3404 = vrot.slane %v3389, 6
      %v3405 = vsel %vm102, %v3402, %v3404
      %3406 = vrot.lane.b32.xlu0 %v3398, 125
      %v3407 = vpop.permute.xlu0 %3406
      %3408 = vrot.lane.b32.xlu0 %v3400, 125
      %v3409 = vpop.permute.xlu0 %3408
      %3410 = vrot.lane.b32.xlu0 %v3403, 125
      %v3411 = vpop.permute.xlu0 %3410
      %3412 = vrot.lane.b32.xlu0 %v3405, 125
      %v3413 = vpop.permute.xlu0 %3412
      %v3418 = vadd.f32 %v3378, %v3407
      %v3419 = vadd.f32 %v3379, %v3409
      %v3420 = vadd.f32 %v3380, %v3411
      %v3421 = vadd.f32 %v3381, %v3413
      %s3422 = sld [smem:[#allocation6 + $0x35]]
      %v3423 = vstv %s3422
      %v3424 = vmul.f32 %v3423, %v2416
      %v3425 = vmul.f32 %v3423, %v2417
      %v3426 = vmul.f32 %v3423, %v2419
      %v3427 = vmul.f32 %v3423, %v2420
      %3432 = vrot.lane.b32.xlu0 %v3424, 124
      %v3433 = vpop.permute.xlu0 %3432
      %3434 = vrot.lane.b32.xlu0 %v3425, 124
      %v3435 = vpop.permute.xlu0 %3434
      %3436 = vrot.lane.b32.xlu0 %v3426, 124
      %v3437 = vpop.permute.xlu0 %3436
      %3438 = vrot.lane.b32.xlu0 %v3427, 124
      %v3439 = vpop.permute.xlu0 %3438
      %v3444 = vadd.f32 %v3418, %v3433
      %v3445 = vadd.f32 %v3419, %v3435
      %v3446 = vadd.f32 %v3420, %v3437
      %v3447 = vadd.f32 %v3421, %v3439
      %s3448 = sld [smem:[#allocation6 + $0x3c]]
      %v3449 = vstv %s3448
      %v3450 = vmul.f32 %v3449, %v2416
      %v3451 = vmul.f32 %v3449, %v2417
      %v3452 = vmul.f32 %v3449, %v2418
      %v3453 = vmul.f32 %v3449, %v2419
      %v3454 = vmul.f32 %v3449, %v2420
      %v3455 = vmul.f32 %v3449, %v2421
      %v3462 = vrot.slane %v3450, 1
      %v3463 = vrot.slane %v3451, 1
      %v3464 = vsel %vm638, %v3462, %v3463
      %v3465 = vrot.slane %v3452, 1
      %v3466 = vsel %vm638, %v3463, %v3465
      %v3467 = vrot.slane %v3453, 1
      %v3468 = vrot.slane %v3454, 1
      %v3469 = vsel %vm638, %v3467, %v3468
      %v3470 = vrot.slane %v3455, 1
      %v3471 = vsel %vm638, %v3468, %v3470
      %3472 = vrot.lane.b32.xlu0 %v3464, 124
      %v3473 = vpop.permute.xlu0 %3472
      %3474 = vrot.lane.b32.xlu0 %v3466, 124
      %v3475 = vpop.permute.xlu0 %3474
      %3476 = vrot.lane.b32.xlu0 %v3469, 124
      %v3477 = vpop.permute.xlu0 %3476
      %3478 = vrot.lane.b32.xlu0 %v3471, 124
      %v3479 = vpop.permute.xlu0 %3478
      %v3484 = vadd.f32 %v3444, %v3473
      %v3485 = vadd.f32 %v3445, %v3475
      %v3486 = vadd.f32 %v3446, %v3477
      %v3487 = vadd.f32 %v3447, %v3479
      %s3488 = sld [smem:[#allocation6 + $0x43]]
      %v3489 = vstv %s3488
      %v3490 = vmul.f32 %v3489, %v2416
      %v3491 = vmul.f32 %v3489, %v2417
      %v3492 = vmul.f32 %v3489, %v2418
      %v3493 = vmul.f32 %v3489, %v2419
      %v3494 = vmul.f32 %v3489, %v2420
      %v3495 = vmul.f32 %v3489, %v2421
      %v3502 = vrot.slane %v3490, 2
      %v3503 = vrot.slane %v3491, 2
      %v3504 = vsel %vm671, %v3502, %v3503
      %v3505 = vrot.slane %v3492, 2
      %v3506 = vsel %vm671, %v3503, %v3505
      %v3507 = vrot.slane %v3493, 2
      %v3508 = vrot.slane %v3494, 2
      %v3509 = vsel %vm671, %v3507, %v3508
      %v3510 = vrot.slane %v3495, 2
      %v3511 = vsel %vm671, %v3508, %v3510
      %3512 = vrot.lane.b32.xlu0 %v3504, 124
      %v3513 = vpop.permute.xlu0 %3512
      %3514 = vrot.lane.b32.xlu0 %v3506, 124
      %v3515 = vpop.permute.xlu0 %3514
      %3516 = vrot.lane.b32.xlu0 %v3509, 124
      %v3517 = vpop.permute.xlu0 %3516
      %3518 = vrot.lane.b32.xlu0 %v3511, 124
      %v3519 = vpop.permute.xlu0 %3518
      %v3524 = vadd.f32 %v3484, %v3513
      %v3525 = vadd.f32 %v3485, %v3515
      %v3526 = vadd.f32 %v3486, %v3517
      %v3527 = vadd.f32 %v3487, %v3519
      %s3528 = sld [smem:[#allocation6 + $0x4a]]
      %v3529 = vstv %s3528
      %v3530 = vmul.f32 %v3529, %v2416
      %v3531 = vmul.f32 %v3529, %v2417
      %v3532 = vmul.f32 %v3529, %v2418
      %v3533 = vmul.f32 %v3529, %v2419
      %v3534 = vmul.f32 %v3529, %v2420
      %v3535 = vmul.f32 %v3529, %v2421
      %v3542 = vrot.slane %v3530, 3
      %v3543 = vrot.slane %v3531, 3
      %v3544 = vsel %vm704, %v3542, %v3543
      %v3545 = vrot.slane %v3532, 3
      %v3546 = vsel %vm704, %v3543, %v3545
      %v3547 = vrot.slane %v3533, 3
      %v3548 = vrot.slane %v3534, 3
      %v3549 = vsel %vm704, %v3547, %v3548
      %v3550 = vrot.slane %v3535, 3
      %v3551 = vsel %vm704, %v3548, %v3550
      %3552 = vrot.lane.b32.xlu0 %v3544, 124
      %v3553 = vpop.permute.xlu0 %3552
      %3554 = vrot.lane.b32.xlu0 %v3546, 124
      %v3555 = vpop.permute.xlu0 %3554
      %3556 = vrot.lane.b32.xlu0 %v3549, 124
      %v3557 = vpop.permute.xlu0 %3556
      %3558 = vrot.lane.b32.xlu0 %v3551, 124
      %v3559 = vpop.permute.xlu0 %3558
      %v3564 = vadd.f32 %v3524, %v3553
      %v3565 = vadd.f32 %v3525, %v3555
      %v3566 = vadd.f32 %v3526, %v3557
      %v3567 = vadd.f32 %v3527, %v3559
      %s3568 = sld [smem:[#allocation6 + $0x51]]
      %v3569 = vstv %s3568
      %v3570 = vmul.f32 %v3569, %v2416
      %v3571 = vmul.f32 %v3569, %v2417
      %v3572 = vmul.f32 %v3569, %v2418
      %v3573 = vmul.f32 %v3569, %v2419
      %v3574 = vmul.f32 %v3569, %v2420
      %v3575 = vmul.f32 %v3569, %v2421
      %v3582 = vrot.slane %v3570, 4
      %v3583 = vrot.slane %v3571, 4
      %v3584 = vsel %vm67, %v3582, %v3583
      %v3585 = vrot.slane %v3572, 4
      %v3586 = vsel %vm67, %v3583, %v3585
      %v3587 = vrot.slane %v3573, 4
      %v3588 = vrot.slane %v3574, 4
      %v3589 = vsel %vm67, %v3587, %v3588
      %v3590 = vrot.slane %v3575, 4
      %v3591 = vsel %vm67, %v3588, %v3590
      %3592 = vrot.lane.b32.xlu0 %v3584, 124
      %v3593 = vpop.permute.xlu0 %3592
      %3594 = vrot.lane.b32.xlu0 %v3586, 124
      %v3595 = vpop.permute.xlu0 %3594
      %3596 = vrot.lane.b32.xlu0 %v3589, 124
      %v3597 = vpop.permute.xlu0 %3596
      %3598 = vrot.lane.b32.xlu0 %v3591, 124
      %v3599 = vpop.permute.xlu0 %3598
      %v3604 = vadd.f32 %v3564, %v3593
      %v3605 = vadd.f32 %v3565, %v3595
      %v3606 = vadd.f32 %v3566, %v3597
      %v3607 = vadd.f32 %v3567, %v3599
      %s3608 = sld [smem:[#allocation6 + $0x58]]
      %v3609 = vstv %s3608
      %v3610 = vmul.f32 %v3609, %v2416
      %v3611 = vmul.f32 %v3609, %v2417
      %v3612 = vmul.f32 %v3609, %v2418
      %v3613 = vmul.f32 %v3609, %v2419
      %v3614 = vmul.f32 %v3609, %v2420
      %v3615 = vmul.f32 %v3609, %v2421
      %v3622 = vrot.slane %v3610, 5
      %v3623 = vrot.slane %v3611, 5
      %v3624 = vsel %vm769, %v3622, %v3623
      %v3625 = vrot.slane %v3612, 5
      %v3626 = vsel %vm769, %v3623, %v3625
      %v3627 = vrot.slane %v3613, 5
      %v3628 = vrot.slane %v3614, 5
      %v3629 = vsel %vm769, %v3627, %v3628
      %v3630 = vrot.slane %v3615, 5
      %v3631 = vsel %vm769, %v3628, %v3630
      %3632 = vrot.lane.b32.xlu0 %v3624, 124
      %v3633 = vpop.permute.xlu0 %3632
      %3634 = vrot.lane.b32.xlu0 %v3626, 124
      %v3635 = vpop.permute.xlu0 %3634
      %3636 = vrot.lane.b32.xlu0 %v3629, 124
      %v3637 = vpop.permute.xlu0 %3636
      %3638 = vrot.lane.b32.xlu0 %v3631, 124
      %v3639 = vpop.permute.xlu0 %3638
      %v3644 = vadd.f32 %v3604, %v3633
      %v3645 = vadd.f32 %v3605, %v3635
      %v3646 = vadd.f32 %v3606, %v3637
      %v3647 = vadd.f32 %v3607, %v3639
      %s3648 = sld [smem:[#allocation6 + $0x5f]]
      %v3649 = vstv %s3648
      %v3650 = vmul.f32 %v3649, %v2416
      %v3651 = vmul.f32 %v3649, %v2417
      %v3652 = vmul.f32 %v3649, %v2418
      %v3653 = vmul.f32 %v3649, %v2419
      %v3654 = vmul.f32 %v3649, %v2420
      %v3655 = vmul.f32 %v3649, %v2421
      %v3662 = vrot.slane %v3650, 6
      %v3663 = vrot.slane %v3651, 6
      %v3664 = vsel %vm102, %v3662, %v3663
      %v3665 = vrot.slane %v3652, 6
      %v3666 = vsel %vm102, %v3663, %v3665
      %v3667 = vrot.slane %v3653, 6
      %v3668 = vrot.slane %v3654, 6
      %v3669 = vsel %vm102, %v3667, %v3668
      %v3670 = vrot.slane %v3655, 6
      %v3671 = vsel %vm102, %v3668, %v3670
      %3672 = vrot.lane.b32.xlu0 %v3664, 124
      %v3673 = vpop.permute.xlu0 %3672
      %3674 = vrot.lane.b32.xlu0 %v3666, 124
      %v3675 = vpop.permute.xlu0 %3674
      %3676 = vrot.lane.b32.xlu0 %v3669, 124
      %v3677 = vpop.permute.xlu0 %3676
      %3678 = vrot.lane.b32.xlu0 %v3671, 124
      %v3679 = vpop.permute.xlu0 %3678
      %v3684 = vadd.f32 %v3644, %v3673
      %v3685 = vadd.f32 %v3645, %v3675
      %v3686 = vadd.f32 %v3646, %v3677
      %v3687 = vadd.f32 %v3647, %v3679
      %s3688 = sld [smem:[#allocation6 + $0x36]]
      %v3689 = vstv %s3688
      %v3690 = vmul.f32 %v3689, %v2416
      %v3691 = vmul.f32 %v3689, %v2417
      %v3692 = vmul.f32 %v3689, %v2419
      %v3693 = vmul.f32 %v3689, %v2420
      %3698 = vrot.lane.b32.xlu0 %v3690, 123
      %v3699 = vpop.permute.xlu0 %3698
      %3700 = vrot.lane.b32.xlu0 %v3691, 123
      %v3701 = vpop.permute.xlu0 %3700
      %3702 = vrot.lane.b32.xlu0 %v3692, 123
      %v3703 = vpop.permute.xlu0 %3702
      %3704 = vrot.lane.b32.xlu0 %v3693, 123
      %v3705 = vpop.permute.xlu0 %3704
      %v3710 = vadd.f32 %v3684, %v3699
      %v3711 = vadd.f32 %v3685, %v3701
      %v3712 = vadd.f32 %v3686, %v3703
      %v3713 = vadd.f32 %v3687, %v3705
      %s3714 = sld [smem:[#allocation6 + $0x3d]]
      %v3715 = vstv %s3714
      %v3716 = vmul.f32 %v3715, %v2416
      %v3717 = vmul.f32 %v3715, %v2417
      %v3718 = vmul.f32 %v3715, %v2418
      %v3719 = vmul.f32 %v3715, %v2419
      %v3720 = vmul.f32 %v3715, %v2420
      %v3721 = vmul.f32 %v3715, %v2421
      %v3728 = vrot.slane %v3716, 1
      %v3729 = vrot.slane %v3717, 1
      %v3730 = vsel %vm638, %v3728, %v3729
      %v3731 = vrot.slane %v3718, 1
      %v3732 = vsel %vm638, %v3729, %v3731
      %v3733 = vrot.slane %v3719, 1
      %v3734 = vrot.slane %v3720, 1
      %v3735 = vsel %vm638, %v3733, %v3734
      %v3736 = vrot.slane %v3721, 1
      %v3737 = vsel %vm638, %v3734, %v3736
      %3738 = vrot.lane.b32.xlu0 %v3730, 123
      %v3739 = vpop.permute.xlu0 %3738
      %3740 = vrot.lane.b32.xlu0 %v3732, 123
      %v3741 = vpop.permute.xlu0 %3740
      %3742 = vrot.lane.b32.xlu0 %v3735, 123
      %v3743 = vpop.permute.xlu0 %3742
      %3744 = vrot.lane.b32.xlu0 %v3737, 123
      %v3745 = vpop.permute.xlu0 %3744
      %v3750 = vadd.f32 %v3710, %v3739
      %v3751 = vadd.f32 %v3711, %v3741
      %v3752 = vadd.f32 %v3712, %v3743
      %v3753 = vadd.f32 %v3713, %v3745
      %s3754 = sld [smem:[#allocation6 + $0x44]]
      %v3755 = vstv %s3754
      %v3756 = vmul.f32 %v3755, %v2416
      %v3757 = vmul.f32 %v3755, %v2417
      %v3758 = vmul.f32 %v3755, %v2418
      %v3759 = vmul.f32 %v3755, %v2419
      %v3760 = vmul.f32 %v3755, %v2420
      %v3761 = vmul.f32 %v3755, %v2421
      %v3768 = vrot.slane %v3756, 2
      %v3769 = vrot.slane %v3757, 2
      %v3770 = vsel %vm671, %v3768, %v3769
      %v3771 = vrot.slane %v3758, 2
      %v3772 = vsel %vm671, %v3769, %v3771
      %v3773 = vrot.slane %v3759, 2
      %v3774 = vrot.slane %v3760, 2
      %v3775 = vsel %vm671, %v3773, %v3774
      %v3776 = vrot.slane %v3761, 2
      %v3777 = vsel %vm671, %v3774, %v3776
      %3778 = vrot.lane.b32.xlu0 %v3770, 123
      %v3779 = vpop.permute.xlu0 %3778
      %3780 = vrot.lane.b32.xlu0 %v3772, 123
      %v3781 = vpop.permute.xlu0 %3780
      %3782 = vrot.lane.b32.xlu0 %v3775, 123
      %v3783 = vpop.permute.xlu0 %3782
      %3784 = vrot.lane.b32.xlu0 %v3777, 123
      %v3785 = vpop.permute.xlu0 %3784
      %v3790 = vadd.f32 %v3750, %v3779
      %v3791 = vadd.f32 %v3751, %v3781
      %v3792 = vadd.f32 %v3752, %v3783
      %v3793 = vadd.f32 %v3753, %v3785
      %s3794 = sld [smem:[#allocation6 + $0x4b]]
      %v3795 = vstv %s3794
      %v3796 = vmul.f32 %v3795, %v2416
      %v3797 = vmul.f32 %v3795, %v2417
      %v3798 = vmul.f32 %v3795, %v2418
      %v3799 = vmul.f32 %v3795, %v2419
      %v3800 = vmul.f32 %v3795, %v2420
      %v3801 = vmul.f32 %v3795, %v2421
      %v3808 = vrot.slane %v3796, 3
      %v3809 = vrot.slane %v3797, 3
      %v3810 = vsel %vm704, %v3808, %v3809
      %v3811 = vrot.slane %v3798, 3
      %v3812 = vsel %vm704, %v3809, %v3811
      %v3813 = vrot.slane %v3799, 3
      %v3814 = vrot.slane %v3800, 3
      %v3815 = vsel %vm704, %v3813, %v3814
      %v3816 = vrot.slane %v3801, 3
      %v3817 = vsel %vm704, %v3814, %v3816
      %3818 = vrot.lane.b32.xlu0 %v3810, 123
      %v3819 = vpop.permute.xlu0 %3818
      %3820 = vrot.lane.b32.xlu0 %v3812, 123
      %v3821 = vpop.permute.xlu0 %3820
      %3822 = vrot.lane.b32.xlu0 %v3815, 123
      %v3823 = vpop.permute.xlu0 %3822
      %3824 = vrot.lane.b32.xlu0 %v3817, 123
      %v3825 = vpop.permute.xlu0 %3824
      %v3830 = vadd.f32 %v3790, %v3819
      %v3831 = vadd.f32 %v3791, %v3821
      %v3832 = vadd.f32 %v3792, %v3823
      %v3833 = vadd.f32 %v3793, %v3825
      %s3834 = sld [smem:[#allocation6 + $0x52]]
      %v3835 = vstv %s3834
      %v3836 = vmul.f32 %v3835, %v2416
      %v3837 = vmul.f32 %v3835, %v2417
      %v3838 = vmul.f32 %v3835, %v2418
      %v3839 = vmul.f32 %v3835, %v2419
      %v3840 = vmul.f32 %v3835, %v2420
      %v3841 = vmul.f32 %v3835, %v2421
      %v3848 = vrot.slane %v3836, 4
      %v3849 = vrot.slane %v3837, 4
      %v3850 = vsel %vm67, %v3848, %v3849
      %v3851 = vrot.slane %v3838, 4
      %v3852 = vsel %vm67, %v3849, %v3851
      %v3853 = vrot.slane %v3839, 4
      %v3854 = vrot.slane %v3840, 4
      %v3855 = vsel %vm67, %v3853, %v3854
      %v3856 = vrot.slane %v3841, 4
      %v3857 = vsel %vm67, %v3854, %v3856
      %3858 = vrot.lane.b32.xlu0 %v3850, 123
      %v3859 = vpop.permute.xlu0 %3858
      %3860 = vrot.lane.b32.xlu0 %v3852, 123
      %v3861 = vpop.permute.xlu0 %3860
      %3862 = vrot.lane.b32.xlu0 %v3855, 123
      %v3863 = vpop.permute.xlu0 %3862
      %3864 = vrot.lane.b32.xlu0 %v3857, 123
      %v3865 = vpop.permute.xlu0 %3864
      %v3870 = vadd.f32 %v3830, %v3859
      %v3871 = vadd.f32 %v3831, %v3861
      %v3872 = vadd.f32 %v3832, %v3863
      %v3873 = vadd.f32 %v3833, %v3865
      %s3874 = sld [smem:[#allocation6 + $0x59]]
      %v3875 = vstv %s3874
      %v3876 = vmul.f32 %v3875, %v2416
      %v3877 = vmul.f32 %v3875, %v2417
      %v3878 = vmul.f32 %v3875, %v2418
      %v3879 = vmul.f32 %v3875, %v2419
      %v3880 = vmul.f32 %v3875, %v2420
      %v3881 = vmul.f32 %v3875, %v2421
      %v3888 = vrot.slane %v3876, 5
      %v3889 = vrot.slane %v3877, 5
      %v3890 = vsel %vm769, %v3888, %v3889
      %v3891 = vrot.slane %v3878, 5
      %v3892 = vsel %vm769, %v3889, %v3891
      %v3893 = vrot.slane %v3879, 5
      %v3894 = vrot.slane %v3880, 5
      %v3895 = vsel %vm769, %v3893, %v3894
      %v3896 = vrot.slane %v3881, 5
      %v3897 = vsel %vm769, %v3894, %v3896
      %3898 = vrot.lane.b32.xlu0 %v3890, 123
      %v3899 = vpop.permute.xlu0 %3898
      %3900 = vrot.lane.b32.xlu0 %v3892, 123
      %v3901 = vpop.permute.xlu0 %3900
      %3902 = vrot.lane.b32.xlu0 %v3895, 123
      %v3903 = vpop.permute.xlu0 %3902
      %3904 = vrot.lane.b32.xlu0 %v3897, 123
      %v3905 = vpop.permute.xlu0 %3904
      %v3910 = vadd.f32 %v3870, %v3899
      %v3911 = vadd.f32 %v3871, %v3901
      %v3912 = vadd.f32 %v3872, %v3903
      %v3913 = vadd.f32 %v3873, %v3905
      %s3914 = sld [smem:[#allocation6 + $0x60]]
      %v3915 = vstv %s3914
      %v3916 = vmul.f32 %v3915, %v2416
      %v3917 = vmul.f32 %v3915, %v2417
      %v3918 = vmul.f32 %v3915, %v2418
      %v3919 = vmul.f32 %v3915, %v2419
      %v3920 = vmul.f32 %v3915, %v2420
      %v3921 = vmul.f32 %v3915, %v2421
      %v3928 = vrot.slane %v3916, 6
      %v3929 = vrot.slane %v3917, 6
      %v3930 = vsel %vm102, %v3928, %v3929
      %v3931 = vrot.slane %v3918, 6
      %v3932 = vsel %vm102, %v3929, %v3931
      %v3933 = vrot.slane %v3919, 6
      %v3934 = vrot.slane %v3920, 6
      %v3935 = vsel %vm102, %v3933, %v3934
      %v3936 = vrot.slane %v3921, 6
      %v3937 = vsel %vm102, %v3934, %v3936
      %3938 = vrot.lane.b32.xlu0 %v3930, 123
      %v3939 = vpop.permute.xlu0 %3938
      %3940 = vrot.lane.b32.xlu0 %v3932, 123
      %v3941 = vpop.permute.xlu0 %3940
      %3942 = vrot.lane.b32.xlu0 %v3935, 123
      %v3943 = vpop.permute.xlu0 %3942
      %3944 = vrot.lane.b32.xlu0 %v3937, 123
      %v3945 = vpop.permute.xlu0 %3944
      %v3950 = vadd.f32 %v3910, %v3939
      %v3951 = vadd.f32 %v3911, %v3941
      %v3952 = vadd.f32 %v3912, %v3943
      %v3953 = vadd.f32 %v3913, %v3945
      %s3954 = sld [smem:[#allocation6 + $0x37]]
      %v3955 = vstv %s3954
      %v3956 = vmul.f32 %v3955, %v2416
      %v3957 = vmul.f32 %v3955, %v2417
      %v3958 = vmul.f32 %v3955, %v2419
      %v3959 = vmul.f32 %v3955, %v2420
      %3964 = vrot.lane.b32.xlu0 %v3956, 122
      %v3965 = vpop.permute.xlu0 %3964
      %3966 = vrot.lane.b32.xlu0 %v3957, 122
      %v3967 = vpop.permute.xlu0 %3966
      %3968 = vrot.lane.b32.xlu0 %v3958, 122
      %v3969 = vpop.permute.xlu0 %3968
      %3970 = vrot.lane.b32.xlu0 %v3959, 122
      %v3971 = vpop.permute.xlu0 %3970
      %v3976 = vadd.f32 %v3950, %v3965
      %v3977 = vadd.f32 %v3951, %v3967
      %v3978 = vadd.f32 %v3952, %v3969
      %v3979 = vadd.f32 %v3953, %v3971
      %s3980 = sld [smem:[#allocation6 + $0x3e]]
      %v3981 = vstv %s3980
      %v3982 = vmul.f32 %v3981, %v2416
      %v3983 = vmul.f32 %v3981, %v2417
      %v3984 = vmul.f32 %v3981, %v2418
      %v3985 = vmul.f32 %v3981, %v2419
      %v3986 = vmul.f32 %v3981, %v2420
      %v3987 = vmul.f32 %v3981, %v2421
      %v3994 = vrot.slane %v3982, 1
      %v3995 = vrot.slane %v3983, 1
      %v3996 = vsel %vm638, %v3994, %v3995
      %v3997 = vrot.slane %v3984, 1
      %v3998 = vsel %vm638, %v3995, %v3997
      %v3999 = vrot.slane %v3985, 1
      %v4000 = vrot.slane %v3986, 1
      %v4001 = vsel %vm638, %v3999, %v4000
      %v4002 = vrot.slane %v3987, 1
      %v4003 = vsel %vm638, %v4000, %v4002
      %4004 = vrot.lane.b32.xlu0 %v3996, 122
      %v4005 = vpop.permute.xlu0 %4004
      %4006 = vrot.lane.b32.xlu0 %v3998, 122
      %v4007 = vpop.permute.xlu0 %4006
      %4008 = vrot.lane.b32.xlu0 %v4001, 122
      %v4009 = vpop.permute.xlu0 %4008
      %4010 = vrot.lane.b32.xlu0 %v4003, 122
      %v4011 = vpop.permute.xlu0 %4010
      %v4016 = vadd.f32 %v3976, %v4005
      %v4017 = vadd.f32 %v3977, %v4007
      %v4018 = vadd.f32 %v3978, %v4009
      %v4019 = vadd.f32 %v3979, %v4011
      %s4020 = sld [smem:[#allocation6 + $0x45]]
      %v4021 = vstv %s4020
      %v4022 = vmul.f32 %v4021, %v2416
      %v4023 = vmul.f32 %v4021, %v2417
      %v4024 = vmul.f32 %v4021, %v2418
      %v4025 = vmul.f32 %v4021, %v2419
      %v4026 = vmul.f32 %v4021, %v2420
      %v4027 = vmul.f32 %v4021, %v2421
      %v4034 = vrot.slane %v4022, 2
      %v4035 = vrot.slane %v4023, 2
      %v4036 = vsel %vm671, %v4034, %v4035
      %v4037 = vrot.slane %v4024, 2
      %v4038 = vsel %vm671, %v4035, %v4037
      %v4039 = vrot.slane %v4025, 2
      %v4040 = vrot.slane %v4026, 2
      %v4041 = vsel %vm671, %v4039, %v4040
      %v4042 = vrot.slane %v4027, 2
      %v4043 = vsel %vm671, %v4040, %v4042
      %4044 = vrot.lane.b32.xlu0 %v4036, 122
      %v4045 = vpop.permute.xlu0 %4044
      %4046 = vrot.lane.b32.xlu0 %v4038, 122
      %v4047 = vpop.permute.xlu0 %4046
      %4048 = vrot.lane.b32.xlu0 %v4041, 122
      %v4049 = vpop.permute.xlu0 %4048
      %4050 = vrot.lane.b32.xlu0 %v4043, 122
      %v4051 = vpop.permute.xlu0 %4050
      %v4056 = vadd.f32 %v4016, %v4045
      %v4057 = vadd.f32 %v4017, %v4047
      %v4058 = vadd.f32 %v4018, %v4049
      %v4059 = vadd.f32 %v4019, %v4051
      %s4060 = sld [smem:[#allocation6 + $0x4c]]
      %v4061 = vstv %s4060
      %v4062 = vmul.f32 %v4061, %v2416
      %v4063 = vmul.f32 %v4061, %v2417
      %v4064 = vmul.f32 %v4061, %v2418
      %v4065 = vmul.f32 %v4061, %v2419
      %v4066 = vmul.f32 %v4061, %v2420
      %v4067 = vmul.f32 %v4061, %v2421
      %v4074 = vrot.slane %v4062, 3
      %v4075 = vrot.slane %v4063, 3
      %v4076 = vsel %vm704, %v4074, %v4075
      %v4077 = vrot.slane %v4064, 3
      %v4078 = vsel %vm704, %v4075, %v4077
      %v4079 = vrot.slane %v4065, 3
      %v4080 = vrot.slane %v4066, 3
      %v4081 = vsel %vm704, %v4079, %v4080
      %v4082 = vrot.slane %v4067, 3
      %v4083 = vsel %vm704, %v4080, %v4082
      %4084 = vrot.lane.b32.xlu0 %v4076, 122
      %v4085 = vpop.permute.xlu0 %4084
      %4086 = vrot.lane.b32.xlu0 %v4078, 122
      %v4087 = vpop.permute.xlu0 %4086
      %4088 = vrot.lane.b32.xlu0 %v4081, 122
      %v4089 = vpop.permute.xlu0 %4088
      %4090 = vrot.lane.b32.xlu0 %v4083, 122
      %v4091 = vpop.permute.xlu0 %4090
      %v4096 = vadd.f32 %v4056, %v4085
      %v4097 = vadd.f32 %v4057, %v4087
      %v4098 = vadd.f32 %v4058, %v4089
      %v4099 = vadd.f32 %v4059, %v4091
      %s4100 = sld [smem:[#allocation6 + $0x53]]
      %v4101 = vstv %s4100
      %v4102 = vmul.f32 %v4101, %v2416
      %v4103 = vmul.f32 %v4101, %v2417
      %v4104 = vmul.f32 %v4101, %v2418
      %v4105 = vmul.f32 %v4101, %v2419
      %v4106 = vmul.f32 %v4101, %v2420
      %v4107 = vmul.f32 %v4101, %v2421
      %v4114 = vrot.slane %v4102, 4
      %v4115 = vrot.slane %v4103, 4
      %v4116 = vsel %vm67, %v4114, %v4115
      %v4117 = vrot.slane %v4104, 4
      %v4118 = vsel %vm67, %v4115, %v4117
      %v4119 = vrot.slane %v4105, 4
      %v4120 = vrot.slane %v4106, 4
      %v4121 = vsel %vm67, %v4119, %v4120
      %v4122 = vrot.slane %v4107, 4
      %v4123 = vsel %vm67, %v4120, %v4122
      %4124 = vrot.lane.b32.xlu0 %v4116, 122
      %v4125 = vpop.permute.xlu0 %4124
      %4126 = vrot.lane.b32.xlu0 %v4118, 122
      %v4127 = vpop.permute.xlu0 %4126
      %4128 = vrot.lane.b32.xlu0 %v4121, 122
      %v4129 = vpop.permute.xlu0 %4128
      %4130 = vrot.lane.b32.xlu0 %v4123, 122
      %v4131 = vpop.permute.xlu0 %4130
      %v4136 = vadd.f32 %v4096, %v4125
      %v4137 = vadd.f32 %v4097, %v4127
      %v4138 = vadd.f32 %v4098, %v4129
      %v4139 = vadd.f32 %v4099, %v4131
      %s4140 = sld [smem:[#allocation6 + $0x5a]]
      %v4141 = vstv %s4140
      %v4142 = vmul.f32 %v4141, %v2416
      %v4143 = vmul.f32 %v4141, %v2417
      %v4144 = vmul.f32 %v4141, %v2418
      %v4145 = vmul.f32 %v4141, %v2419
      %v4146 = vmul.f32 %v4141, %v2420
      %v4147 = vmul.f32 %v4141, %v2421
      %v4154 = vrot.slane %v4142, 5
      %v4155 = vrot.slane %v4143, 5
      %v4156 = vsel %vm769, %v4154, %v4155
      %v4157 = vrot.slane %v4144, 5
      %v4158 = vsel %vm769, %v4155, %v4157
      %v4159 = vrot.slane %v4145, 5
      %v4160 = vrot.slane %v4146, 5
      %v4161 = vsel %vm769, %v4159, %v4160
      %v4162 = vrot.slane %v4147, 5
      %v4163 = vsel %vm769, %v4160, %v4162
      %4164 = vrot.lane.b32.xlu0 %v4156, 122
      %v4165 = vpop.permute.xlu0 %4164
      %4166 = vrot.lane.b32.xlu0 %v4158, 122
      %v4167 = vpop.permute.xlu0 %4166
      %4168 = vrot.lane.b32.xlu0 %v4161, 122
      %v4169 = vpop.permute.xlu0 %4168
      %4170 = vrot.lane.b32.xlu0 %v4163, 122
      %v4171 = vpop.permute.xlu0 %4170
      %v4176 = vadd.f32 %v4136, %v4165
      %v4177 = vadd.f32 %v4137, %v4167
      %v4178 = vadd.f32 %v4138, %v4169
      %v4179 = vadd.f32 %v4139, %v4171
      %s4180 = sld [smem:[#allocation6 + $0x61]]
      %v4181 = vstv %s4180
      %v4182 = vmul.f32 %v4181, %v2416
      %v4183 = vmul.f32 %v4181, %v2417
      %v4184 = vmul.f32 %v4181, %v2418
      %v4185 = vmul.f32 %v4181, %v2419
      %v4186 = vmul.f32 %v4181, %v2420
      %v4187 = vmul.f32 %v4181, %v2421
      %v4194 = vrot.slane %v4182, 6
      %v4195 = vrot.slane %v4183, 6
      %v4196 = vsel %vm102, %v4194, %v4195
      %v4197 = vrot.slane %v4184, 6
      %v4198 = vsel %vm102, %v4195, %v4197
      %v4199 = vrot.slane %v4185, 6
      %v4200 = vrot.slane %v4186, 6
      %v4201 = vsel %vm102, %v4199, %v4200
      %v4202 = vrot.slane %v4187, 6
      %v4203 = vsel %vm102, %v4200, %v4202
      %4204 = vrot.lane.b32.xlu0 %v4196, 122
      %v4205 = vpop.permute.xlu0 %4204
      %4206 = vrot.lane.b32.xlu0 %v4198, 122
      %v4207 = vpop.permute.xlu0 %4206
      %4208 = vrot.lane.b32.xlu0 %v4201, 122
      %v4209 = vpop.permute.xlu0 %4208
      %4210 = vrot.lane.b32.xlu0 %v4203, 122
      %v4211 = vpop.permute.xlu0 %4210
      %v4216 = vadd.f32 %v4176, %v4205
      %v4217 = vadd.f32 %v4177, %v4207
      %v4218 = vadd.f32 %v4178, %v4209
      %v4219 = vadd.f32 %v4179, %v4211
      %v4220 = vxor.u32 %v4216, 2147483648
      %v4221 = vxor.u32 %v4217, 2147483648
      %v4222 = vxor.u32 %v4218, 2147483648
      %v4223 = vxor.u32 %v4219, 2147483648
      %v4224 = vmul.f32 %v4220, 1.442695
      %v4225 = vpow.pop %v4224
      %v4226 = vmul.f32 %v4221, 1.442695
      %v4227 = vpow.pop %v4226
      %v4228 = vmul.f32 %v4222, 1.442695
      %v4229 = vpow.pop %v4228
      %v4230 = vmul.f32 %v4223, 1.442695
      %v4231 = vpow.pop %v4230
      %v4232 = vadd.f32 %v4225, 1.0
      %v4233 = vadd.f32 %v4227, 1.0
      %v4234 = vadd.f32 %v4229, 1.0
      %v4235 = vadd.f32 %v4231, 1.0
      %v4236 = vrcp.pop %v4232
      %v4237 = vmul.f32 %v4232, %v4236
      %v4238 = vsub.f32 1.0, %v4237
      %v4239 = vmul.f32 %v4236, %v4238
      %v4240 = vadd.f32 %v4236, %v4239
      %vm4241 = vweird.f32 %v4232
      %vm4242 = vweird.f32 %v4236
      %vm4243 = vmor %vm4241, %vm4242
      %v4244 = vsel %vm4243, %v4236, %v4240
      %v4245 = vand.u32 2147483647, %v4232
      %vm4246 = vcmp.eq.f32.partialorder %v4245, 8.507059e+37
      %v4247 = vand.u32 %v4232, 2147483648
      %v4248 = vor.u32 1.1754944e-38, %v4247
      %v4249 = vsel %vm4246, %v4248, %v4244
      %v4250 = vmul.f32 1.0, %v4249
      %v4251 = vrcp.pop %v4233
      %v4252 = vmul.f32 %v4233, %v4251
      %v4253 = vsub.f32 1.0, %v4252
      %v4254 = vmul.f32 %v4251, %v4253
      %v4255 = vadd.f32 %v4251, %v4254
      %vm4256 = vweird.f32 %v4233
      %vm4257 = vweird.f32 %v4251
      %vm4258 = vmor %vm4256, %vm4257
      %v4259 = vsel %vm4258, %v4251, %v4255
      %v4260 = vand.u32 2147483647, %v4233
      %vm4261 = vcmp.eq.f32.partialorder %v4260, 8.507059e+37
      %v4262 = vand.u32 %v4233, 2147483648
      %v4263 = vor.u32 1.1754944e-38, %v4262
      %v4264 = vsel %vm4261, %v4263, %v4259
      %v4265 = vmul.f32 1.0, %v4264
      %v4266 = vrcp.pop %v4234
      %v4267 = vmul.f32 %v4234, %v4266
      %v4268 = vsub.f32 1.0, %v4267
      %v4269 = vmul.f32 %v4266, %v4268
      %v4270 = vadd.f32 %v4266, %v4269
      %vm4271 = vweird.f32 %v4234
      %vm4272 = vweird.f32 %v4266
      %vm4273 = vmor %vm4271, %vm4272
      %v4274 = vsel %vm4273, %v4266, %v4270
      %v4275 = vand.u32 2147483647, %v4234
      %vm4276 = vcmp.eq.f32.partialorder %v4275, 8.507059e+37
      %v4277 = vand.u32 %v4234, 2147483648
      %v4278 = vor.u32 1.1754944e-38, %v4277
      %v4279 = vsel %vm4276, %v4278, %v4274
      %v4280 = vmul.f32 1.0, %v4279
      %v4281 = vrcp.pop %v4235
      %v4282 = vmul.f32 %v4235, %v4281
      %v4283 = vsub.f32 1.0, %v4282
      %v4284 = vmul.f32 %v4281, %v4283
      %v4285 = vadd.f32 %v4281, %v4284
      %vm4286 = vweird.f32 %v4235
      %vm4287 = vweird.f32 %v4281
      %vm4288 = vmor %vm4286, %vm4287
      %v4289 = vsel %vm4288, %v4281, %v4285
      %v4290 = vand.u32 2147483647, %v4235
      %vm4291 = vcmp.eq.f32.partialorder %v4290, 8.507059e+37
      %v4292 = vand.u32 %v4235, 2147483648
      %v4293 = vor.u32 1.1754944e-38, %v4292
      %v4294 = vsel %vm4291, %v4293, %v4289
      %v4295 = vmul.f32 1.0, %v4294
      %v4296 = vlaneseq
      %vm4297 = vcmp.ge.s32.totalorder %v4296, 0
      %vm4298 = vcmp.lt.s32.totalorder %v4296, 16
      %vm4299 = vmand %vm4297, %vm4298
      %4300 = vst.msk [vmem:[#allocation11] sm:$0x1] %vm4299, %v4250
      %4301 = vst.msk [vmem:[#allocation11 + $0x2] sm:$0x1] %vm4299, %v4280
      %4304 = vst [vmem:[#allocation1] sm:$0xff] %v4250
      %s4305 = scalar_lea.vmem [#allocation1], 1
      %v4306 = vld [vmem:[%s4305] ss:$9 sm:$0xff]
      %4307 = vst [vmem:[#allocation1] sm:$0xff] %v4280
      %v4308 = vld [vmem:[%s4305] ss:$9 sm:$0xff]
      %4309 = vrot.lane.b32.xlu0 %v4306, 16
      %v4310 = vpop.permute.xlu0 %4309
      %4311 = vrot.lane.b32.xlu0 %v4308, 16
      %v4312 = vpop.permute.xlu0 %4311
      %vm4315 = vcmp.ge.s32.totalorder %v4296, 16
      %vm4316 = vcmp.lt.s32.totalorder %v4296, 32
      %vm4317 = vmand %vm4315, %vm4316
      %4318 = vst.msk [vmem:[#allocation11] sm:$0x1] %vm4317, %v4310
      %4319 = vst.msk [vmem:[#allocation11 + $0x2] sm:$0x1] %vm4317, %v4312
      %4320 = vst [vmem:[#allocation1] sm:$0xff] %v4250
      %s4321 = scalar_lea.vmem [#allocation1], 2
      %v4322 = vld [vmem:[%s4321] ss:$9 sm:$0xff]
      %4323 = vst [vmem:[#allocation1] sm:$0xff] %v4280
      %v4324 = vld [vmem:[%s4321] ss:$9 sm:$0xff]
      %4325 = vrot.lane.b32.xlu0 %v4322, 32
      %v4326 = vpop.permute.xlu0 %4325
      %4327 = vrot.lane.b32.xlu0 %v4324, 32
      %v4328 = vpop.permute.xlu0 %4327
      %vm4331 = vcmp.ge.s32.totalorder %v4296, 32
      %vm4332 = vcmp.lt.s32.totalorder %v4296, 48
      %vm4333 = vmand %vm4331, %vm4332
      %4334 = vst.msk [vmem:[#allocation11] sm:$0x1] %vm4333, %v4326
      %4335 = vst.msk [vmem:[#allocation11 + $0x2] sm:$0x1] %vm4333, %v4328
      %4336 = vst [vmem:[#allocation1] sm:$0xff] %v4250
      %s4337 = scalar_lea.vmem [#allocation1], 3
      %v4338 = vld [vmem:[%s4337] ss:$9 sm:$0xff]
      %4339 = vst [vmem:[#allocation1] sm:$0xff] %v4280
      %v4340 = vld [vmem:[%s4337] ss:$9 sm:$0xff]
      %4341 = vrot.lane.b32.xlu0 %v4338, 48
      %v4342 = vpop.permute.xlu0 %4341
      %4343 = vrot.lane.b32.xlu0 %v4340, 48
      %v4344 = vpop.permute.xlu0 %4343
      %vm4347 = vcmp.ge.s32.totalorder %v4296, 48
      %vm4348 = vcmp.lt.s32.totalorder %v4296, 64
      %vm4349 = vmand %vm4347, %vm4348
      %4350 = vst.msk [vmem:[#allocation11] sm:$0x1] %vm4349, %v4342
      %4351 = vst.msk [vmem:[#allocation11 + $0x2] sm:$0x1] %vm4349, %v4344
      %4352 = vst [vmem:[#allocation1] sm:$0xff] %v4250
      %s4353 = scalar_lea.vmem [#allocation1], 4
      %v4354 = vld [vmem:[%s4353] ss:$9 sm:$0xff]
      %4355 = vst [vmem:[#allocation1] sm:$0xff] %v4280
      %v4356 = vld [vmem:[%s4353] ss:$9 sm:$0xff]
      %4357 = vrot.lane.b32.xlu0 %v4354, 64
      %v4358 = vpop.permute.xlu0 %4357
      %4359 = vrot.lane.b32.xlu0 %v4356, 64
      %v4360 = vpop.permute.xlu0 %4359
      %vm4363 = vcmp.ge.s32.totalorder %v4296, 64
      %vm4364 = vcmp.lt.s32.totalorder %v4296, 80
      %vm4365 = vmand %vm4363, %vm4364
      %4366 = vst.msk [vmem:[#allocation11] sm:$0x1] %vm4365, %v4358
      %4367 = vst.msk [vmem:[#allocation11 + $0x2] sm:$0x1] %vm4365, %v4360
      %4368 = vst [vmem:[#allocation1] sm:$0xff] %v4250
      %s4369 = scalar_lea.vmem [#allocation1], 5
      %v4370 = vld [vmem:[%s4369] ss:$9 sm:$0xff]
      %4371 = vst [vmem:[#allocation1] sm:$0xff] %v4280
      %v4372 = vld [vmem:[%s4369] ss:$9 sm:$0xff]
      %4373 = vrot.lane.b32.xlu0 %v4370, 80
      %v4374 = vpop.permute.xlu0 %4373
      %4375 = vrot.lane.b32.xlu0 %v4372, 80
      %v4376 = vpop.permute.xlu0 %4375
      %vm4379 = vcmp.ge.s32.totalorder %v4296, 80
      %vm4380 = vcmp.lt.s32.totalorder %v4296, 96
      %vm4381 = vmand %vm4379, %vm4380
      %4382 = vst.msk [vmem:[#allocation11] sm:$0x1] %vm4381, %v4374
      %4383 = vst.msk [vmem:[#allocation11 + $0x2] sm:$0x1] %vm4381, %v4376
      %4384 = vst [vmem:[#allocation1] sm:$0xff] %v4250
      %s4385 = scalar_lea.vmem [#allocation1], 6
      %v4386 = vld [vmem:[%s4385] ss:$9 sm:$0xff]
      %4387 = vst [vmem:[#allocation1] sm:$0xff] %v4280
      %v4388 = vld [vmem:[%s4385] ss:$9 sm:$0xff]
      %4389 = vrot.lane.b32.xlu0 %v4386, 96
      %v4390 = vpop.permute.xlu0 %4389
      %4391 = vrot.lane.b32.xlu0 %v4388, 96
      %v4392 = vpop.permute.xlu0 %4391
      %vm4395 = vcmp.ge.s32.totalorder %v4296, 96
      %vm4396 = vcmp.lt.s32.totalorder %v4296, 112
      %vm4397 = vmand %vm4395, %vm4396
      %4398 = vst.msk [vmem:[#allocation11] sm:$0x1] %vm4397, %v4390
      %4399 = vst.msk [vmem:[#allocation11 + $0x2] sm:$0x1] %vm4397, %v4392
      %4400 = vst [vmem:[#allocation1] sm:$0xff] %v4250
      %s4401 = scalar_lea.vmem [#allocation1], 7
      %v4402 = vld [vmem:[%s4401] ss:$9 sm:$0xff]
      %4403 = vst [vmem:[#allocation1] sm:$0xff] %v4280
      %v4404 = vld [vmem:[%s4401] ss:$9 sm:$0xff]
      %4405 = vrot.lane.b32.xlu0 %v4402, 112
      %v4406 = vpop.permute.xlu0 %4405
      %4407 = vrot.lane.b32.xlu0 %v4404, 112
      %v4408 = vpop.permute.xlu0 %4407
      %vm4411 = vcmp.ge.s32.totalorder %v4296, 112
      %vm4412 = vcmp.lt.s32.totalorder %v4296, 128
      %vm4413 = vmand %vm4411, %vm4412
      %4414 = vst.msk [vmem:[#allocation11] sm:$0x1] %vm4413, %v4406
      %4415 = vst.msk [vmem:[#allocation11 + $0x2] sm:$0x1] %vm4413, %v4408
      %4416 = vst.msk [vmem:[#allocation11 + $0x1] sm:$0x1] %vm4299, %v4265
      %4417 = vst.msk [vmem:[#allocation11 + $0x3] sm:$0x1] %vm4299, %v4295
      %4420 = vst [vmem:[#allocation1] sm:$0xff] %v4265
      %s4421 = scalar_lea.vmem [#allocation1], 1
      %v4422 = vld [vmem:[%s4421] ss:$9 sm:$0xff]
      %4423 = vst [vmem:[#allocation1] sm:$0xff] %v4295
      %v4424 = vld [vmem:[%s4421] ss:$9 sm:$0xff]
      %4425 = vrot.lane.b32.xlu0 %v4422, 16
      %v4426 = vpop.permute.xlu0 %4425
      %4427 = vrot.lane.b32.xlu0 %v4424, 16
      %v4428 = vpop.permute.xlu0 %4427
      %4431 = vst.msk [vmem:[#allocation11 + $0x1] sm:$0x1] %vm4317, %v4426
      %4432 = vst.msk [vmem:[#allocation11 + $0x3] sm:$0x1] %vm4317, %v4428
      %4433 = vst [vmem:[#allocation1] sm:$0xff] %v4265
      %s4434 = scalar_lea.vmem [#allocation1], 2
      %v4435 = vld [vmem:[%s4434] ss:$9 sm:$0xff]
      %4436 = vst [vmem:[#allocation1] sm:$0xff] %v4295
      %v4437 = vld [vmem:[%s4434] ss:$9 sm:$0xff]
      %4438 = vrot.lane.b32.xlu0 %v4435, 32
      %v4439 = vpop.permute.xlu0 %4438
      %4440 = vrot.lane.b32.xlu0 %v4437, 32
      %v4441 = vpop.permute.xlu0 %4440
      %4444 = vst.msk [vmem:[#allocation11 + $0x1] sm:$0x1] %vm4333, %v4439
      %4445 = vst.msk [vmem:[#allocation11 + $0x3] sm:$0x1] %vm4333, %v4441
      %4446 = vst [vmem:[#allocation1] sm:$0xff] %v4265
      %s4447 = scalar_lea.vmem [#allocation1], 3
      %v4448 = vld [vmem:[%s4447] ss:$9 sm:$0xff]
      %4449 = vst [vmem:[#allocation1] sm:$0xff] %v4295
      %v4450 = vld [vmem:[%s4447] ss:$9 sm:$0xff]
      %4451 = vrot.lane.b32.xlu0 %v4448, 48
      %v4452 = vpop.permute.xlu0 %4451
      %4453 = vrot.lane.b32.xlu0 %v4450, 48
      %v4454 = vpop.permute.xlu0 %4453
      %4457 = vst.msk [vmem:[#allocation11 + $0x1] sm:$0x1] %vm4349, %v4452
      %4458 = vst.msk [vmem:[#allocation11 + $0x3] sm:$0x1] %vm4349, %v4454
      %4459 = vst [vmem:[#allocation1] sm:$0xff] %v4265
      %s4460 = scalar_lea.vmem [#allocation1], 4
      %v4461 = vld [vmem:[%s4460] ss:$9 sm:$0xff]
      %4462 = vst [vmem:[#allocation1] sm:$0xff] %v4295
      %v4463 = vld [vmem:[%s4460] ss:$9 sm:$0xff]
      %4464 = vrot.lane.b32.xlu0 %v4461, 64
      %v4465 = vpop.permute.xlu0 %4464
      %4466 = vrot.lane.b32.xlu0 %v4463, 64
      %v4467 = vpop.permute.xlu0 %4466
      %4470 = vst.msk [vmem:[#allocation11 + $0x1] sm:$0x1] %vm4365, %v4465
      %4471 = vst.msk [vmem:[#allocation11 + $0x3] sm:$0x1] %vm4365, %v4467
      %4472 = vst [vmem:[#allocation1] sm:$0xff] %v4265
      %s4473 = scalar_lea.vmem [#allocation1], 5
      %v4474 = vld [vmem:[%s4473] ss:$9 sm:$0xff]
      %4475 = vst [vmem:[#allocation1] sm:$0xff] %v4295
      %v4476 = vld [vmem:[%s4473] ss:$9 sm:$0xff]
      %4477 = vrot.lane.b32.xlu0 %v4474, 80
      %v4478 = vpop.permute.xlu0 %4477
      %4479 = vrot.lane.b32.xlu0 %v4476, 80
      %v4480 = vpop.permute.xlu0 %4479
      %4483 = vst.msk [vmem:[#allocation11 + $0x1] sm:$0x1] %vm4381, %v4478
      %4484 = vst.msk [vmem:[#allocation11 + $0x3] sm:$0x1] %vm4381, %v4480
      %4485 = vst [vmem:[#allocation1] sm:$0xff] %v4265
      %s4486 = scalar_lea.vmem [#allocation1], 6
      %v4487 = vld [vmem:[%s4486] ss:$9 sm:$0xff]
      %4488 = vst [vmem:[#allocation1] sm:$0xff] %v4295
      %v4489 = vld [vmem:[%s4486] ss:$9 sm:$0xff]
      %4490 = vrot.lane.b32.xlu0 %v4487, 96
      %v4491 = vpop.permute.xlu0 %4490
      %4492 = vrot.lane.b32.xlu0 %v4489, 96
      %v4493 = vpop.permute.xlu0 %4492
      %4496 = vst.msk [vmem:[#allocation11 + $0x1] sm:$0x1] %vm4397, %v4491
      %4497 = vst.msk [vmem:[#allocation11 + $0x3] sm:$0x1] %vm4397, %v4493
      %4498 = vst [vmem:[#allocation1] sm:$0xff] %v4265
      %s4499 = scalar_lea.vmem [#allocation1], 7
      %v4500 = vld [vmem:[%s4499] ss:$9 sm:$0xff]
      %4501 = vst [vmem:[#allocation1] sm:$0xff] %v4295
      %v4502 = vld [vmem:[%s4499] ss:$9 sm:$0xff]
      %4503 = vrot.lane.b32.xlu0 %v4500, 112
      %v4504 = vpop.permute.xlu0 %4503
      %4505 = vrot.lane.b32.xlu0 %v4502, 112
      %v4506 = vpop.permute.xlu0 %4505
      %4509 = vst.msk [vmem:[#allocation11 + $0x1] sm:$0x1] %vm4413, %v4504
      %4510 = vst.msk [vmem:[#allocation11 + $0x3] sm:$0x1] %vm4413, %v4506
    $region29: #{tpu_custom_call.1} parent=1 // pred_fallthru
      _
    // Predicated region
    $region30: #{tpu_custom_call.1} parent=1 // pred_check
      _
    $region31: #{tpu_custom_call.1} parent=1 // pred_check_branch
      %4512 = sbr.rel (0) target = $region33
    $region32: #{tpu_custom_call.1} parent=1 // pred_region
      %4514 = vsyncadd [#allocation8], 0
      %s4515 = sshll.u32 [#allocation11], 4
      %s4516 = int_to_ptr.vmem [resolvable:$true] %s4515
      %s4517 = sshll.u32 %s3, 4
      %s4518 = int_to_ptr.hbm [resolvable:$true] %s4517
      %4523 = dma.vmem_to_hbm [thread:$0]  %s4516, 64, %s4518, [#allocation8], 32, 32, 2
    $region33: #{tpu_custom_call.1} parent=1 // pred_fallthru
      _
    // Predicated region
    $region34: #{tpu_custom_call.1} parent=1 // pred_check
      _
    $region35: #{tpu_custom_call.1} parent=1 // pred_check_branch
      %4525 = sbr.rel (0) target = $region37
    $region36: #{tpu_custom_call.1} parent=1 // pred_region
      %4527 = dma.done [#allocation8], 64
    $region37: #{tpu_custom_call.1} parent=1 // pred_fallthru
      _
    %4528 = vsyncpa [#allocation7], 1
    %4529 = vsyncpa [#allocation8], 1
    %4530 = vsyncpa [#allocation9], 1

</llo_original>
